<compile_context>
chip_gen: v5e
topology: v5e:2x2
jax: 0.10.0
libtpu: 0.0.40
codegen_flags: <defaults>
</compile_context>

<pallas_src>
import functools

import jax
import jax.numpy as jnp
import numpy as np
from jax.experimental import pallas as pl
from jax.experimental.pallas import tpu as pltpu


def clam_sb_kernel(h_ref, w1_ref, b1_ref, wab_ref, bab_ref, wc_ref, bc_ref,
                   wr_ref, br_ref, wcls_ref, bcls_ref,
                   a_raw_ref, logits_ref, yprob_ref, emb_ref,
                   m_sc, l_sc, macc_sc, *, n_valid, tile_n, d, mask_rows):
    i = pl.program_id(0)

    @pl.when(i == 0)
    def _init():
        m_sc[...] = jnp.full_like(m_sc, -jnp.inf)
        l_sc[...] = jnp.zeros_like(l_sc)
        macc_sc[...] = jnp.zeros_like(macc_sc)

    # --- fc: Linear(L, 512) + ReLU. h streamed in its HBM dtype, cast per-tile
    # to bf16 for the MXU (no separate wrapper cast/pad pass over HBM). ---
    h_tile = h_ref[...].astype(jnp.bfloat16)
    h1 = jnp.dot(h_tile, w1_ref[...], preferred_element_type=jnp.float32)
    h1 = jnp.maximum(h1 + b1_ref[...], 0.0)                        # [tile_n, 512] f32

    # Zero rows of the boundary-clipped last tile so undefined HBM contents
    # (possible inf/NaN after the matmul) never reach the accumulators.
    if mask_rows:
        row = jax.lax.broadcasted_iota(jnp.int32, (tile_n, 1), 0)
        h1 = jnp.where(i * tile_n + row < n_valid, h1, 0.0)

    h1_bf = h1.astype(jnp.bfloat16)                                 # reused twice

    # --- Attn_Net_Gated, fused gate matmul: [a|b] = h1 @ [Wa|Wb] + [ba|bb] ---
    g = jnp.dot(h1_bf, wab_ref[...],
                preferred_element_type=jnp.float32) + bab_ref[...]  # [tile_n, 2D]
    a = jnp.tanh(g[:, :d])
    b = jax.nn.sigmoid(g[:, d:])
    ab = (a * b).astype(jnp.bfloat16)                               # [tile_n, D] bf16

    # --- attention_c: Linear(D, 1), emitted lane-dense as a [1, tile_n] row.
    # bf16 x bf16 (f32 accumulate) -> single MXU pass instead of f32 3-pass. ---
    A_row = jax.lax.dot_general(
        wc_ref[...], ab, (((1,), (1,)), ((), ())),
        preferred_element_type=jnp.float32) + bc_ref[...]           # [1, tile_n] f32
    a_raw_ref[...] = A_row                                          # pre-softmax A^T slice

    # --- online softmax over instances (mask padded lanes of the last tile) ---
    col = jax.lax.broadcasted_iota(jnp.int32, (1, tile_n), 1)
    A_m = jnp.where(i * tile_n + col < n_valid, A_row, -jnp.inf)

    m_prev = m_sc[...]
    m_new = jnp.maximum(m_prev, jnp.max(A_m, axis=-1, keepdims=True))   # [1,1]
    alpha = jnp.exp(m_prev - m_new)                                     # [1,1]
    p = jnp.exp(A_m - m_new)                                            # [1, tile_n]
    l_sc[...] = alpha * l_sc[...] + jnp.sum(p, axis=-1, keepdims=True)
    # bf16 attention-pooling matmul (M=1): reuse h1_bf, f32 accumulate.
    macc_sc[...] = alpha * macc_sc[...] + jnp.dot(
        p.astype(jnp.bfloat16), h1_bf, preferred_element_type=jnp.float32)  # [1, 512]
    m_sc[...] = m_new

    # --- epilogue only on the last grid step: M, rho, classifier, softmaxes.
    # Runs once per call -> exact division (no approx reciprocal). ---
    @pl.when(i == pl.num_programs(0) - 1)
    def _finalize():
        M = macc_sc[...] / l_sc[...]                                    # [1, 512]
        emb = jnp.dot(M, wr_ref[...], preferred_element_type=jnp.float32) + br_ref[...]
        emb = jnp.maximum(emb, 0.0)                                     # [1, D]
        emb_ref[...] = emb
        logits = jnp.dot(emb, wcls_ref[...],
                         preferred_element_type=jnp.float32) + bcls_ref[...]
        logits_ref[...] = logits                                        # [1, C]
        lmax = jnp.max(logits, axis=-1, keepdims=True)
        el = jnp.exp(logits - lmax)
        yprob_ref[...] = el / jnp.sum(el, axis=-1, keepdims=True)


def _round_up(x, m):
    return ((x + m - 1) // m) * m


def clam_sb_forward(h, params, tile_n=1024):
    """h: [N, L] instances (f32 or bf16). Returns (logits, Y_prob, Y_hat, A_raw, results_dict)."""
    N, L = h.shape
    H1 = params['w1'].shape[1]
    D = params['wr'].shape[1]
    C = params['wcls'].shape[1]

    # Single tile for small bags; otherwise 128-aligned tiles (lane-dense A_raw
    # output blocks). Default 1024 is a safe cross-generation choice (fits v7x's
    # 64 MiB VMEM); v5e/v6e users with very large bags may pass tile_n=2048.
    if N <= tile_n:
        tn = max(8, _round_up(N, 8))
    else:
        tn = _round_up(min(tile_n, N), 128)
    n_tiles = pl.cdiv(N, tn)
    n_pad = n_tiles * tn
    mask_rows = (N % tn) != 0

    # bf16 resident weights for the per-tile MXU matmuls; epilogue weights stay f32.
    w1 = params['w1'].astype(jnp.bfloat16)
    wab = jnp.concatenate([params['wa'], params['wb']], axis=1).astype(jnp.bfloat16)
    bab = jnp.concatenate([params['ba'], params['bb']], axis=1).astype(jnp.float32)
    b1 = params['b1'].astype(jnp.float32)
    wc = params['wc'].astype(jnp.bfloat16)    # [1, D] bf16 (M=1 dot operand)
    bc = params['bc'].astype(jnp.float32)     # [1, 1]
    wr = params['wr'].astype(jnp.float32)     # epilogue runs once; keep f32
    br = params['br'].astype(jnp.float32)
    wcls = params['wcls'].astype(jnp.float32)
    bcls = params['bcls'].astype(jnp.float32)

    kernel = functools.partial(clam_sb_kernel, n_valid=N, tile_n=tn, d=D,
                               mask_rows=mask_rows)

    const = lambda shape: pl.BlockSpec(shape, lambda i: tuple(0 for _ in shape))

    grid_spec = pltpu.PrefetchScalarGridSpec(
        num_scalar_prefetch=0,
        grid=(n_tiles,),
        in_specs=[
            pl.BlockSpec((tn, L), lambda i: (i, 0)),   # h: streamed tile (native dtype)
            const((L, H1)),                            # w1 (resident, bf16)
            const((1, H1)),                            # b1
            const((H1, 2 * D)),                        # [Wa|Wb] fused (bf16)
            const((1, 2 * D)),                         # [ba|bb] fused
            const((1, D)),                             # wc (bf16)
            const((1, 1)),                             # bc
            const((H1, D)),                            # wr
            const((1, D)),                             # br
            const((D, C)),                             # wcls
            const((1, C)),                             # bcls
        ],
        out_specs=[
            pl.BlockSpec((1, tn), lambda i: (0, i)),   # A_raw, lane-dense per tile
            const((1, C)),                             # logits (written at last step)
            const((1, C)),                             # Y_prob
            const((1, D)),                             # embedding
        ],
        scratch_shapes=[
            pltpu.VMEM((1, 1), jnp.float32),           # running max m
            pltpu.VMEM((1, 1), jnp.float32),           # running sum l
            pltpu.VMEM((1, H1), jnp.float32),          # rescaled M accumulator
        ],
    )

    out_shape = (
        jax.ShapeDtypeStruct((1, n_pad), jnp.float32),   # A_raw (padded lanes)
        jax.ShapeDtypeStruct((1, C), jnp.float32),       # logits
        jax.ShapeDtypeStruct((1, C), jnp.float32),       # Y_prob
        jax.ShapeDtypeStruct((1, D), jnp.float32),       # embedding = rho(M)
    )

    h_itemsize = jnp.dtype(h.dtype).itemsize
    flops = n_pad * (2 * L * H1 + 4 * H1 * D + 2 * D + 2 * H1) + 2 * (H1 * D + D * C)
    transcendentals = n_pad * (2 * D + 2)
    bytes_accessed = (N * L * h_itemsize
                      + (L * H1 + H1 * 2 * D + D) * 2
                      + (H1 * D + D * C + H1 + 4 * D + C + 1) * 4
                      + (n_pad + D + 2 * C) * 4)

    a_raw_pad, logits, y_prob, emb = pl.pallas_call(
        kernel,
        grid_spec=grid_spec,
        out_shape=out_shape,
        compiler_params=pltpu.CompilerParams(
            dimension_semantics=("arbitrary",),          # N is a reduction axis
            vmem_limit_bytes=48 * 1024 * 1024,
        ),
        cost_estimate=pl.CostEstimate(flops=flops,
                                      transcendentals=transcendentals,
                                      bytes_accessed=bytes_accessed),
    )(h, w1, b1, wab, bab, wc, bc, wr, br, wcls, bcls)

    A_raw = a_raw_pad[:, :N]                             # [1, N] == transpose(A, 1, 0)
    Y_hat = jnp.argmax(logits, axis=1, keepdims=True)    # torch.topk(logits, 1)[1]
    results_dict = {'embedding': emb}
    # TODO(synk): instance_eval branch (top-k instance classifiers + CE loss) is
    # disabled in the default config (instance_eval=False, label=None) and not lowered.
    # TODO(synk): v7x follow-ups: split the N reduction across the 2 TensorCores
    # (per-core partial m/l/Macc + tiny combine) or batch multiple bags with a
    # 'parallel' bag axis; single-buffer the resident weight specs
    # (pipeline_mode=pl.Buffered(1)) if larger tiles push the 64 MiB VMEM budget.
    return logits, y_prob, Y_hat, A_raw, results_dict


def clam_sb_reference(h, p):
    """Pure-JAX f32 reference with identical semantics (for sanity checking)."""
    h = h.astype(jnp.float32)
    h1 = jax.nn.relu(h @ p['w1'] + p['b1'])
    a = jnp.tanh(h1 @ p['wa'] + p['ba'])
    b = jax.nn.sigmoid(h1 @ p['wb'] + p['bb'])
    A = (a * b) @ p['wc'].T + p['bc']          # [N, 1]
    A_raw = A.T                                # [1, N]
    A_s = jax.nn.softmax(A_raw, axis=1)
    M = A_s @ h1
    emb = jax.nn.relu(M @ p['wr'] + p['br'])
    logits = emb @ p['wcls'] + p['bcls']
    return logits, jax.nn.softmax(logits, axis=1), A_raw, emb


if __name__ == "__main__":
    key = jax.random.PRNGKey(0)
    L, H1, D, C = 1024, 512, 256, 2            # size_dict['small'] = [1024, 512, 256]
    keys = jax.random.split(key, 13)

    def nrm(k, shape, scale=0.02):
        return jax.random.normal(k, shape, dtype=jnp.float32) * scale

    params = {
        'w1':   nrm(keys[1], (L, H1)),  'b1':   nrm(keys[2], (1, H1)),
        'wa':   nrm(keys[3], (H1, D)),  'ba':   nrm(keys[4], (1, D)),
        'wb':   nrm(keys[5], (H1, D)),  'bb':   nrm(keys[6], (1, D)),
        'wc':   nrm(keys[7], (1, D)),   'bc':   nrm(keys[8], (1, 1)),
        'wr':   nrm(keys[9], (H1, D)),  'br':   nrm(keys[10], (1, D)),
        'wcls': nrm(keys[11], (D, C)),  'bcls': nrm(keys[12], (1, C)),
    }

    # Case 1: tiny bag (single tile, no padding).
    h_small = nrm(keys[0], (8, L), 1.0)
    out_small = clam_sb_forward(h_small, params)
    jax.block_until_ready(out_small)

    # Case 2: larger bag exercising the N grid, online softmax and the in-kernel
    # boundary mask (N=300, tile_n=128 -> 3 grid steps, 84 masked rows).
    h_large = jax.random.normal(jax.random.PRNGKey(1), (300, L), dtype=jnp.float32)
    out_large = clam_sb_forward(h_large, params, tile_n=128)
    jax.block_until_ready(out_large)

    # Case 3: same bag with the default tile (single ragged tile, tn=304).
    out_large_def = clam_sb_forward(h_large, params)
    jax.block_until_ready(out_large_def)

    # Loose-tolerance sanity check vs the f32 reference (kernel uses bf16 matmuls).
    for h_in, outs in ((h_small, out_small), (h_large, out_large),
                       (h_large, out_large_def)):
        logits, y_prob, y_hat, A_raw, rd = outs
        _, ref_yprob, ref_A, ref_emb = clam_sb_reference(h_in, params)
        np.testing.assert_allclose(np.asarray(y_prob), np.asarray(ref_yprob), atol=2e-2)
        np.testing.assert_allclose(np.asarray(rd['embedding']), np.asarray(ref_emb),
                                   rtol=1e-1, atol=1e-2)
        np.testing.assert_allclose(np.asarray(jax.nn.softmax(A_raw, axis=1)),
                                   np.asarray(jax.nn.softmax(ref_A, axis=1)), atol=5e-3)

    print("KERNEL_OK")
</pallas_src>

<mosaic_0001>
module attributes {stable_mosaic.version = 11 : i64} {
  func.func @clam_sb_kernel(%arg0: i32, %arg1: memref<8x1024xf32, #tpu.memory_space<vmem>>, %arg2: memref<1024x512xbf16, #tpu.memory_space<vmem>>, %arg3: memref<1x512xf32, #tpu.memory_space<vmem>>, %arg4: memref<512x512xbf16, #tpu.memory_space<vmem>>, %arg5: memref<1x512xf32, #tpu.memory_space<vmem>>, %arg6: memref<1x256xbf16, #tpu.memory_space<vmem>>, %arg7: memref<1x1xf32, #tpu.memory_space<vmem>>, %arg8: memref<512x256xf32, #tpu.memory_space<vmem>>, %arg9: memref<1x256xf32, #tpu.memory_space<vmem>>, %arg10: memref<256x2xf32, #tpu.memory_space<vmem>>, %arg11: memref<1x2xf32, #tpu.memory_space<vmem>>, %arg12: memref<1x8xf32, #tpu.memory_space<vmem>>, %arg13: memref<1x2xf32, #tpu.memory_space<vmem>>, %arg14: memref<1x2xf32, #tpu.memory_space<vmem>>, %arg15: memref<1x256xf32, #tpu.memory_space<vmem>>, %arg16: memref<1x1xf32, #tpu.memory_space<vmem>>, %arg17: memref<1x1xf32, #tpu.memory_space<vmem>>, %arg18: memref<1x512xf32, #tpu.memory_space<vmem>>) attributes {dimension_semantics = [#tpu.dimension_semantics<arbitrary>], iteration_bounds = array<i64: 1>, scalar_prefetch = 0 : i64, scratch_operands = 3 : i64, tpu.core_type = #tpu.core_type<tc>, window_params = [{transform_indices = @transform_0, window_bounds = array<i64: 8, 1024>}, {pipeline_mode = #tpu.pipeline_mode<synchronous>, transform_indices = @transform_1, window_bounds = array<i64: 1024, 512>}, {pipeline_mode = #tpu.pipeline_mode<synchronous>, transform_indices = @transform_2, window_bounds = array<i64: 1, 512>}, {pipeline_mode = #tpu.pipeline_mode<synchronous>, transform_indices = @transform_3, window_bounds = array<i64: 512, 512>}, {pipeline_mode = #tpu.pipeline_mode<synchronous>, transform_indices = @transform_4, window_bounds = array<i64: 1, 512>}, {pipeline_mode = #tpu.pipeline_mode<synchronous>, transform_indices = @transform_5, window_bounds = array<i64: 1, 256>}, {pipeline_mode = #tpu.pipeline_mode<synchronous>, transform_indices = @transform_6, window_bounds = array<i64: 1, 1>}, {pipeline_mode = #tpu.pipeline_mode<synchronous>, transform_indices = @transform_7, window_bounds = array<i64: 512, 256>}, {pipeline_mode = #tpu.pipeline_mode<synchronous>, transform_indices = @transform_8, window_bounds = array<i64: 1, 256>}, {pipeline_mode = #tpu.pipeline_mode<synchronous>, transform_indices = @transform_9, window_bounds = array<i64: 256, 2>}, {pipeline_mode = #tpu.pipeline_mode<synchronous>, transform_indices = @transform_10, window_bounds = array<i64: 1, 2>}, {transform_indices = @transform_11, window_bounds = array<i64: 1, 8>}, {pipeline_mode = #tpu.pipeline_mode<synchronous>, transform_indices = @transform_12, window_bounds = array<i64: 1, 2>}, {pipeline_mode = #tpu.pipeline_mode<synchronous>, transform_indices = @transform_13, window_bounds = array<i64: 1, 2>}, {pipeline_mode = #tpu.pipeline_mode<synchronous>, transform_indices = @transform_14, window_bounds = array<i64: 1, 256>}]} {
    %c0_i32 = arith.constant 0 : i32
    %0 = arith.cmpi eq, %arg0, %c0_i32 : i32
    %1 = arith.extui %0 : i1 to i32
    %c0_i32_0 = arith.constant 0 : i32
    %2 = arith.cmpi ne, %1, %c0_i32_0 : i32
    scf.if %2 {
      %cst_39 = arith.constant 0xFF800000 : f32
      %68 = vector.broadcast %cst_39 : f32 to vector<1x1xf32>
      %c0_40 = arith.constant 0 : index
      %c0_41 = arith.constant 0 : index
      %69 = vector.load %arg16[%c0_40, %c0_41] : memref<1x1xf32, #tpu.memory_space<vmem>>, vector<1x1xf32>
      tpu.vector_store %arg16[%c0_40, %c0_41], %68 {strides = array<i32>} : memref<1x1xf32, #tpu.memory_space<vmem>>, vector<1x1xf32>,
      %cst_42 = arith.constant 0.000000e+00 : f32
      %70 = vector.broadcast %cst_42 : f32 to vector<1x1xf32>
      %c0_43 = arith.constant 0 : index
      %c0_44 = arith.constant 0 : index
      %71 = vector.load %arg17[%c0_43, %c0_44] : memref<1x1xf32, #tpu.memory_space<vmem>>, vector<1x1xf32>
      tpu.vector_store %arg17[%c0_43, %c0_44], %70 {strides = array<i32>} : memref<1x1xf32, #tpu.memory_space<vmem>>, vector<1x1xf32>,
      %cst_45 = arith.constant 0.000000e+00 : f32
      %72 = vector.broadcast %cst_45 : f32 to vector<1x512xf32>
      %c0_46 = arith.constant 0 : index
      %c0_47 = arith.constant 0 : index
      %73 = vector.load %arg18[%c0_46, %c0_47] : memref<1x512xf32, #tpu.memory_space<vmem>>, vector<1x512xf32>
      tpu.vector_store %arg18[%c0_46, %c0_47], %72 {strides = array<i32>} : memref<1x512xf32, #tpu.memory_space<vmem>>, vector<1x512xf32>,
    } else {
    }
    %c0 = arith.constant 0 : index
    %c0_1 = arith.constant 0 : index
    %3 = vector.load %arg1[%c0, %c0_1] : memref<8x1024xf32, #tpu.memory_space<vmem>>, vector<8x1024xf32>
    %4 = arith.truncf %3 : vector<8x1024xf32> to vector<8x1024xbf16>
    %c0_2 = arith.constant 0 : index
    %c0_3 = arith.constant 0 : index
    %5 = vector.load %arg2[%c0_2, %c0_3] : memref<1024x512xbf16, #tpu.memory_space<vmem>>, vector<1024x512xbf16>
    %cst = arith.constant dense<0.000000e+00> : vector<8x512xf32>
    %6 = tpu.matmul %4, %5, %cst {dimension_numbers = #tpu.dot_dimension_numbers<[1], [0], [0], [1], [0, 0, 1, 1], [], []>} : vector<8x1024xbf16>, vector<1024x512xbf16>, vector<8x512xf32> -> vector<8x512xf32>
    %c0_4 = arith.constant 0 : index
    %c0_5 = arith.constant 0 : index
    %7 = vector.load %arg3[%c0_4, %c0_5] : memref<1x512xf32, #tpu.memory_space<vmem>>, vector<1x512xf32>
    %8 = vector.broadcast %7 : vector<1x512xf32> to vector<8x512xf32>
    %9 = arith.addf %6, %8 : vector<8x512xf32>
    %cst_6 = arith.constant 0.000000e+00 : f32
    %10 = vector.broadcast %cst_6 : f32 to vector<8x512xf32>
    %11 = arith.maximumf %9, %10 : vector<8x512xf32>
    %12 = arith.truncf %11 : vector<8x512xf32> to vector<8x512xbf16>
    %c0_7 = arith.constant 0 : index
    %c0_8 = arith.constant 0 : index
    %13 = vector.load %arg4[%c0_7, %c0_8] : memref<512x512xbf16, #tpu.memory_space<vmem>>, vector<512x512xbf16>
    %cst_9 = arith.constant dense<0.000000e+00> : vector<8x512xf32>
    %14 = tpu.matmul %12, %13, %cst_9 {dimension_numbers = #tpu.dot_dimension_numbers<[1], [0], [0], [1], [0, 0, 1, 1], [], []>} : vector<8x512xbf16>, vector<512x512xbf16>, vector<8x512xf32> -> vector<8x512xf32>
    %c0_10 = arith.constant 0 : index
    %c0_11 = arith.constant 0 : index
    %15 = vector.load %arg5[%c0_10, %c0_11] : memref<1x512xf32, #tpu.memory_space<vmem>>, vector<1x512xf32>
    %16 = vector.broadcast %15 : vector<1x512xf32> to vector<8x512xf32>
    %17 = arith.addf %14, %16 : vector<8x512xf32>
    %18 = vector.extract_strided_slice %17 {offsets = [0, 0], sizes = [8, 256], strides = [1, 1]} : vector<8x512xf32> to vector<8x256xf32>
    %19 = math.tanh %18 : vector<8x256xf32>
    %20 = vector.extract_strided_slice %17 {offsets = [0, 256], sizes = [8, 256], strides = [1, 1]} : vector<8x512xf32> to vector<8x256xf32>
    %21 = arith.negf %20 : vector<8x256xf32>
    %22 = math.exp %21 : vector<8x256xf32>
    %cst_12 = arith.constant 1.000000e+00 : f32
    %23 = vector.broadcast %cst_12 : f32 to vector<8x256xf32>
    %24 = arith.addf %23, %22 : vector<8x256xf32>
    %25 = arith.divf %23, %24 : vector<8x256xf32>
    %26 = arith.mulf %19, %25 : vector<8x256xf32>
    %27 = arith.truncf %26 : vector<8x256xf32> to vector<8x256xbf16>
    %c0_13 = arith.constant 0 : index
    %c0_14 = arith.constant 0 : index
    %28 = vector.load %arg6[%c0_13, %c0_14] : memref<1x256xbf16, #tpu.memory_space<vmem>>, vector<1x256xbf16>
    %cst_15 = arith.constant dense<0.000000e+00> : vector<1x8xf32>
    %29 = tpu.matmul %28, %27, %cst_15 {dimension_numbers = #tpu.dot_dimension_numbers<[1], [1], [0], [0], [0, 0, 1, 0], [], []>} : vector<1x256xbf16>, vector<8x256xbf16>, vector<1x8xf32> -> vector<1x8xf32>
    %c0_16 = arith.constant 0 : index
    %c0_17 = arith.constant 0 : index
    %30 = vector.load %arg7[%c0_16, %c0_17] : memref<1x1xf32, #tpu.memory_space<vmem>>, vector<1x1xf32>
    %31 = vector.broadcast %30 : vector<1x1xf32> to vector<1x8xf32>
    %32 = arith.addf %29, %31 : vector<1x8xf32>
    %c0_18 = arith.constant 0 : index
    %c0_19 = arith.constant 0 : index
    %33 = vector.load %arg12[%c0_18, %c0_19] : memref<1x8xf32, #tpu.memory_space<vmem>>, vector<1x8xf32>
    tpu.vector_store %arg12[%c0_18, %c0_19], %32 {strides = array<i32>} : memref<1x8xf32, #tpu.memory_space<vmem>>, vector<1x8xf32>,
    %34 = tpu.iota {dimensions = array<i32: 1>} : vector<1x8xi32>
    %c8_i32 = arith.constant 8 : i32
    %35 = arith.muli %arg0, %c8_i32 : i32
    %36 = vector.broadcast %35 : i32 to vector<1x8xi32>
    %37 = arith.addi %36, %34 : vector<1x8xi32>
    %c8_i32_20 = arith.constant 8 : i32
    %38 = vector.broadcast %c8_i32_20 : i32 to vector<1x8xi32>
    %39 = arith.cmpi slt, %37, %38 : vector<1x8xi32>
    %cst_21 = arith.constant 0xFF800000 : f32
    %40 = vector.broadcast %cst_21 : f32 to vector<1x8xf32>
    %41 = arith.select %39, %32, %40 : vector<1x8xi1>, vector<1x8xf32>
    %c0_22 = arith.constant 0 : index
    %c0_23 = arith.constant 0 : index
    %42 = vector.load %arg16[%c0_22, %c0_23] : memref<1x1xf32, #tpu.memory_space<vmem>>, vector<1x1xf32>
    %cst_24 = arith.constant dense<0xFF800000> : vector<1xf32>
    %43 = vector.multi_reduction <maximumf>, %41, %cst_24 [1] : vector<1x8xf32> to vector<1xf32>
    %44 = vector.shape_cast %43 : vector<1xf32> to vector<1x1xf32>
    %45 = arith.maximumf %42, %44 : vector<1x1xf32>
    %46 = arith.subf %42, %45 : vector<1x1xf32>
    %47 = math.exp %46 : vector<1x1xf32>
    %48 = vector.broadcast %45 : vector<1x1xf32> to vector<1x8xf32>
    %49 = arith.subf %41, %48 : vector<1x8xf32>
    %50 = math.exp %49 : vector<1x8xf32>
    %c0_25 = arith.constant 0 : index
    %c0_26 = arith.constant 0 : index
    %51 = vector.load %arg17[%c0_25, %c0_26] : memref<1x1xf32, #tpu.memory_space<vmem>>, vector<1x1xf32>
    %52 = arith.mulf %47, %51 : vector<1x1xf32>
    %cst_27 = arith.constant dense<0.000000e+00> : vector<1xf32>
    %53 = vector.multi_reduction <add>, %50, %cst_27 [1] : vector<1x8xf32> to vector<1xf32>
    %54 = vector.shape_cast %53 : vector<1xf32> to vector<1x1xf32>
    %55 = arith.addf %52, %54 : vector<1x1xf32>
    %c0_28 = arith.constant 0 : index
    %c0_29 = arith.constant 0 : index
    %56 = vector.load %arg17[%c0_28, %c0_29] : memref<1x1xf32, #tpu.memory_space<vmem>>, vector<1x1xf32>
    tpu.vector_store %arg17[%c0_28, %c0_29], %55 {strides = array<i32>} : memref<1x1xf32, #tpu.memory_space<vmem>>, vector<1x1xf32>,
    %c0_30 = arith.constant 0 : index
    %c0_31 = arith.constant 0 : index
    %57 = vector.load %arg18[%c0_30, %c0_31] : memref<1x512xf32, #tpu.memory_space<vmem>>, vector<1x512xf32>
    %58 = vector.broadcast %47 : vector<1x1xf32> to vector<1x512xf32>
    %59 = arith.mulf %58, %57 : vector<1x512xf32>
    %60 = arith.truncf %50 : vector<1x8xf32> to vector<1x8xbf16>
    %cst_32 = arith.constant dense<0.000000e+00> : vector<1x512xf32>
    %61 = tpu.matmul %60, %12, %cst_32 {dimension_numbers = #tpu.dot_dimension_numbers<[1], [0], [0], [1], [0, 0, 1, 1], [], []>} : vector<1x8xbf16>, vector<8x512xbf16>, vector<1x512xf32> -> vector<1x512xf32>
    %62 = arith.addf %59, %61 : vector<1x512xf32>
    %c0_33 = arith.constant 0 : index
    %c0_34 = arith.constant 0 : index
    %63 = vector.load %arg18[%c0_33, %c0_34] : memref<1x512xf32, #tpu.memory_space<vmem>>, vector<1x512xf32>
    tpu.vector_store %arg18[%c0_33, %c0_34], %62 {strides = array<i32>} : memref<1x512xf32, #tpu.memory_space<vmem>>, vector<1x512xf32>,
    %c0_35 = arith.constant 0 : index
    %c0_36 = arith.constant 0 : index
    %64 = vector.load %arg16[%c0_35, %c0_36] : memref<1x1xf32, #tpu.memory_space<vmem>>, vector<1x1xf32>
    tpu.vector_store %arg16[%c0_35, %c0_36], %45 {strides = array<i32>} : memref<1x1xf32, #tpu.memory_space<vmem>>, vector<1x1xf32>,
    %c0_i32_37 = arith.constant 0 : i32
    %65 = arith.cmpi eq, %arg0, %c0_i32_37 : i32
    %66 = arith.extui %65 : i1 to i32
    %c0_i32_38 = arith.constant 0 : i32
    %67 = arith.cmpi ne, %66, %c0_i32_38 : i32
    scf.if %67 {
      %c0_39 = arith.constant 0 : index
      %c0_40 = arith.constant 0 : index
      %68 = vector.load %arg18[%c0_39, %c0_40] : memref<1x512xf32, #tpu.memory_space<vmem>>, vector<1x512xf32>
      %c0_41 = arith.constant 0 : index
      %c0_42 = arith.constant 0 : index
      %69 = vector.load %arg17[%c0_41, %c0_42] : memref<1x1xf32, #tpu.memory_space<vmem>>, vector<1x1xf32>
      %70 = vector.broadcast %69 : vector<1x1xf32> to vector<1x512xf32>
      %71 = arith.divf %68, %70 : vector<1x512xf32>
      %c0_43 = arith.constant 0 : index
      %c0_44 = arith.constant 0 : index
      %72 = vector.load %arg8[%c0_43, %c0_44] : memref<512x256xf32, #tpu.memory_space<vmem>>, vector<512x256xf32>
      %cst_45 = arith.constant dense<0.000000e+00> : vector<1x256xf32>
      %73 = tpu.matmul %71, %72, %cst_45 {dimension_numbers = #tpu.dot_dimension_numbers<[1], [0], [0], [1], [0, 0, 1, 1], [], []>} : vector<1x512xf32>, vector<512x256xf32>, vector<1x256xf32> -> vector<1x256xf32>
      %c0_46 = arith.constant 0 : index
      %c0_47 = arith.constant 0 : index
      %74 = vector.load %arg9[%c0_46, %c0_47] : memref<1x256xf32, #tpu.memory_space<vmem>>, vector<1x256xf32>
      %75 = arith.addf %73, %74 : vector<1x256xf32>
      %cst_48 = arith.constant 0.000000e+00 : f32
      %76 = vector.broadcast %cst_48 : f32 to vector<1x256xf32>
      %77 = arith.maximumf %75, %76 : vector<1x256xf32>
      %c0_49 = arith.constant 0 : index
      %c0_50 = arith.constant 0 : index
      %78 = vector.load %arg15[%c0_49, %c0_50] : memref<1x256xf32, #tpu.memory_space<vmem>>, vector<1x256xf32>
      tpu.vector_store %arg15[%c0_49, %c0_50], %77 {strides = array<i32>} : memref<1x256xf32, #tpu.memory_space<vmem>>, vector<1x256xf32>,
      %c0_51 = arith.constant 0 : index
      %c0_52 = arith.constant 0 : index
      %79 = vector.load %arg10[%c0_51, %c0_52] : memref<256x2xf32, #tpu.memory_space<vmem>>, vector<256x2xf32>
      %cst_53 = arith.constant dense<0.000000e+00> : vector<1x2xf32>
      %80 = tpu.matmul %77, %79, %cst_53 {dimension_numbers = #tpu.dot_dimension_numbers<[1], [0], [0], [1], [0, 0, 1, 1], [], []>} : vector<1x256xf32>, vector<256x2xf32>, vector<1x2xf32> -> vector<1x2xf32>
      %c0_54 = arith.constant 0 : index
      %c0_55 = arith.constant 0 : index
      %81 = vector.load %arg11[%c0_54, %c0_55] : memref<1x2xf32, #tpu.memory_space<vmem>>, vector<1x2xf32>
      %82 = arith.addf %80, %81 : vector<1x2xf32>
      %c0_56 = arith.constant 0 : index
      %c0_57 = arith.constant 0 : index
      %83 = vector.load %arg13[%c0_56, %c0_57] : memref<1x2xf32, #tpu.memory_space<vmem>>, vector<1x2xf32>
      tpu.vector_store %arg13[%c0_56, %c0_57], %82 {strides = array<i32>} : memref<1x2xf32, #tpu.memory_space<vmem>>, vector<1x2xf32>,
      %cst_58 = arith.constant dense<0xFF800000> : vector<1xf32>
      %84 = vector.multi_reduction <maximumf>, %82, %cst_58 [1] : vector<1x2xf32> to vector<1xf32>
      %85 = vector.shape_cast %84 : vector<1xf32> to vector<1x1xf32>
      %86 = vector.broadcast %85 : vector<1x1xf32> to vector<1x2xf32>
      %87 = arith.subf %82, %86 : vector<1x2xf32>
      %88 = math.exp %87 : vector<1x2xf32>
      %cst_59 = arith.constant dense<0.000000e+00> : vector<1xf32>
      %89 = vector.multi_reduction <add>, %88, %cst_59 [1] : vector<1x2xf32> to vector<1xf32>
      %90 = vector.shape_cast %89 : vector<1xf32> to vector<1x1xf32>
      %91 = vector.broadcast %90 : vector<1x1xf32> to vector<1x2xf32>
      %92 = arith.divf %88, %91 : vector<1x2xf32>
      %c0_60 = arith.constant 0 : index
      %c0_61 = arith.constant 0 : index
      %93 = vector.load %arg14[%c0_60, %c0_61] : memref<1x2xf32, #tpu.memory_space<vmem>>, vector<1x2xf32>
      tpu.vector_store %arg14[%c0_60, %c0_61], %92 {strides = array<i32>} : memref<1x2xf32, #tpu.memory_space<vmem>>, vector<1x2xf32>,
    } else {
    }
    return
  }
  func.func @transform_0(%arg0: i32) -> (i32, i32) {
    %c0_i32 = arith.constant 0 : i32
    %c0_i32_0 = arith.constant 0 : i32
    return %arg0, %c0_i32 : i32, i32
  }
  func.func @transform_1(%arg0: i32) -> (i32, i32) {
    %c0_i32 = arith.constant 0 : i32
    %c0_i32_0 = arith.constant 0 : i32
    %c0_i32_1 = arith.constant 0 : i32
    return %c0_i32, %c0_i32_0 : i32, i32
  }
  func.func @transform_2(%arg0: i32) -> (i32, i32) {
    %c0_i32 = arith.constant 0 : i32
    %c0_i32_0 = arith.constant 0 : i32
    %c0_i32_1 = arith.constant 0 : i32
    return %c0_i32, %c0_i32_0 : i32, i32
  }
  func.func @transform_3(%arg0: i32) -> (i32, i32) {
    %c0_i32 = arith.constant 0 : i32
    %c0_i32_0 = arith.constant 0 : i32
    %c0_i32_1 = arith.constant 0 : i32
    return %c0_i32, %c0_i32_0 : i32, i32
  }
  func.func @transform_4(%arg0: i32) -> (i32, i32) {
    %c0_i32 = arith.constant 0 : i32
    %c0_i32_0 = arith.constant 0 : i32
    %c0_i32_1 = arith.constant 0 : i32
    return %c0_i32, %c0_i32_0 : i32, i32
  }
  func.func @transform_5(%arg0: i32) -> (i32, i32) {
    %c0_i32 = arith.constant 0 : i32
    %c0_i32_0 = arith.constant 0 : i32
    %c0_i32_1 = arith.constant 0 : i32
    return %c0_i32, %c0_i32_0 : i32, i32
  }
  func.func @transform_6(%arg0: i32) -> (i32, i32) {
    %c0_i32 = arith.constant 0 : i32
    %c0_i32_0 = arith.constant 0 : i32
    %c0_i32_1 = arith.constant 0 : i32
    return %c0_i32, %c0_i32_0 : i32, i32
  }
  func.func @transform_7(%arg0: i32) -> (i32, i32) {
    %c0_i32 = arith.constant 0 : i32
    %c0_i32_0 = arith.constant 0 : i32
    %c0_i32_1 = arith.constant 0 : i32
    return %c0_i32, %c0_i32_0 : i32, i32
  }
  func.func @transform_8(%arg0: i32) -> (i32, i32) {
    %c0_i32 = arith.constant 0 : i32
    %c0_i32_0 = arith.constant 0 : i32
    %c0_i32_1 = arith.constant 0 : i32
    return %c0_i32, %c0_i32_0 : i32, i32
  }
  func.func @transform_9(%arg0: i32) -> (i32, i32) {
    %c0_i32 = arith.constant 0 : i32
    %c0_i32_0 = arith.constant 0 : i32
    %c0_i32_1 = arith.constant 0 : i32
    return %c0_i32, %c0_i32_0 : i32, i32
  }
  func.func @transform_10(%arg0: i32) -> (i32, i32) {
    %c0_i32 = arith.constant 0 : i32
    %c0_i32_0 = arith.constant 0 : i32
    %c0_i32_1 = arith.constant 0 : i32
    return %c0_i32, %c0_i32_0 : i32, i32
  }
  func.func @transform_11(%arg0: i32) -> (i32, i32) {
    %c0_i32 = arith.constant 0 : i32
    %c0_i32_0 = arith.constant 0 : i32
    return %c0_i32, %arg0 : i32, i32
  }
  func.func @transform_12(%arg0: i32) -> (i32, i32) {
    %c0_i32 = arith.constant 0 : i32
    %c0_i32_0 = arith.constant 0 : i32
    %c0_i32_1 = arith.constant 0 : i32
    return %c0_i32, %c0_i32_0 : i32, i32
  }
  func.func @transform_13(%arg0: i32) -> (i32, i32) {
    %c0_i32 = arith.constant 0 : i32
    %c0_i32_0 = arith.constant 0 : i32
    %c0_i32_1 = arith.constant 0 : i32
    return %c0_i32, %c0_i32_0 : i32, i32
  }
  func.func @transform_14(%arg0: i32) -> (i32, i32) {
    %c0_i32 = arith.constant 0 : i32
    %c0_i32_0 = arith.constant 0 : i32
    %c0_i32_1 = arith.constant 0 : i32
    return %c0_i32, %c0_i32_0 : i32, i32
  }
}

</mosaic_0001>

<llo_original>
// kernel: tpu_custom_call.1
$region0: #{tpu_custom_call.1}
  #allocation0 [shape = 'u32[]', space=smem, size = 0x4, offset = 0x4, fixed_abs, tag = 'smem constant byte address 0x4 - core index']
  #allocation1 [shape = 'u32[72,128]{1,0:T(1,128)}', space=vmem, size = 0x9000, scoped, tag = 'internal scratch']
  #allocation2 [shape = 'f32[1,1]{1,0:T(1,128)}', space=vmem, size = 0x200, scoped, tag = 'scratch operand']
  #allocation3 [shape = 'f32[1,1]{1,0:T(1,128)}', space=vmem, size = 0x200, scoped, tag = 'scratch operand']
  #allocation4 [shape = 'f32[1,512]{1,0:T(1,128)}', space=vmem, size = 0x800, scoped, tag = 'scratch operand']
  #allocation5 [shape = 'f32[1,1]{1,0:T(1,128)S(1)}', space=vmem, size = 0x200, scoped, tag = 'scoped memory for tpu_custom_call.1']
  %s0 = inlined_call_operand.vmem [shape: f32[8,1024], index: 0, kind: input, shape index: {}]
  %s1 = inlined_call_operand.hbm [shape: bf16[1024,512], index: 1, kind: input, shape index: {}]
  %s2 = inlined_call_operand.vmem [shape: f32[1,512], index: 2, kind: input, shape index: {}]
  %s3 = inlined_call_operand.hbm [shape: bf16[512,512], index: 3, kind: input, shape index: {}]
  %s4 = inlined_call_operand.vmem [shape: f32[1,512], index: 4, kind: input, shape index: {}]
  %s5 = inlined_call_operand.vmem [shape: bf16[1,256], index: 5, kind: input, shape index: {}]
  %s6 = inlined_call_operand.<no memory space> [shape: f32[1,1], index: 6, kind: input, shape index: {}]
  %s7 = inlined_call_operand.hbm [shape: f32[512,256], index: 7, kind: input, shape index: {}]
  %s8 = inlined_call_operand.vmem [shape: f32[1,256], index: 8, kind: input, shape index: {}]
  %s9 = inlined_call_operand.vmem [shape: f32[256,2], index: 9, kind: input, shape index: {}]
  %s10 = inlined_call_operand.vmem [shape: f32[1,2], index: 10, kind: input, shape index: {}]
  %s11 = inlined_call_operand.hbm [shape: f32[1,8], index: 11, kind: output, shape index: {0}]
  %s12 = inlined_call_operand.hbm [shape: f32[1,2], index: 12, kind: output, shape index: {1}]
  %s13 = inlined_call_operand.hbm [shape: f32[1,2], index: 13, kind: output, shape index: {2}]
  %s14 = inlined_call_operand.hbm [shape: f32[1,256], index: 14, kind: output, shape index: {3}]
  %15 = xla_tuple %s11, %s12, %s13, %s14
  %s16 = sld [smem:[#allocation0]]
  $region98: #{tpu_custom_call.1} parent=0
    _
  %s18 = ssub.s32 1, %s16
  %s19 = scalar_select 0, %s18, %s16
  %v20 = vstv %s6
  %21 = vst [vmem:[#allocation5] sm:$0x1] %v20
  $region1: #{tpu_custom_call.1} parent=0
    #allocation6 [shape = 'u8[1048576]{0}', space=vmem, size = 0x100000, scoped, tag = 'input window, operand 1, single buffered']
    #allocation7 [shape = 's32[1]{0}', space=sflag, size = 0x4, scoped, tag = 'scoped memory for tpu_custom_call.1']
    #allocation8 [shape = 's32[1]{0}', space=sflag, size = 0x4, scoped, tag = 'scoped memory for tpu_custom_call.1']
    #allocation9 [shape = 'u8[524288]{0}', space=vmem, size = 0x80000, scoped, tag = 'input window, operand 3, single buffered']
    #allocation10 [shape = 's32[1]{0}', space=sflag, size = 0x4, scoped, tag = 'scoped memory for tpu_custom_call.1']
    #allocation11 [shape = 'u8[524288]{0}', space=vmem, size = 0x80000, scoped, tag = 'input window, operand 7, single buffered']
    #allocation12 [shape = 'u8[512]{0}', space=vmem, size = 0x400, scoped, tag = 'output window, operand 0, single buffered']
    #allocation13 [shape = 'u8[512]{0}', space=vmem, size = 0x400, scoped, tag = 'output window, operand 1, single buffered']
    #allocation14 [shape = 's32[1]{0}', space=sflag, size = 0x4, scoped, tag = 'scoped memory for tpu_custom_call.1']
    #allocation15 [shape = 'u8[512]{0}', space=vmem, size = 0x400, scoped, tag = 'output window, operand 2, single buffered']
    #allocation16 [shape = 'u8[1024]{0}', space=vmem, size = 0x400, scoped, tag = 'output window, operand 3, single buffered']
    #allocation17 [shape = 's32[1]{0}', space=sflag, size = 0x4, scoped, tag = 'scoped memory for tpu_custom_call.1']
    %22 = vsyncpa [#allocation7], 0
    %23 = vsyncpa [#allocation10], 0
    %24 = vsyncpa [#allocation8], 0
    %25 = vsyncpa [#allocation14], 0
    %26 = vsyncpa [#allocation17], 0
    // Predicated region
    $region2: #{tpu_custom_call.1} parent=1 // pred_check
      _
    $region3: #{tpu_custom_call.1} parent=1 // pred_check_branch
      %28 = sbr.rel (0) target = $region5
    $region4: #{tpu_custom_call.1} parent=1 // pred_region
      _
    $region5: #{tpu_custom_call.1} parent=1 // pred_fallthru
      _
    // Predicated region
    $region6: #{tpu_custom_call.1} parent=1 // pred_check
      _
    $region7: #{tpu_custom_call.1} parent=1 // pred_check_branch
      %30 = sbr.rel (0) target = $region9
    $region8: #{tpu_custom_call.1} parent=1 // pred_region
      %32 = vsyncadd [#allocation7], 0
      %s33 = sshll.u32 %s1, 4
      %s34 = int_to_ptr.hbm [resolvable:$true] %s33
      %s35 = sshll.u32 [#allocation6], 4
      %s36 = int_to_ptr.vmem [resolvable:$true] %s35
      %41 = dma.hbm_to_vmem [thread:$0]  %s34, 32768, %s36, [#allocation7], 256, 256, 16
    $region9: #{tpu_custom_call.1} parent=1 // pred_fallthru
      _
    // Predicated region
    $region10: #{tpu_custom_call.1} parent=1 // pred_check
      _
    $region11: #{tpu_custom_call.1} parent=1 // pred_check_branch
      %43 = sbr.rel (0) target = $region13
    $region12: #{tpu_custom_call.1} parent=1 // pred_region
      _
    $region13: #{tpu_custom_call.1} parent=1 // pred_fallthru
      _
    // Predicated region
    $region14: #{tpu_custom_call.1} parent=1 // pred_check
      _
    $region15: #{tpu_custom_call.1} parent=1 // pred_check_branch
      %45 = sbr.rel (0) target = $region17
    $region16: #{tpu_custom_call.1} parent=1 // pred_region
      %47 = vsyncadd [#allocation10], 0
      %s48 = sshll.u32 %s3, 4
      %s49 = int_to_ptr.hbm [resolvable:$true] %s48
      %s50 = sshll.u32 [#allocation9], 4
      %s51 = int_to_ptr.vmem [resolvable:$true] %s50
      %56 = dma.hbm_to_vmem [thread:$0]  %s49, 16384, %s51, [#allocation10], 256, 256, 16
    $region17: #{tpu_custom_call.1} parent=1 // pred_fallthru
      _
    // Predicated region
    $region18: #{tpu_custom_call.1} parent=1 // pred_check
      _
    $region19: #{tpu_custom_call.1} parent=1 // pred_check_branch
      %58 = sbr.rel (0) target = $region21
    $region20: #{tpu_custom_call.1} parent=1 // pred_region
      _
    $region21: #{tpu_custom_call.1} parent=1 // pred_fallthru
      _
    // Predicated region
    $region22: #{tpu_custom_call.1} parent=1 // pred_check
      _
    $region23: #{tpu_custom_call.1} parent=1 // pred_check_branch
      %60 = sbr.rel (0) target = $region25
    $region24: #{tpu_custom_call.1} parent=1 // pred_region
      _
    $region25: #{tpu_custom_call.1} parent=1 // pred_fallthru
      _
    // Predicated region
    $region26: #{tpu_custom_call.1} parent=1 // pred_check
      _
    $region27: #{tpu_custom_call.1} parent=1 // pred_check_branch
      %62 = sbr.rel (0) target = $region29
    $region28: #{tpu_custom_call.1} parent=1 // pred_region
      _
    $region29: #{tpu_custom_call.1} parent=1 // pred_fallthru
      _
    // Predicated region
    $region30: #{tpu_custom_call.1} parent=1 // pred_check
      _
    $region31: #{tpu_custom_call.1} parent=1 // pred_check_branch
      %64 = sbr.rel (0) target = $region33
    $region32: #{tpu_custom_call.1} parent=1 // pred_region
      %66 = vsyncadd [#allocation10], 0
      %s67 = sshll.u32 %s7, 4
      %s68 = int_to_ptr.hbm [resolvable:$true] %s67
      %s69 = sshll.u32 [#allocation11], 4
      %s70 = int_to_ptr.vmem [resolvable:$true] %s69
      %75 = dma.hbm_to_vmem [thread:$0]  %s68, 16384, %s70, [#allocation10], 256, 256, 16
    $region33: #{tpu_custom_call.1} parent=1 // pred_fallthru
      _
    // Predicated region
    $region34: #{tpu_custom_call.1} parent=1 // pred_check
      _
    $region35: #{tpu_custom_call.1} parent=1 // pred_check_branch
      %77 = sbr.rel (0) target = $region37
    $region36: #{tpu_custom_call.1} parent=1 // pred_region
      _
    $region37: #{tpu_custom_call.1} parent=1 // pred_fallthru
      _
    // Predicated region
    $region38: #{tpu_custom_call.1} parent=1 // pred_check
      _
    $region39: #{tpu_custom_call.1} parent=1 // pred_check_branch
      %79 = sbr.rel (0) target = $region41
    $region40: #{tpu_custom_call.1} parent=1 // pred_region
      _
    $region41: #{tpu_custom_call.1} parent=1 // pred_fallthru
      _
    // Predicated region
    $region42: #{tpu_custom_call.1} parent=1 // pred_check
      _
    $region43: #{tpu_custom_call.1} parent=1 // pred_check_branch
      %81 = sbr.rel (0) target = $region45
    $region44: #{tpu_custom_call.1} parent=1 // pred_region
      _
    $region45: #{tpu_custom_call.1} parent=1 // pred_fallthru
      _
    // Predicated region
    $region46: #{tpu_custom_call.1} parent=1 // pred_check
      _
    $region47: #{tpu_custom_call.1} parent=1 // pred_check_branch
      %83 = sbr.rel (0) target = $region49
    $region48: #{tpu_custom_call.1} parent=1 // pred_region
      %85 = dma.done [#allocation7], 32768
    $region49: #{tpu_custom_call.1} parent=1 // pred_fallthru
      _
    // Predicated region
    $region50: #{tpu_custom_call.1} parent=1 // pred_check
      _
    $region51: #{tpu_custom_call.1} parent=1 // pred_check_branch
      %87 = sbr.rel (0) target = $region53
    $region52: #{tpu_custom_call.1} parent=1 // pred_region
      %89 = dma.done [#allocation10], 16384
    $region53: #{tpu_custom_call.1} parent=1 // pred_fallthru
      _
    // Predicated region
    $region54: #{tpu_custom_call.1} parent=1 // pred_check
      _
    $region55: #{tpu_custom_call.1} parent=1 // pred_check_branch
      %91 = sbr.rel (0) target = $region57
    $region56: #{tpu_custom_call.1} parent=1 // pred_region
      %93 = dma.done [#allocation10], 16384
    $region57: #{tpu_custom_call.1} parent=1 // pred_fallthru
      _
    %p95 = scmp.eq.s32.totalorder 0, 0
    // Predicated region
    $region58: #{tpu_custom_call.1} parent=1 // pred_check
      %p96 = pneg %p95
    $region59: #{tpu_custom_call.1} parent=1 // pred_check_branch
      %98 = sbr.rel (%p96) target = $region61
    $region60: #{tpu_custom_call.1} parent=1 // pred_region
      %vm99 = vcmask 0
      %100 = vst.msk [vmem:[#allocation2] sm:$0x1] %vm99, -inf
      %101 = vst.msk [vmem:[#allocation3] sm:$0x1] %vm99, 0.0
      %v102 = vlaneseq
      %vm103 = vcmp.ge.s32.totalorder %v102, 0
      %vm104 = vcmp.lt.s32.totalorder %v102, 512
      %vm105 = vmand %vm103, %vm104
      %106 = vst.msk [vmem:[#allocation4] sm:$0xf] %vm105, 0.0
    $region61: #{tpu_custom_call.1} parent=1 // pred_fallthru
      _
    %v107 = vld [vmem:[%s0] sm:$0xff]
    %v108 = vld [vmem:[%s0 + $0x8] sm:$0xff]
    %v109 = vld [vmem:[%s0 + $0x10] sm:$0xff]
    %v110 = vld [vmem:[%s0 + $0x18] sm:$0xff]
    %v111 = vld [vmem:[%s0 + $0x20] sm:$0xff]
    %v112 = vld [vmem:[%s0 + $0x28] sm:$0xff]
    %v113 = vld [vmem:[%s0 + $0x30] sm:$0xff]
    %v114 = vld [vmem:[%s0 + $0x38] sm:$0xff]
    %v115 = vpack.c.bf16 %v107, %v107
    %v116 = vpack.c.bf16 %v108, %v108
    %v117 = vpack.c.bf16 %v109, %v109
    %v118 = vpack.c.bf16 %v110, %v110
    %v119 = vpack.c.bf16 %v111, %v111
    %v120 = vpack.c.bf16 %v112, %v112
    %v121 = vpack.c.bf16 %v113, %v113
    %v122 = vpack.c.bf16 %v114, %v114
    %v123 = vld [vmem:[#allocation6] sm:$0xff]
    %v124 = vld [vmem:[#allocation6 + $0x8] sm:$0xff]
    %v125 = vld [vmem:[#allocation6 + $0x10] sm:$0xff]
    %v126 = vld [vmem:[#allocation6 + $0x18] sm:$0xff]
    %v127 = vld [vmem:[#allocation6 + $0x20] sm:$0xff]
    %v128 = vld [vmem:[#allocation6 + $0x28] sm:$0xff]
    %v129 = vld [vmem:[#allocation6 + $0x30] sm:$0xff]
    %v130 = vld [vmem:[#allocation6 + $0x38] sm:$0xff]
    %v131 = vld [vmem:[#allocation6 + $0x40] sm:$0xff]
    %v132 = vld [vmem:[#allocation6 + $0x48] sm:$0xff]
    %v133 = vld [vmem:[#allocation6 + $0x50] sm:$0xff]
    %v134 = vld [vmem:[#allocation6 + $0x58] sm:$0xff]
    %v135 = vld [vmem:[#allocation6 + $0x60] sm:$0xff]
    %v136 = vld [vmem:[#allocation6 + $0x68] sm:$0xff]
    %v137 = vld [vmem:[#allocation6 + $0x70] sm:$0xff]
    %v138 = vld [vmem:[#allocation6 + $0x78] sm:$0xff]
    %v139 = vld [vmem:[#allocation6 + $0x80] sm:$0xff]
    %v140 = vld [vmem:[#allocation6 + $0x88] sm:$0xff]
    %v141 = vld [vmem:[#allocation6 + $0x90] sm:$0xff]
    %v142 = vld [vmem:[#allocation6 + $0x98] sm:$0xff]
    %v143 = vld [vmem:[#allocation6 + $0xa0] sm:$0xff]
    %v144 = vld [vmem:[#allocation6 + $0xa8] sm:$0xff]
    %v145 = vld [vmem:[#allocation6 + $0xb0] sm:$0xff]
    %v146 = vld [vmem:[#allocation6 + $0xb8] sm:$0xff]
    %v147 = vld [vmem:[#allocation6 + $0xc0] sm:$0xff]
    %v148 = vld [vmem:[#allocation6 + $0xc8] sm:$0xff]
    %v149 = vld [vmem:[#allocation6 + $0xd0] sm:$0xff]
    %v150 = vld [vmem:[#allocation6 + $0xd8] sm:$0xff]
    %v151 = vld [vmem:[#allocation6 + $0xe0] sm:$0xff]
    %v152 = vld [vmem:[#allocation6 + $0xe8] sm:$0xff]
    %v153 = vld [vmem:[#allocation6 + $0xf0] sm:$0xff]
    %v154 = vld [vmem:[#allocation6 + $0xf8] sm:$0xff]
    %v155 = vld [vmem:[#allocation6 + $0x100] sm:$0xff]
    %v156 = vld [vmem:[#allocation6 + $0x108] sm:$0xff]
    %v157 = vld [vmem:[#allocation6 + $0x110] sm:$0xff]
    %v158 = vld [vmem:[#allocation6 + $0x118] sm:$0xff]
    %v159 = vld [vmem:[#allocation6 + $0x120] sm:$0xff]
    %v160 = vld [vmem:[#allocation6 + $0x128] sm:$0xff]
    %v161 = vld [vmem:[#allocation6 + $0x130] sm:$0xff]
    %v162 = vld [vmem:[#allocation6 + $0x138] sm:$0xff]
    %v163 = vld [vmem:[#allocation6 + $0x140] sm:$0xff]
    %v164 = vld [vmem:[#allocation6 + $0x148] sm:$0xff]
    %v165 = vld [vmem:[#allocation6 + $0x150] sm:$0xff]
    %v166 = vld [vmem:[#allocation6 + $0x158] sm:$0xff]
    %v167 = vld [vmem:[#allocation6 + $0x160] sm:$0xff]
    %v168 = vld [vmem:[#allocation6 + $0x168] sm:$0xff]
    %v169 = vld [vmem:[#allocation6 + $0x170] sm:$0xff]
    %v170 = vld [vmem:[#allocation6 + $0x178] sm:$0xff]
    %v171 = vld [vmem:[#allocation6 + $0x180] sm:$0xff]
    %v172 = vld [vmem:[#allocation6 + $0x188] sm:$0xff]
    %v173 = vld [vmem:[#allocation6 + $0x190] sm:$0xff]
    %v174 = vld [vmem:[#allocation6 + $0x198] sm:$0xff]
    %v175 = vld [vmem:[#allocation6 + $0x1a0] sm:$0xff]
    %v176 = vld [vmem:[#allocation6 + $0x1a8] sm:$0xff]
    %v177 = vld [vmem:[#allocation6 + $0x1b0] sm:$0xff]
    %v178 = vld [vmem:[#allocation6 + $0x1b8] sm:$0xff]
    %v179 = vld [vmem:[#allocation6 + $0x1c0] sm:$0xff]
    %v180 = vld [vmem:[#allocation6 + $0x1c8] sm:$0xff]
    %v181 = vld [vmem:[#allocation6 + $0x1d0] sm:$0xff]
    %v182 = vld [vmem:[#allocation6 + $0x1d8] sm:$0xff]
    %v183 = vld [vmem:[#allocation6 + $0x1e0] sm:$0xff]
    %v184 = vld [vmem:[#allocation6 + $0x1e8] sm:$0xff]
    %v185 = vld [vmem:[#allocation6 + $0x1f0] sm:$0xff]
    %v186 = vld [vmem:[#allocation6 + $0x1f8] sm:$0xff]
    %v187 = vld [vmem:[#allocation6 + $0x200] sm:$0xff]
    %v188 = vld [vmem:[#allocation6 + $0x208] sm:$0xff]
    %v189 = vld [vmem:[#allocation6 + $0x210] sm:$0xff]
    %v190 = vld [vmem:[#allocation6 + $0x218] sm:$0xff]
    %v191 = vld [vmem:[#allocation6 + $0x220] sm:$0xff]
    %v192 = vld [vmem:[#allocation6 + $0x228] sm:$0xff]
    %v193 = vld [vmem:[#allocation6 + $0x230] sm:$0xff]
    %v194 = vld [vmem:[#allocation6 + $0x238] sm:$0xff]
    %v195 = vld [vmem:[#allocation6 + $0x240] sm:$0xff]
    %v196 = vld [vmem:[#allocation6 + $0x248] sm:$0xff]
    %v197 = vld [vmem:[#allocation6 + $0x250] sm:$0xff]
    %v198 = vld [vmem:[#allocation6 + $0x258] sm:$0xff]
    %v199 = vld [vmem:[#allocation6 + $0x260] sm:$0xff]
    %v200 = vld [vmem:[#allocation6 + $0x268] sm:$0xff]
    %v201 = vld [vmem:[#allocation6 + $0x270] sm:$0xff]
    %v202 = vld [vmem:[#allocation6 + $0x278] sm:$0xff]
    %v203 = vld [vmem:[#allocation6 + $0x280] sm:$0xff]
    %v204 = vld [vmem:[#allocation6 + $0x288] sm:$0xff]
    %v205 = vld [vmem:[#allocation6 + $0x290] sm:$0xff]
    %v206 = vld [vmem:[#allocation6 + $0x298] sm:$0xff]
    %v207 = vld [vmem:[#allocation6 + $0x2a0] sm:$0xff]
    %v208 = vld [vmem:[#allocation6 + $0x2a8] sm:$0xff]
    %v209 = vld [vmem:[#allocation6 + $0x2b0] sm:$0xff]
    %v210 = vld [vmem:[#allocation6 + $0x2b8] sm:$0xff]
    %v211 = vld [vmem:[#allocation6 + $0x2c0] sm:$0xff]
    %v212 = vld [vmem:[#allocation6 + $0x2c8] sm:$0xff]
    %v213 = vld [vmem:[#allocation6 + $0x2d0] sm:$0xff]
    %v214 = vld [vmem:[#allocation6 + $0x2d8] sm:$0xff]
    %v215 = vld [vmem:[#allocation6 + $0x2e0] sm:$0xff]
    %v216 = vld [vmem:[#allocation6 + $0x2e8] sm:$0xff]
    %v217 = vld [vmem:[#allocation6 + $0x2f0] sm:$0xff]
    %v218 = vld [vmem:[#allocation6 + $0x2f8] sm:$0xff]
    %v219 = vld [vmem:[#allocation6 + $0x300] sm:$0xff]
    %v220 = vld [vmem:[#allocation6 + $0x308] sm:$0xff]
    %v221 = vld [vmem:[#allocation6 + $0x310] sm:$0xff]
    %v222 = vld [vmem:[#allocation6 + $0x318] sm:$0xff]
    %v223 = vld [vmem:[#allocation6 + $0x320] sm:$0xff]
    %v224 = vld [vmem:[#allocation6 + $0x328] sm:$0xff]
    %v225 = vld [vmem:[#allocation6 + $0x330] sm:$0xff]
    %v226 = vld [vmem:[#allocation6 + $0x338] sm:$0xff]
    %v227 = vld [vmem:[#allocation6 + $0x340] sm:$0xff]
    %v228 = vld [vmem:[#allocation6 + $0x348] sm:$0xff]
    %v229 = vld [vmem:[#allocation6 + $0x350] sm:$0xff]
    %v230 = vld [vmem:[#allocation6 + $0x358] sm:$0xff]
    %v231 = vld [vmem:[#allocation6 + $0x360] sm:$0xff]
    %v232 = vld [vmem:[#allocation6 + $0x368] sm:$0xff]
    %v233 = vld [vmem:[#allocation6 + $0x370] sm:$0xff]
    %v234 = vld [vmem:[#allocation6 + $0x378] sm:$0xff]
    %v235 = vld [vmem:[#allocation6 + $0x380] sm:$0xff]
    %v236 = vld [vmem:[#allocation6 + $0x388] sm:$0xff]
    %v237 = vld [vmem:[#allocation6 + $0x390] sm:$0xff]
    %v238 = vld [vmem:[#allocation6 + $0x398] sm:$0xff]
    %v239 = vld [vmem:[#allocation6 + $0x3a0] sm:$0xff]
    %v240 = vld [vmem:[#allocation6 + $0x3a8] sm:$0xff]
    %v241 = vld [vmem:[#allocation6 + $0x3b0] sm:$0xff]
    %v242 = vld [vmem:[#allocation6 + $0x3b8] sm:$0xff]
    %v243 = vld [vmem:[#allocation6 + $0x3c0] sm:$0xff]
    %v244 = vld [vmem:[#allocation6 + $0x3c8] sm:$0xff]
    %v245 = vld [vmem:[#allocation6 + $0x3d0] sm:$0xff]
    %v246 = vld [vmem:[#allocation6 + $0x3d8] sm:$0xff]
    %v247 = vld [vmem:[#allocation6 + $0x3e0] sm:$0xff]
    %v248 = vld [vmem:[#allocation6 + $0x3e8] sm:$0xff]
    %v249 = vld [vmem:[#allocation6 + $0x3f0] sm:$0xff]
    %v250 = vld [vmem:[#allocation6 + $0x3f8] sm:$0xff]
    %v251 = vld [vmem:[#allocation6 + $0x400] sm:$0xff]
    %v252 = vld [vmem:[#allocation6 + $0x408] sm:$0xff]
    %v253 = vld [vmem:[#allocation6 + $0x410] sm:$0xff]
    %v254 = vld [vmem:[#allocation6 + $0x418] sm:$0xff]
    %v255 = vld [vmem:[#allocation6 + $0x420] sm:$0xff]
    %v256 = vld [vmem:[#allocation6 + $0x428] sm:$0xff]
    %v257 = vld [vmem:[#allocation6 + $0x430] sm:$0xff]
    %v258 = vld [vmem:[#allocation6 + $0x438] sm:$0xff]
    %v259 = vld [vmem:[#allocation6 + $0x440] sm:$0xff]
    %v260 = vld [vmem:[#allocation6 + $0x448] sm:$0xff]
    %v261 = vld [vmem:[#allocation6 + $0x450] sm:$0xff]
    %v262 = vld [vmem:[#allocation6 + $0x458] sm:$0xff]
    %v263 = vld [vmem:[#allocation6 + $0x460] sm:$0xff]
    %v264 = vld [vmem:[#allocation6 + $0x468] sm:$0xff]
    %v265 = vld [vmem:[#allocation6 + $0x470] sm:$0xff]
    %v266 = vld [vmem:[#allocation6 + $0x478] sm:$0xff]
    %v267 = vld [vmem:[#allocation6 + $0x480] sm:$0xff]
    %v268 = vld [vmem:[#allocation6 + $0x488] sm:$0xff]
    %v269 = vld [vmem:[#allocation6 + $0x490] sm:$0xff]
    %v270 = vld [vmem:[#allocation6 + $0x498] sm:$0xff]
    %v271 = vld [vmem:[#allocation6 + $0x4a0] sm:$0xff]
    %v272 = vld [vmem:[#allocation6 + $0x4a8] sm:$0xff]
    %v273 = vld [vmem:[#allocation6 + $0x4b0] sm:$0xff]
    %v274 = vld [vmem:[#allocation6 + $0x4b8] sm:$0xff]
    %v275 = vld [vmem:[#allocation6 + $0x4c0] sm:$0xff]
    %v276 = vld [vmem:[#allocation6 + $0x4c8] sm:$0xff]
    %v277 = vld [vmem:[#allocation6 + $0x4d0] sm:$0xff]
    %v278 = vld [vmem:[#allocation6 + $0x4d8] sm:$0xff]
    %v279 = vld [vmem:[#allocation6 + $0x4e0] sm:$0xff]
    %v280 = vld [vmem:[#allocation6 + $0x4e8] sm:$0xff]
    %v281 = vld [vmem:[#allocation6 + $0x4f0] sm:$0xff]
    %v282 = vld [vmem:[#allocation6 + $0x4f8] sm:$0xff]
    %v283 = vld [vmem:[#allocation6 + $0x500] sm:$0xff]
    %v284 = vld [vmem:[#allocation6 + $0x508] sm:$0xff]
    %v285 = vld [vmem:[#allocation6 + $0x510] sm:$0xff]
    %v286 = vld [vmem:[#allocation6 + $0x518] sm:$0xff]
    %v287 = vld [vmem:[#allocation6 + $0x520] sm:$0xff]
    %v288 = vld [vmem:[#allocation6 + $0x528] sm:$0xff]
    %v289 = vld [vmem:[#allocation6 + $0x530] sm:$0xff]
    %v290 = vld [vmem:[#allocation6 + $0x538] sm:$0xff]
    %v291 = vld [vmem:[#allocation6 + $0x540] sm:$0xff]
    %v292 = vld [vmem:[#allocation6 + $0x548] sm:$0xff]
    %v293 = vld [vmem:[#allocation6 + $0x550] sm:$0xff]
    %v294 = vld [vmem:[#allocation6 + $0x558] sm:$0xff]
    %v295 = vld [vmem:[#allocation6 + $0x560] sm:$0xff]
    %v296 = vld [vmem:[#allocation6 + $0x568] sm:$0xff]
    %v297 = vld [vmem:[#allocation6 + $0x570] sm:$0xff]
    %v298 = vld [vmem:[#allocation6 + $0x578] sm:$0xff]
    %v299 = vld [vmem:[#allocation6 + $0x580] sm:$0xff]
    %v300 = vld [vmem:[#allocation6 + $0x588] sm:$0xff]
    %v301 = vld [vmem:[#allocation6 + $0x590] sm:$0xff]
    %v302 = vld [vmem:[#allocation6 + $0x598] sm:$0xff]
    %v303 = vld [vmem:[#allocation6 + $0x5a0] sm:$0xff]
    %v304 = vld [vmem:[#allocation6 + $0x5a8] sm:$0xff]
    %v305 = vld [vmem:[#allocation6 + $0x5b0] sm:$0xff]
    %v306 = vld [vmem:[#allocation6 + $0x5b8] sm:$0xff]
    %v307 = vld [vmem:[#allocation6 + $0x5c0] sm:$0xff]
    %v308 = vld [vmem:[#allocation6 + $0x5c8] sm:$0xff]
    %v309 = vld [vmem:[#allocation6 + $0x5d0] sm:$0xff]
    %v310 = vld [vmem:[#allocation6 + $0x5d8] sm:$0xff]
    %v311 = vld [vmem:[#allocation6 + $0x5e0] sm:$0xff]
    %v312 = vld [vmem:[#allocation6 + $0x5e8] sm:$0xff]
    %v313 = vld [vmem:[#allocation6 + $0x5f0] sm:$0xff]
    %v314 = vld [vmem:[#allocation6 + $0x5f8] sm:$0xff]
    %v315 = vld [vmem:[#allocation6 + $0x600] sm:$0xff]
    %v316 = vld [vmem:[#allocation6 + $0x608] sm:$0xff]
    %v317 = vld [vmem:[#allocation6 + $0x610] sm:$0xff]
    %v318 = vld [vmem:[#allocation6 + $0x618] sm:$0xff]
    %v319 = vld [vmem:[#allocation6 + $0x620] sm:$0xff]
    %v320 = vld [vmem:[#allocation6 + $0x628] sm:$0xff]
    %v321 = vld [vmem:[#allocation6 + $0x630] sm:$0xff]
    %v322 = vld [vmem:[#allocation6 + $0x638] sm:$0xff]
    %v323 = vld [vmem:[#allocation6 + $0x640] sm:$0xff]
    %v324 = vld [vmem:[#allocation6 + $0x648] sm:$0xff]
    %v325 = vld [vmem:[#allocation6 + $0x650] sm:$0xff]
    %v326 = vld [vmem:[#allocation6 + $0x658] sm:$0xff]
    %v327 = vld [vmem:[#allocation6 + $0x660] sm:$0xff]
    %v328 = vld [vmem:[#allocation6 + $0x668] sm:$0xff]
    %v329 = vld [vmem:[#allocation6 + $0x670] sm:$0xff]
    %v330 = vld [vmem:[#allocation6 + $0x678] sm:$0xff]
    %v331 = vld [vmem:[#allocation6 + $0x680] sm:$0xff]
    %v332 = vld [vmem:[#allocation6 + $0x688] sm:$0xff]
    %v333 = vld [vmem:[#allocation6 + $0x690] sm:$0xff]
    %v334 = vld [vmem:[#allocation6 + $0x698] sm:$0xff]
    %v335 = vld [vmem:[#allocation6 + $0x6a0] sm:$0xff]
    %v336 = vld [vmem:[#allocation6 + $0x6a8] sm:$0xff]
    %v337 = vld [vmem:[#allocation6 + $0x6b0] sm:$0xff]
    %v338 = vld [vmem:[#allocation6 + $0x6b8] sm:$0xff]
    %v339 = vld [vmem:[#allocation6 + $0x6c0] sm:$0xff]
    %v340 = vld [vmem:[#allocation6 + $0x6c8] sm:$0xff]
    %v341 = vld [vmem:[#allocation6 + $0x6d0] sm:$0xff]
    %v342 = vld [vmem:[#allocation6 + $0x6d8] sm:$0xff]
    %v343 = vld [vmem:[#allocation6 + $0x6e0] sm:$0xff]
    %v344 = vld [vmem:[#allocation6 + $0x6e8] sm:$0xff]
    %v345 = vld [vmem:[#allocation6 + $0x6f0] sm:$0xff]
    %v346 = vld [vmem:[#allocation6 + $0x6f8] sm:$0xff]
    %v347 = vld [vmem:[#allocation6 + $0x700] sm:$0xff]
    %v348 = vld [vmem:[#allocation6 + $0x708] sm:$0xff]
    %v349 = vld [vmem:[#allocation6 + $0x710] sm:$0xff]
    %v350 = vld [vmem:[#allocation6 + $0x718] sm:$0xff]
    %v351 = vld [vmem:[#allocation6 + $0x720] sm:$0xff]
    %v352 = vld [vmem:[#allocation6 + $0x728] sm:$0xff]
    %v353 = vld [vmem:[#allocation6 + $0x730] sm:$0xff]
    %v354 = vld [vmem:[#allocation6 + $0x738] sm:$0xff]
    %v355 = vld [vmem:[#allocation6 + $0x740] sm:$0xff]
    %v356 = vld [vmem:[#allocation6 + $0x748] sm:$0xff]
    %v357 = vld [vmem:[#allocation6 + $0x750] sm:$0xff]
    %v358 = vld [vmem:[#allocation6 + $0x758] sm:$0xff]
    %v359 = vld [vmem:[#allocation6 + $0x760] sm:$0xff]
    %v360 = vld [vmem:[#allocation6 + $0x768] sm:$0xff]
    %v361 = vld [vmem:[#allocation6 + $0x770] sm:$0xff]
    %v362 = vld [vmem:[#allocation6 + $0x778] sm:$0xff]
    %v363 = vld [vmem:[#allocation6 + $0x780] sm:$0xff]
    %v364 = vld [vmem:[#allocation6 + $0x788] sm:$0xff]
    %v365 = vld [vmem:[#allocation6 + $0x790] sm:$0xff]
    %v366 = vld [vmem:[#allocation6 + $0x798] sm:$0xff]
    %v367 = vld [vmem:[#allocation6 + $0x7a0] sm:$0xff]
    %v368 = vld [vmem:[#allocation6 + $0x7a8] sm:$0xff]
    %v369 = vld [vmem:[#allocation6 + $0x7b0] sm:$0xff]
    %v370 = vld [vmem:[#allocation6 + $0x7b8] sm:$0xff]
    %v371 = vld [vmem:[#allocation6 + $0x7c0] sm:$0xff]
    %v372 = vld [vmem:[#allocation6 + $0x7c8] sm:$0xff]
    %v373 = vld [vmem:[#allocation6 + $0x7d0] sm:$0xff]
    %v374 = vld [vmem:[#allocation6 + $0x7d8] sm:$0xff]
    %v375 = vld [vmem:[#allocation6 + $0x7e0] sm:$0xff]
    %v376 = vld [vmem:[#allocation6 + $0x7e8] sm:$0xff]
    %v377 = vld [vmem:[#allocation6 + $0x7f0] sm:$0xff]
    %v378 = vld [vmem:[#allocation6 + $0x7f8] sm:$0xff]
    %v379 = vld [vmem:[%s2] sm:$0xf]
    %v381 = vperm.slane %v379, 0
    %v382 = vperm.slane %v379, 1
    %v383 = vperm.slane %v379, 2
    %v384 = vperm.slane %v379, 3
    %v645 = vunpack.c.l.b16 %v123
    %v646 = vunpack.c.h.b16 %v123
    %v647 = vunpack.c.l.b16 %v124
    %v648 = vunpack.c.h.b16 %v124
    %v649 = vunpack.c.l.b16 %v125
    %v650 = vunpack.c.h.b16 %v125
    %v651 = vunpack.c.l.b16 %v126
    %v652 = vunpack.c.h.b16 %v126
    %v653 = vunpack.c.l.b16 %v127
    %v654 = vunpack.c.h.b16 %v127
    %v655 = vunpack.c.l.b16 %v128
    %v656 = vunpack.c.h.b16 %v128
    %v657 = vunpack.c.l.b16 %v129
    %v658 = vunpack.c.h.b16 %v129
    %v659 = vunpack.c.l.b16 %v130
    %v660 = vunpack.c.h.b16 %v130
    %v661 = vunpack.c.l.b16 %v131
    %v662 = vunpack.c.h.b16 %v131
    %v663 = vunpack.c.l.b16 %v132
    %v664 = vunpack.c.h.b16 %v132
    %v665 = vunpack.c.l.b16 %v133
    %v666 = vunpack.c.h.b16 %v133
    %v667 = vunpack.c.l.b16 %v134
    %v668 = vunpack.c.h.b16 %v134
    %v669 = vunpack.c.l.b16 %v135
    %v670 = vunpack.c.h.b16 %v135
    %v671 = vunpack.c.l.b16 %v136
    %v672 = vunpack.c.h.b16 %v136
    %v673 = vunpack.c.l.b16 %v137
    %v674 = vunpack.c.h.b16 %v137
    %v675 = vunpack.c.l.b16 %v138
    %v676 = vunpack.c.h.b16 %v138
    %v677 = vunpack.c.l.b16 %v139
    %v678 = vunpack.c.h.b16 %v139
    %v679 = vunpack.c.l.b16 %v140
    %v680 = vunpack.c.h.b16 %v140
    %v681 = vunpack.c.l.b16 %v141
    %v682 = vunpack.c.h.b16 %v141
    %v683 = vunpack.c.l.b16 %v142
    %v684 = vunpack.c.h.b16 %v142
    %v685 = vunpack.c.l.b16 %v143
    %v686 = vunpack.c.h.b16 %v143
    %v687 = vunpack.c.l.b16 %v144
    %v688 = vunpack.c.h.b16 %v144
    %v689 = vunpack.c.l.b16 %v145
    %v690 = vunpack.c.h.b16 %v145
    %v691 = vunpack.c.l.b16 %v146
    %v692 = vunpack.c.h.b16 %v146
    %v693 = vunpack.c.l.b16 %v147
    %v694 = vunpack.c.h.b16 %v147
    %v695 = vunpack.c.l.b16 %v148
    %v696 = vunpack.c.h.b16 %v148
    %v697 = vunpack.c.l.b16 %v149
    %v698 = vunpack.c.h.b16 %v149
    %v699 = vunpack.c.l.b16 %v150
    %v700 = vunpack.c.h.b16 %v150
    %v701 = vunpack.c.l.b16 %v151
    %v702 = vunpack.c.h.b16 %v151
    %v703 = vunpack.c.l.b16 %v152
    %v704 = vunpack.c.h.b16 %v152
    %v705 = vunpack.c.l.b16 %v153
    %v706 = vunpack.c.h.b16 %v153
    %v707 = vunpack.c.l.b16 %v154
    %v708 = vunpack.c.h.b16 %v154
    %v709 = vunpack.c.l.b16 %v155
    %v710 = vunpack.c.h.b16 %v155
    %v711 = vunpack.c.l.b16 %v156
    %v712 = vunpack.c.h.b16 %v156
    %v713 = vunpack.c.l.b16 %v157
    %v714 = vunpack.c.h.b16 %v157
    %v715 = vunpack.c.l.b16 %v158
    %v716 = vunpack.c.h.b16 %v158
    %v717 = vunpack.c.l.b16 %v159
    %v718 = vunpack.c.h.b16 %v159
    %v719 = vunpack.c.l.b16 %v160
    %v720 = vunpack.c.h.b16 %v160
    %v721 = vunpack.c.l.b16 %v161
    %v722 = vunpack.c.h.b16 %v161
    %v723 = vunpack.c.l.b16 %v162
    %v724 = vunpack.c.h.b16 %v162
    %v725 = vunpack.c.l.b16 %v163
    %v726 = vunpack.c.h.b16 %v163
    %v727 = vunpack.c.l.b16 %v164
    %v728 = vunpack.c.h.b16 %v164
    %v729 = vunpack.c.l.b16 %v165
    %v730 = vunpack.c.h.b16 %v165
    %v731 = vunpack.c.l.b16 %v166
    %v732 = vunpack.c.h.b16 %v166
    %v733 = vunpack.c.l.b16 %v167
    %v734 = vunpack.c.h.b16 %v167
    %v735 = vunpack.c.l.b16 %v168
    %v736 = vunpack.c.h.b16 %v168
    %v737 = vunpack.c.l.b16 %v169
    %v738 = vunpack.c.h.b16 %v169
    %v739 = vunpack.c.l.b16 %v170
    %v740 = vunpack.c.h.b16 %v170
    %v741 = vunpack.c.l.b16 %v171
    %v742 = vunpack.c.h.b16 %v171
    %v743 = vunpack.c.l.b16 %v172
    %v744 = vunpack.c.h.b16 %v172
    %v745 = vunpack.c.l.b16 %v173
    %v746 = vunpack.c.h.b16 %v173
    %v747 = vunpack.c.l.b16 %v174
    %v748 = vunpack.c.h.b16 %v174
    %v749 = vunpack.c.l.b16 %v175
    %v750 = vunpack.c.h.b16 %v175
    %v751 = vunpack.c.l.b16 %v176
    %v752 = vunpack.c.h.b16 %v176
    %v753 = vunpack.c.l.b16 %v177
    %v754 = vunpack.c.h.b16 %v177
    %v755 = vunpack.c.l.b16 %v178
    %v756 = vunpack.c.h.b16 %v178
    %v757 = vunpack.c.l.b16 %v179
    %v758 = vunpack.c.h.b16 %v179
    %v759 = vunpack.c.l.b16 %v180
    %v760 = vunpack.c.h.b16 %v180
    %v761 = vunpack.c.l.b16 %v181
    %v762 = vunpack.c.h.b16 %v181
    %v763 = vunpack.c.l.b16 %v182
    %v764 = vunpack.c.h.b16 %v182
    %v765 = vunpack.c.l.b16 %v183
    %v766 = vunpack.c.h.b16 %v183
    %v767 = vunpack.c.l.b16 %v184
    %v768 = vunpack.c.h.b16 %v184
    %v769 = vunpack.c.l.b16 %v185
    %v770 = vunpack.c.h.b16 %v185
    %v771 = vunpack.c.l.b16 %v186
    %v772 = vunpack.c.h.b16 %v186
    %v773 = vunpack.c.l.b16 %v187
    %v774 = vunpack.c.h.b16 %v187
    %v775 = vunpack.c.l.b16 %v188
    %v776 = vunpack.c.h.b16 %v188
    %v777 = vunpack.c.l.b16 %v189
    %v778 = vunpack.c.h.b16 %v189
    %v779 = vunpack.c.l.b16 %v190
    %v780 = vunpack.c.h.b16 %v190
    %v781 = vunpack.c.l.b16 %v191
    %v782 = vunpack.c.h.b16 %v191
    %v783 = vunpack.c.l.b16 %v192
    %v784 = vunpack.c.h.b16 %v192
    %v785 = vunpack.c.l.b16 %v193
    %v786 = vunpack.c.h.b16 %v193
    %v787 = vunpack.c.l.b16 %v194
    %v788 = vunpack.c.h.b16 %v194
    %v789 = vunpack.c.l.b16 %v195
    %v790 = vunpack.c.h.b16 %v195
    %v791 = vunpack.c.l.b16 %v196
    %v792 = vunpack.c.h.b16 %v196
    %v793 = vunpack.c.l.b16 %v197
    %v794 = vunpack.c.h.b16 %v197
    %v795 = vunpack.c.l.b16 %v198
    %v796 = vunpack.c.h.b16 %v198
    %v797 = vunpack.c.l.b16 %v199
    %v798 = vunpack.c.h.b16 %v199
    %v799 = vunpack.c.l.b16 %v200
    %v800 = vunpack.c.h.b16 %v200
    %v801 = vunpack.c.l.b16 %v201
    %v802 = vunpack.c.h.b16 %v201
    %v803 = vunpack.c.l.b16 %v202
    %v804 = vunpack.c.h.b16 %v202
    %v805 = vunpack.c.l.b16 %v203
    %v806 = vunpack.c.h.b16 %v203
    %v807 = vunpack.c.l.b16 %v204
    %v808 = vunpack.c.h.b16 %v204
    %v809 = vunpack.c.l.b16 %v205
    %v810 = vunpack.c.h.b16 %v205
    %v811 = vunpack.c.l.b16 %v206
    %v812 = vunpack.c.h.b16 %v206
    %v813 = vunpack.c.l.b16 %v207
    %v814 = vunpack.c.h.b16 %v207
    %v815 = vunpack.c.l.b16 %v208
    %v816 = vunpack.c.h.b16 %v208
    %v817 = vunpack.c.l.b16 %v209
    %v818 = vunpack.c.h.b16 %v209
    %v819 = vunpack.c.l.b16 %v210
    %v820 = vunpack.c.h.b16 %v210
    %v821 = vunpack.c.l.b16 %v211
    %v822 = vunpack.c.h.b16 %v211
    %v823 = vunpack.c.l.b16 %v212
    %v824 = vunpack.c.h.b16 %v212
    %v825 = vunpack.c.l.b16 %v213
    %v826 = vunpack.c.h.b16 %v213
    %v827 = vunpack.c.l.b16 %v214
    %v828 = vunpack.c.h.b16 %v214
    %v829 = vunpack.c.l.b16 %v215
    %v830 = vunpack.c.h.b16 %v215
    %v831 = vunpack.c.l.b16 %v216
    %v832 = vunpack.c.h.b16 %v216
    %v833 = vunpack.c.l.b16 %v217
    %v834 = vunpack.c.h.b16 %v217
    %v835 = vunpack.c.l.b16 %v218
    %v836 = vunpack.c.h.b16 %v218
    %v837 = vunpack.c.l.b16 %v219
    %v838 = vunpack.c.h.b16 %v219
    %v839 = vunpack.c.l.b16 %v220
    %v840 = vunpack.c.h.b16 %v220
    %v841 = vunpack.c.l.b16 %v221
    %v842 = vunpack.c.h.b16 %v221
    %v843 = vunpack.c.l.b16 %v222
    %v844 = vunpack.c.h.b16 %v222
    %v845 = vunpack.c.l.b16 %v223
    %v846 = vunpack.c.h.b16 %v223
    %v847 = vunpack.c.l.b16 %v224
    %v848 = vunpack.c.h.b16 %v224
    %v849 = vunpack.c.l.b16 %v225
    %v850 = vunpack.c.h.b16 %v225
    %v851 = vunpack.c.l.b16 %v226
    %v852 = vunpack.c.h.b16 %v226
    %v853 = vunpack.c.l.b16 %v227
    %v854 = vunpack.c.h.b16 %v227
    %v855 = vunpack.c.l.b16 %v228
    %v856 = vunpack.c.h.b16 %v228
    %v857 = vunpack.c.l.b16 %v229
    %v858 = vunpack.c.h.b16 %v229
    %v859 = vunpack.c.l.b16 %v230
    %v860 = vunpack.c.h.b16 %v230
    %v861 = vunpack.c.l.b16 %v231
    %v862 = vunpack.c.h.b16 %v231
    %v863 = vunpack.c.l.b16 %v232
    %v864 = vunpack.c.h.b16 %v232
    %v865 = vunpack.c.l.b16 %v233
    %v866 = vunpack.c.h.b16 %v233
    %v867 = vunpack.c.l.b16 %v234
    %v868 = vunpack.c.h.b16 %v234
    %v869 = vunpack.c.l.b16 %v235
    %v870 = vunpack.c.h.b16 %v235
    %v871 = vunpack.c.l.b16 %v236
    %v872 = vunpack.c.h.b16 %v236
    %v873 = vunpack.c.l.b16 %v237
    %v874 = vunpack.c.h.b16 %v237
    %v875 = vunpack.c.l.b16 %v238
    %v876 = vunpack.c.h.b16 %v238
    %v877 = vunpack.c.l.b16 %v239
    %v878 = vunpack.c.h.b16 %v239
    %v879 = vunpack.c.l.b16 %v240
    %v880 = vunpack.c.h.b16 %v240
    %v881 = vunpack.c.l.b16 %v241
    %v882 = vunpack.c.h.b16 %v241
    %v883 = vunpack.c.l.b16 %v242
    %v884 = vunpack.c.h.b16 %v242
    %v885 = vunpack.c.l.b16 %v243
    %v886 = vunpack.c.h.b16 %v243
    %v887 = vunpack.c.l.b16 %v244
    %v888 = vunpack.c.h.b16 %v244
    %v889 = vunpack.c.l.b16 %v245
    %v890 = vunpack.c.h.b16 %v245
    %v891 = vunpack.c.l.b16 %v246
    %v892 = vunpack.c.h.b16 %v246
    %v893 = vunpack.c.l.b16 %v247
    %v894 = vunpack.c.h.b16 %v247
    %v895 = vunpack.c.l.b16 %v248
    %v896 = vunpack.c.h.b16 %v248
    %v897 = vunpack.c.l.b16 %v249
    %v898 = vunpack.c.h.b16 %v249
    %v899 = vunpack.c.l.b16 %v250
    %v900 = vunpack.c.h.b16 %v250
    %v901 = vunpack.c.l.b16 %v251
    %v902 = vunpack.c.h.b16 %v251
    %v903 = vunpack.c.l.b16 %v252
    %v904 = vunpack.c.h.b16 %v252
    %v905 = vunpack.c.l.b16 %v253
    %v906 = vunpack.c.h.b16 %v253
    %v907 = vunpack.c.l.b16 %v254
    %v908 = vunpack.c.h.b16 %v254
    %v909 = vunpack.c.l.b16 %v255
    %v910 = vunpack.c.h.b16 %v255
    %v911 = vunpack.c.l.b16 %v256
    %v912 = vunpack.c.h.b16 %v256
    %v913 = vunpack.c.l.b16 %v257
    %v914 = vunpack.c.h.b16 %v257
    %v915 = vunpack.c.l.b16 %v258
    %v916 = vunpack.c.h.b16 %v258
    %v917 = vunpack.c.l.b16 %v259
    %v918 = vunpack.c.h.b16 %v259
    %v919 = vunpack.c.l.b16 %v260
    %v920 = vunpack.c.h.b16 %v260
    %v921 = vunpack.c.l.b16 %v261
    %v922 = vunpack.c.h.b16 %v261
    %v923 = vunpack.c.l.b16 %v262
    %v924 = vunpack.c.h.b16 %v262
    %v925 = vunpack.c.l.b16 %v263
    %v926 = vunpack.c.h.b16 %v263
    %v927 = vunpack.c.l.b16 %v264
    %v928 = vunpack.c.h.b16 %v264
    %v929 = vunpack.c.l.b16 %v265
    %v930 = vunpack.c.h.b16 %v265
    %v931 = vunpack.c.l.b16 %v266
    %v932 = vunpack.c.h.b16 %v266
    %v933 = vunpack.c.l.b16 %v267
    %v934 = vunpack.c.h.b16 %v267
    %v935 = vunpack.c.l.b16 %v268
    %v936 = vunpack.c.h.b16 %v268
    %v937 = vunpack.c.l.b16 %v269
    %v938 = vunpack.c.h.b16 %v269
    %v939 = vunpack.c.l.b16 %v270
    %v940 = vunpack.c.h.b16 %v270
    %v941 = vunpack.c.l.b16 %v271
    %v942 = vunpack.c.h.b16 %v271
    %v943 = vunpack.c.l.b16 %v272
    %v944 = vunpack.c.h.b16 %v272
    %v945 = vunpack.c.l.b16 %v273
    %v946 = vunpack.c.h.b16 %v273
    %v947 = vunpack.c.l.b16 %v274
    %v948 = vunpack.c.h.b16 %v274
    %v949 = vunpack.c.l.b16 %v275
    %v950 = vunpack.c.h.b16 %v275
    %v951 = vunpack.c.l.b16 %v276
    %v952 = vunpack.c.h.b16 %v276
    %v953 = vunpack.c.l.b16 %v277
    %v954 = vunpack.c.h.b16 %v277
    %v955 = vunpack.c.l.b16 %v278
    %v956 = vunpack.c.h.b16 %v278
    %v957 = vunpack.c.l.b16 %v279
    %v958 = vunpack.c.h.b16 %v279
    %v959 = vunpack.c.l.b16 %v280
    %v960 = vunpack.c.h.b16 %v280
    %v961 = vunpack.c.l.b16 %v281
    %v962 = vunpack.c.h.b16 %v281
    %v963 = vunpack.c.l.b16 %v282
    %v964 = vunpack.c.h.b16 %v282
    %v965 = vunpack.c.l.b16 %v283
    %v966 = vunpack.c.h.b16 %v283
    %v967 = vunpack.c.l.b16 %v284
    %v968 = vunpack.c.h.b16 %v284
    %v969 = vunpack.c.l.b16 %v285
    %v970 = vunpack.c.h.b16 %v285
    %v971 = vunpack.c.l.b16 %v286
    %v972 = vunpack.c.h.b16 %v286
    %v973 = vunpack.c.l.b16 %v287
    %v974 = vunpack.c.h.b16 %v287
    %v975 = vunpack.c.l.b16 %v288
    %v976 = vunpack.c.h.b16 %v288
    %v977 = vunpack.c.l.b16 %v289
    %v978 = vunpack.c.h.b16 %v289
    %v979 = vunpack.c.l.b16 %v290
    %v980 = vunpack.c.h.b16 %v290
    %v981 = vunpack.c.l.b16 %v291
    %v982 = vunpack.c.h.b16 %v291
    %v983 = vunpack.c.l.b16 %v292
    %v984 = vunpack.c.h.b16 %v292
    %v985 = vunpack.c.l.b16 %v293
    %v986 = vunpack.c.h.b16 %v293
    %v987 = vunpack.c.l.b16 %v294
    %v988 = vunpack.c.h.b16 %v294
    %v989 = vunpack.c.l.b16 %v295
    %v990 = vunpack.c.h.b16 %v295
    %v991 = vunpack.c.l.b16 %v296
    %v992 = vunpack.c.h.b16 %v296
    %v993 = vunpack.c.l.b16 %v297
    %v994 = vunpack.c.h.b16 %v297
    %v995 = vunpack.c.l.b16 %v298
    %v996 = vunpack.c.h.b16 %v298
    %v997 = vunpack.c.l.b16 %v299
    %v998 = vunpack.c.h.b16 %v299
    %v999 = vunpack.c.l.b16 %v300
    %v1000 = vunpack.c.h.b16 %v300
    %v1001 = vunpack.c.l.b16 %v301
    %v1002 = vunpack.c.h.b16 %v301
    %v1003 = vunpack.c.l.b16 %v302
    %v1004 = vunpack.c.h.b16 %v302
    %v1005 = vunpack.c.l.b16 %v303
    %v1006 = vunpack.c.h.b16 %v303
    %v1007 = vunpack.c.l.b16 %v304
    %v1008 = vunpack.c.h.b16 %v304
    %v1009 = vunpack.c.l.b16 %v305
    %v1010 = vunpack.c.h.b16 %v305
    %v1011 = vunpack.c.l.b16 %v306
    %v1012 = vunpack.c.h.b16 %v306
    %v1013 = vunpack.c.l.b16 %v307
    %v1014 = vunpack.c.h.b16 %v307
    %v1015 = vunpack.c.l.b16 %v308
    %v1016 = vunpack.c.h.b16 %v308
    %v1017 = vunpack.c.l.b16 %v309
    %v1018 = vunpack.c.h.b16 %v309
    %v1019 = vunpack.c.l.b16 %v310
    %v1020 = vunpack.c.h.b16 %v310
    %v1021 = vunpack.c.l.b16 %v311
    %v1022 = vunpack.c.h.b16 %v311
    %v1023 = vunpack.c.l.b16 %v312
    %v1024 = vunpack.c.h.b16 %v312
    %v1025 = vunpack.c.l.b16 %v313
    %v1026 = vunpack.c.h.b16 %v313
    %v1027 = vunpack.c.l.b16 %v314
    %v1028 = vunpack.c.h.b16 %v314
    %v1029 = vunpack.c.l.b16 %v315
    %v1030 = vunpack.c.h.b16 %v315
    %v1031 = vunpack.c.l.b16 %v316
    %v1032 = vunpack.c.h.b16 %v316
    %v1033 = vunpack.c.l.b16 %v317
    %v1034 = vunpack.c.h.b16 %v317
    %v1035 = vunpack.c.l.b16 %v318
    %v1036 = vunpack.c.h.b16 %v318
    %v1037 = vunpack.c.l.b16 %v319
    %v1038 = vunpack.c.h.b16 %v319
    %v1039 = vunpack.c.l.b16 %v320
    %v1040 = vunpack.c.h.b16 %v320
    %v1041 = vunpack.c.l.b16 %v321
    %v1042 = vunpack.c.h.b16 %v321
    %v1043 = vunpack.c.l.b16 %v322
    %v1044 = vunpack.c.h.b16 %v322
    %v1045 = vunpack.c.l.b16 %v323
    %v1046 = vunpack.c.h.b16 %v323
    %v1047 = vunpack.c.l.b16 %v324
    %v1048 = vunpack.c.h.b16 %v324
    %v1049 = vunpack.c.l.b16 %v325
    %v1050 = vunpack.c.h.b16 %v325
    %v1051 = vunpack.c.l.b16 %v326
    %v1052 = vunpack.c.h.b16 %v326
    %v1053 = vunpack.c.l.b16 %v327
    %v1054 = vunpack.c.h.b16 %v327
    %v1055 = vunpack.c.l.b16 %v328
    %v1056 = vunpack.c.h.b16 %v328
    %v1057 = vunpack.c.l.b16 %v329
    %v1058 = vunpack.c.h.b16 %v329
    %v1059 = vunpack.c.l.b16 %v330
    %v1060 = vunpack.c.h.b16 %v330
    %v1061 = vunpack.c.l.b16 %v331
    %v1062 = vunpack.c.h.b16 %v331
    %v1063 = vunpack.c.l.b16 %v332
    %v1064 = vunpack.c.h.b16 %v332
    %v1065 = vunpack.c.l.b16 %v333
    %v1066 = vunpack.c.h.b16 %v333
    %v1067 = vunpack.c.l.b16 %v334
    %v1068 = vunpack.c.h.b16 %v334
    %v1069 = vunpack.c.l.b16 %v335
    %v1070 = vunpack.c.h.b16 %v335
    %v1071 = vunpack.c.l.b16 %v336
    %v1072 = vunpack.c.h.b16 %v336
    %v1073 = vunpack.c.l.b16 %v337
    %v1074 = vunpack.c.h.b16 %v337
    %v1075 = vunpack.c.l.b16 %v338
    %v1076 = vunpack.c.h.b16 %v338
    %v1077 = vunpack.c.l.b16 %v339
    %v1078 = vunpack.c.h.b16 %v339
    %v1079 = vunpack.c.l.b16 %v340
    %v1080 = vunpack.c.h.b16 %v340
    %v1081 = vunpack.c.l.b16 %v341
    %v1082 = vunpack.c.h.b16 %v341
    %v1083 = vunpack.c.l.b16 %v342
    %v1084 = vunpack.c.h.b16 %v342
    %v1085 = vunpack.c.l.b16 %v343
    %v1086 = vunpack.c.h.b16 %v343
    %v1087 = vunpack.c.l.b16 %v344
    %v1088 = vunpack.c.h.b16 %v344
    %v1089 = vunpack.c.l.b16 %v345
    %v1090 = vunpack.c.h.b16 %v345
    %v1091 = vunpack.c.l.b16 %v346
    %v1092 = vunpack.c.h.b16 %v346
    %v1093 = vunpack.c.l.b16 %v347
    %v1094 = vunpack.c.h.b16 %v347
    %v1095 = vunpack.c.l.b16 %v348
    %v1096 = vunpack.c.h.b16 %v348
    %v1097 = vunpack.c.l.b16 %v349
    %v1098 = vunpack.c.h.b16 %v349
    %v1099 = vunpack.c.l.b16 %v350
    %v1100 = vunpack.c.h.b16 %v350
    %v1101 = vunpack.c.l.b16 %v351
    %v1102 = vunpack.c.h.b16 %v351
    %v1103 = vunpack.c.l.b16 %v352
    %v1104 = vunpack.c.h.b16 %v352
    %v1105 = vunpack.c.l.b16 %v353
    %v1106 = vunpack.c.h.b16 %v353
    %v1107 = vunpack.c.l.b16 %v354
    %v1108 = vunpack.c.h.b16 %v354
    %v1109 = vunpack.c.l.b16 %v355
    %v1110 = vunpack.c.h.b16 %v355
    %v1111 = vunpack.c.l.b16 %v356
    %v1112 = vunpack.c.h.b16 %v356
    %v1113 = vunpack.c.l.b16 %v357
    %v1114 = vunpack.c.h.b16 %v357
    %v1115 = vunpack.c.l.b16 %v358
    %v1116 = vunpack.c.h.b16 %v358
    %v1117 = vunpack.c.l.b16 %v359
    %v1118 = vunpack.c.h.b16 %v359
    %v1119 = vunpack.c.l.b16 %v360
    %v1120 = vunpack.c.h.b16 %v360
    %v1121 = vunpack.c.l.b16 %v361
    %v1122 = vunpack.c.h.b16 %v361
    %v1123 = vunpack.c.l.b16 %v362
    %v1124 = vunpack.c.h.b16 %v362
    %v1125 = vunpack.c.l.b16 %v363
    %v1126 = vunpack.c.h.b16 %v363
    %v1127 = vunpack.c.l.b16 %v364
    %v1128 = vunpack.c.h.b16 %v364
    %v1129 = vunpack.c.l.b16 %v365
    %v1130 = vunpack.c.h.b16 %v365
    %v1131 = vunpack.c.l.b16 %v366
    %v1132 = vunpack.c.h.b16 %v366
    %v1133 = vunpack.c.l.b16 %v367
    %v1134 = vunpack.c.h.b16 %v367
    %v1135 = vunpack.c.l.b16 %v368
    %v1136 = vunpack.c.h.b16 %v368
    %v1137 = vunpack.c.l.b16 %v369
    %v1138 = vunpack.c.h.b16 %v369
    %v1139 = vunpack.c.l.b16 %v370
    %v1140 = vunpack.c.h.b16 %v370
    %v1141 = vunpack.c.l.b16 %v371
    %v1142 = vunpack.c.h.b16 %v371
    %v1143 = vunpack.c.l.b16 %v372
    %v1144 = vunpack.c.h.b16 %v372
    %v1145 = vunpack.c.l.b16 %v373
    %v1146 = vunpack.c.h.b16 %v373
    %v1147 = vunpack.c.l.b16 %v374
    %v1148 = vunpack.c.h.b16 %v374
    %v1149 = vunpack.c.l.b16 %v375
    %v1150 = vunpack.c.h.b16 %v375
    %v1151 = vunpack.c.l.b16 %v376
    %v1152 = vunpack.c.h.b16 %v376
    %v1153 = vunpack.c.l.b16 %v377
    %v1154 = vunpack.c.h.b16 %v377
    %v1155 = vunpack.c.l.b16 %v378
    %v1156 = vunpack.c.h.b16 %v378
    %v1157 = vpack.c.b16 %v649, %v645
    %v1158 = vpack.c.b16 %v650, %v646
    %v1159 = vpack.c.b16 %v651, %v647
    %v1160 = vpack.c.b16 %v652, %v648
    %v1161 = vpack.c.b16 %v657, %v653
    %v1162 = vpack.c.b16 %v658, %v654
    %v1163 = vpack.c.b16 %v659, %v655
    %v1164 = vpack.c.b16 %v660, %v656
    %v1165 = vpack.c.b16 %v665, %v661
    %v1166 = vpack.c.b16 %v666, %v662
    %v1167 = vpack.c.b16 %v667, %v663
    %v1168 = vpack.c.b16 %v668, %v664
    %v1169 = vpack.c.b16 %v673, %v669
    %v1170 = vpack.c.b16 %v674, %v670
    %v1171 = vpack.c.b16 %v675, %v671
    %v1172 = vpack.c.b16 %v676, %v672
    %v1173 = vpack.c.b16 %v681, %v677
    %v1174 = vpack.c.b16 %v682, %v678
    %v1175 = vpack.c.b16 %v683, %v679
    %v1176 = vpack.c.b16 %v684, %v680
    %v1177 = vpack.c.b16 %v689, %v685
    %v1178 = vpack.c.b16 %v690, %v686
    %v1179 = vpack.c.b16 %v691, %v687
    %v1180 = vpack.c.b16 %v692, %v688
    %v1181 = vpack.c.b16 %v697, %v693
    %v1182 = vpack.c.b16 %v698, %v694
    %v1183 = vpack.c.b16 %v699, %v695
    %v1184 = vpack.c.b16 %v700, %v696
    %v1185 = vpack.c.b16 %v705, %v701
    %v1186 = vpack.c.b16 %v706, %v702
    %v1187 = vpack.c.b16 %v707, %v703
    %v1188 = vpack.c.b16 %v708, %v704
    %v1189 = vpack.c.b16 %v713, %v709
    %v1190 = vpack.c.b16 %v714, %v710
    %v1191 = vpack.c.b16 %v715, %v711
    %v1192 = vpack.c.b16 %v716, %v712
    %v1193 = vpack.c.b16 %v721, %v717
    %v1194 = vpack.c.b16 %v722, %v718
    %v1195 = vpack.c.b16 %v723, %v719
    %v1196 = vpack.c.b16 %v724, %v720
    %v1197 = vpack.c.b16 %v729, %v725
    %v1198 = vpack.c.b16 %v730, %v726
    %v1199 = vpack.c.b16 %v731, %v727
    %v1200 = vpack.c.b16 %v732, %v728
    %v1201 = vpack.c.b16 %v737, %v733
    %v1202 = vpack.c.b16 %v738, %v734
    %v1203 = vpack.c.b16 %v739, %v735
    %v1204 = vpack.c.b16 %v740, %v736
    %v1205 = vpack.c.b16 %v745, %v741
    %v1206 = vpack.c.b16 %v746, %v742
    %v1207 = vpack.c.b16 %v747, %v743
    %v1208 = vpack.c.b16 %v748, %v744
    %v1209 = vpack.c.b16 %v753, %v749
    %v1210 = vpack.c.b16 %v754, %v750
    %v1211 = vpack.c.b16 %v755, %v751
    %v1212 = vpack.c.b16 %v756, %v752
    %v1213 = vpack.c.b16 %v761, %v757
    %v1214 = vpack.c.b16 %v762, %v758
    %v1215 = vpack.c.b16 %v763, %v759
    %v1216 = vpack.c.b16 %v764, %v760
    %v1217 = vpack.c.b16 %v769, %v765
    %v1218 = vpack.c.b16 %v770, %v766
    %v1219 = vpack.c.b16 %v771, %v767
    %v1220 = vpack.c.b16 %v772, %v768
    %v1221 = vpack.c.b16 %v777, %v773
    %v1222 = vpack.c.b16 %v778, %v774
    %v1223 = vpack.c.b16 %v779, %v775
    %v1224 = vpack.c.b16 %v780, %v776
    %v1225 = vpack.c.b16 %v785, %v781
    %v1226 = vpack.c.b16 %v786, %v782
    %v1227 = vpack.c.b16 %v787, %v783
    %v1228 = vpack.c.b16 %v788, %v784
    %v1229 = vpack.c.b16 %v793, %v789
    %v1230 = vpack.c.b16 %v794, %v790
    %v1231 = vpack.c.b16 %v795, %v791
    %v1232 = vpack.c.b16 %v796, %v792
    %v1233 = vpack.c.b16 %v801, %v797
    %v1234 = vpack.c.b16 %v802, %v798
    %v1235 = vpack.c.b16 %v803, %v799
    %v1236 = vpack.c.b16 %v804, %v800
    %v1237 = vpack.c.b16 %v809, %v805
    %v1238 = vpack.c.b16 %v810, %v806
    %v1239 = vpack.c.b16 %v811, %v807
    %v1240 = vpack.c.b16 %v812, %v808
    %v1241 = vpack.c.b16 %v817, %v813
    %v1242 = vpack.c.b16 %v818, %v814
    %v1243 = vpack.c.b16 %v819, %v815
    %v1244 = vpack.c.b16 %v820, %v816
    %v1245 = vpack.c.b16 %v825, %v821
    %v1246 = vpack.c.b16 %v826, %v822
    %v1247 = vpack.c.b16 %v827, %v823
    %v1248 = vpack.c.b16 %v828, %v824
    %v1249 = vpack.c.b16 %v833, %v829
    %v1250 = vpack.c.b16 %v834, %v830
    %v1251 = vpack.c.b16 %v835, %v831
    %v1252 = vpack.c.b16 %v836, %v832
    %v1253 = vpack.c.b16 %v841, %v837
    %v1254 = vpack.c.b16 %v842, %v838
    %v1255 = vpack.c.b16 %v843, %v839
    %v1256 = vpack.c.b16 %v844, %v840
    %v1257 = vpack.c.b16 %v849, %v845
    %v1258 = vpack.c.b16 %v850, %v846
    %v1259 = vpack.c.b16 %v851, %v847
    %v1260 = vpack.c.b16 %v852, %v848
    %v1261 = vpack.c.b16 %v857, %v853
    %v1262 = vpack.c.b16 %v858, %v854
    %v1263 = vpack.c.b16 %v859, %v855
    %v1264 = vpack.c.b16 %v860, %v856
    %v1265 = vpack.c.b16 %v865, %v861
    %v1266 = vpack.c.b16 %v866, %v862
    %v1267 = vpack.c.b16 %v867, %v863
    %v1268 = vpack.c.b16 %v868, %v864
    %v1269 = vpack.c.b16 %v873, %v869
    %v1270 = vpack.c.b16 %v874, %v870
    %v1271 = vpack.c.b16 %v875, %v871
    %v1272 = vpack.c.b16 %v876, %v872
    %v1273 = vpack.c.b16 %v881, %v877
    %v1274 = vpack.c.b16 %v882, %v878
    %v1275 = vpack.c.b16 %v883, %v879
    %v1276 = vpack.c.b16 %v884, %v880
    %v1277 = vpack.c.b16 %v889, %v885
    %v1278 = vpack.c.b16 %v890, %v886
    %v1279 = vpack.c.b16 %v891, %v887
    %v1280 = vpack.c.b16 %v892, %v888
    %v1281 = vpack.c.b16 %v897, %v893
    %v1282 = vpack.c.b16 %v898, %v894
    %v1283 = vpack.c.b16 %v899, %v895
    %v1284 = vpack.c.b16 %v900, %v896
    %v1285 = vpack.c.b16 %v905, %v901
    %v1286 = vpack.c.b16 %v906, %v902
    %v1287 = vpack.c.b16 %v907, %v903
    %v1288 = vpack.c.b16 %v908, %v904
    %v1289 = vpack.c.b16 %v913, %v909
    %v1290 = vpack.c.b16 %v914, %v910
    %v1291 = vpack.c.b16 %v915, %v911
    %v1292 = vpack.c.b16 %v916, %v912
    %v1293 = vpack.c.b16 %v921, %v917
    %v1294 = vpack.c.b16 %v922, %v918
    %v1295 = vpack.c.b16 %v923, %v919
    %v1296 = vpack.c.b16 %v924, %v920
    %v1297 = vpack.c.b16 %v929, %v925
    %v1298 = vpack.c.b16 %v930, %v926
    %v1299 = vpack.c.b16 %v931, %v927
    %v1300 = vpack.c.b16 %v932, %v928
    %v1301 = vpack.c.b16 %v937, %v933
    %v1302 = vpack.c.b16 %v938, %v934
    %v1303 = vpack.c.b16 %v939, %v935
    %v1304 = vpack.c.b16 %v940, %v936
    %v1305 = vpack.c.b16 %v945, %v941
    %v1306 = vpack.c.b16 %v946, %v942
    %v1307 = vpack.c.b16 %v947, %v943
    %v1308 = vpack.c.b16 %v948, %v944
    %v1309 = vpack.c.b16 %v953, %v949
    %v1310 = vpack.c.b16 %v954, %v950
    %v1311 = vpack.c.b16 %v955, %v951
    %v1312 = vpack.c.b16 %v956, %v952
    %v1313 = vpack.c.b16 %v961, %v957
    %v1314 = vpack.c.b16 %v962, %v958
    %v1315 = vpack.c.b16 %v963, %v959
    %v1316 = vpack.c.b16 %v964, %v960
    %v1317 = vpack.c.b16 %v969, %v965
    %v1318 = vpack.c.b16 %v970, %v966
    %v1319 = vpack.c.b16 %v971, %v967
    %v1320 = vpack.c.b16 %v972, %v968
    %v1321 = vpack.c.b16 %v977, %v973
    %v1322 = vpack.c.b16 %v978, %v974
    %v1323 = vpack.c.b16 %v979, %v975
    %v1324 = vpack.c.b16 %v980, %v976
    %v1325 = vpack.c.b16 %v985, %v981
    %v1326 = vpack.c.b16 %v986, %v982
    %v1327 = vpack.c.b16 %v987, %v983
    %v1328 = vpack.c.b16 %v988, %v984
    %v1329 = vpack.c.b16 %v993, %v989
    %v1330 = vpack.c.b16 %v994, %v990
    %v1331 = vpack.c.b16 %v995, %v991
    %v1332 = vpack.c.b16 %v996, %v992
    %v1333 = vpack.c.b16 %v1001, %v997
    %v1334 = vpack.c.b16 %v1002, %v998
    %v1335 = vpack.c.b16 %v1003, %v999
    %v1336 = vpack.c.b16 %v1004, %v1000
    %v1337 = vpack.c.b16 %v1009, %v1005
    %v1338 = vpack.c.b16 %v1010, %v1006
    %v1339 = vpack.c.b16 %v1011, %v1007
    %v1340 = vpack.c.b16 %v1012, %v1008
    %v1341 = vpack.c.b16 %v1017, %v1013
    %v1342 = vpack.c.b16 %v1018, %v1014
    %v1343 = vpack.c.b16 %v1019, %v1015
    %v1344 = vpack.c.b16 %v1020, %v1016
    %v1345 = vpack.c.b16 %v1025, %v1021
    %v1346 = vpack.c.b16 %v1026, %v1022
    %v1347 = vpack.c.b16 %v1027, %v1023
    %v1348 = vpack.c.b16 %v1028, %v1024
    %v1349 = vpack.c.b16 %v1033, %v1029
    %v1350 = vpack.c.b16 %v1034, %v1030
    %v1351 = vpack.c.b16 %v1035, %v1031
    %v1352 = vpack.c.b16 %v1036, %v1032
    %v1353 = vpack.c.b16 %v1041, %v1037
    %v1354 = vpack.c.b16 %v1042, %v1038
    %v1355 = vpack.c.b16 %v1043, %v1039
    %v1356 = vpack.c.b16 %v1044, %v1040
    %v1357 = vpack.c.b16 %v1049, %v1045
    %v1358 = vpack.c.b16 %v1050, %v1046
    %v1359 = vpack.c.b16 %v1051, %v1047
    %v1360 = vpack.c.b16 %v1052, %v1048
    %v1361 = vpack.c.b16 %v1057, %v1053
    %v1362 = vpack.c.b16 %v1058, %v1054
    %v1363 = vpack.c.b16 %v1059, %v1055
    %v1364 = vpack.c.b16 %v1060, %v1056
    %v1365 = vpack.c.b16 %v1065, %v1061
    %v1366 = vpack.c.b16 %v1066, %v1062
    %v1367 = vpack.c.b16 %v1067, %v1063
    %v1368 = vpack.c.b16 %v1068, %v1064
    %v1369 = vpack.c.b16 %v1073, %v1069
    %v1370 = vpack.c.b16 %v1074, %v1070
    %v1371 = vpack.c.b16 %v1075, %v1071
    %v1372 = vpack.c.b16 %v1076, %v1072
    %v1373 = vpack.c.b16 %v1081, %v1077
    %v1374 = vpack.c.b16 %v1082, %v1078
    %v1375 = vpack.c.b16 %v1083, %v1079
    %v1376 = vpack.c.b16 %v1084, %v1080
    %v1377 = vpack.c.b16 %v1089, %v1085
    %v1378 = vpack.c.b16 %v1090, %v1086
    %v1379 = vpack.c.b16 %v1091, %v1087
    %v1380 = vpack.c.b16 %v1092, %v1088
    %v1381 = vpack.c.b16 %v1097, %v1093
    %v1382 = vpack.c.b16 %v1098, %v1094
    %v1383 = vpack.c.b16 %v1099, %v1095
    %v1384 = vpack.c.b16 %v1100, %v1096
    %v1385 = vpack.c.b16 %v1105, %v1101
    %v1386 = vpack.c.b16 %v1106, %v1102
    %v1387 = vpack.c.b16 %v1107, %v1103
    %v1388 = vpack.c.b16 %v1108, %v1104
    %v1389 = vpack.c.b16 %v1113, %v1109
    %v1390 = vpack.c.b16 %v1114, %v1110
    %v1391 = vpack.c.b16 %v1115, %v1111
    %v1392 = vpack.c.b16 %v1116, %v1112
    %v1393 = vpack.c.b16 %v1121, %v1117
    %v1394 = vpack.c.b16 %v1122, %v1118
    %v1395 = vpack.c.b16 %v1123, %v1119
    %v1396 = vpack.c.b16 %v1124, %v1120
    %v1397 = vpack.c.b16 %v1129, %v1125
    %v1398 = vpack.c.b16 %v1130, %v1126
    %v1399 = vpack.c.b16 %v1131, %v1127
    %v1400 = vpack.c.b16 %v1132, %v1128
    %v1401 = vpack.c.b16 %v1137, %v1133
    %v1402 = vpack.c.b16 %v1138, %v1134
    %v1403 = vpack.c.b16 %v1139, %v1135
    %v1404 = vpack.c.b16 %v1140, %v1136
    %v1405 = vpack.c.b16 %v1145, %v1141
    %v1406 = vpack.c.b16 %v1146, %v1142
    %v1407 = vpack.c.b16 %v1147, %v1143
    %v1408 = vpack.c.b16 %v1148, %v1144
    %v1409 = vpack.c.b16 %v1153, %v1149
    %v1410 = vpack.c.b16 %v1154, %v1150
    %v1411 = vpack.c.b16 %v1155, %v1151
    %v1412 = vpack.c.b16 %v1156, %v1152
    %1669 = vmatpush.bf16.msra.mxu0 %v1185
    %1670 = vmatpush.bf16.msra.mxu0 %v1181
    %1671 = vmatpush.bf16.msra.mxu0 %v1177
    %1672 = vmatpush.bf16.msra.mxu0 %v1173
    %1673 = vmatpush.bf16.msra.mxu0 %v1169
    %1674 = vmatpush.bf16.msra.mxu0 %v1165
    %1675 = vmatpush.bf16.msra.mxu0 %v1161
    %1676 = vmatpush.bf16.msra.mxu0 %v1157
    %1677 = vmatmul.bf16.gmra.mxu0 %v115
    %v1678 = vpop.f32.mrf.mxu0
    %v1679 = vadd.f32 %v381, %v1678
    %v1680 = vpop.f32.mrf.mxu0
    %1681 = vdwg.mxu0
    %1682 = vmatpush.bf16.msra.mxu0 %v1217
    %1683 = vmatpush.bf16.msra.mxu0 %v1213
    %1684 = vmatpush.bf16.msra.mxu0 %v1209
    %1685 = vmatpush.bf16.msra.mxu0 %v1205
    %1686 = vmatpush.bf16.msra.mxu0 %v1201
    %1687 = vmatpush.bf16.msra.mxu0 %v1197
    %1688 = vmatpush.bf16.msra.mxu0 %v1193
    %1689 = vmatpush.bf16.msra.mxu0 %v1189
    %1690 = vmatmul.bf16.gmra.mxu0 %v116
    %v1691 = vpop.f32.mrf.mxu0
    %v1692 = vadd.f32 %v1679, %v1691
    %v1693 = vpop.f32.mrf.mxu0
    %1694 = vdwg.mxu0
    %1695 = vmatpush.bf16.msra.mxu0 %v1249
    %1696 = vmatpush.bf16.msra.mxu0 %v1245
    %1697 = vmatpush.bf16.msra.mxu0 %v1241
    %1698 = vmatpush.bf16.msra.mxu0 %v1237
    %1699 = vmatpush.bf16.msra.mxu0 %v1233
    %1700 = vmatpush.bf16.msra.mxu0 %v1229
    %1701 = vmatpush.bf16.msra.mxu0 %v1225
    %1702 = vmatpush.bf16.msra.mxu0 %v1221
    %1703 = vmatmul.bf16.gmra.mxu0 %v117
    %v1704 = vpop.f32.mrf.mxu0
    %v1705 = vadd.f32 %v1692, %v1704
    %v1706 = vpop.f32.mrf.mxu0
    %1707 = vdwg.mxu0
    %1708 = vmatpush.bf16.msra.mxu0 %v1281
    %1709 = vmatpush.bf16.msra.mxu0 %v1277
    %1710 = vmatpush.bf16.msra.mxu0 %v1273
    %1711 = vmatpush.bf16.msra.mxu0 %v1269
    %1712 = vmatpush.bf16.msra.mxu0 %v1265
    %1713 = vmatpush.bf16.msra.mxu0 %v1261
    %1714 = vmatpush.bf16.msra.mxu0 %v1257
    %1715 = vmatpush.bf16.msra.mxu0 %v1253
    %1716 = vmatmul.bf16.gmra.mxu0 %v118
    %v1717 = vpop.f32.mrf.mxu0
    %v1718 = vadd.f32 %v1705, %v1717
    %v1719 = vpop.f32.mrf.mxu0
    %1720 = vdwg.mxu0
    %1721 = vmatpush.bf16.msra.mxu0 %v1313
    %1722 = vmatpush.bf16.msra.mxu0 %v1309
    %1723 = vmatpush.bf16.msra.mxu0 %v1305
    %1724 = vmatpush.bf16.msra.mxu0 %v1301
    %1725 = vmatpush.bf16.msra.mxu0 %v1297
    %1726 = vmatpush.bf16.msra.mxu0 %v1293
    %1727 = vmatpush.bf16.msra.mxu0 %v1289
    %1728 = vmatpush.bf16.msra.mxu0 %v1285
    %1729 = vmatmul.bf16.gmra.mxu0 %v119
    %v1730 = vpop.f32.mrf.mxu0
    %v1731 = vadd.f32 %v1718, %v1730
    %v1732 = vpop.f32.mrf.mxu0
    %1733 = vdwg.mxu0
    %1734 = vmatpush.bf16.msra.mxu0 %v1345
    %1735 = vmatpush.bf16.msra.mxu0 %v1341
    %1736 = vmatpush.bf16.msra.mxu0 %v1337
    %1737 = vmatpush.bf16.msra.mxu0 %v1333
    %1738 = vmatpush.bf16.msra.mxu0 %v1329
    %1739 = vmatpush.bf16.msra.mxu0 %v1325
    %1740 = vmatpush.bf16.msra.mxu0 %v1321
    %1741 = vmatpush.bf16.msra.mxu0 %v1317
    %1742 = vmatmul.bf16.gmra.mxu0 %v120
    %v1743 = vpop.f32.mrf.mxu0
    %v1744 = vadd.f32 %v1731, %v1743
    %v1745 = vpop.f32.mrf.mxu0
    %1746 = vdwg.mxu0
    %1747 = vmatpush.bf16.msra.mxu0 %v1377
    %1748 = vmatpush.bf16.msra.mxu0 %v1373
    %1749 = vmatpush.bf16.msra.mxu0 %v1369
    %1750 = vmatpush.bf16.msra.mxu0 %v1365
    %1751 = vmatpush.bf16.msra.mxu0 %v1361
    %1752 = vmatpush.bf16.msra.mxu0 %v1357
    %1753 = vmatpush.bf16.msra.mxu0 %v1353
    %1754 = vmatpush.bf16.msra.mxu0 %v1349
    %1755 = vmatmul.bf16.gmra.mxu0 %v121
    %v1756 = vpop.f32.mrf.mxu0
    %v1757 = vadd.f32 %v1744, %v1756
    %v1758 = vpop.f32.mrf.mxu0
    %1759 = vdwg.mxu0
    %1760 = vmatpush.bf16.msra.mxu0 %v1409
    %1761 = vmatpush.bf16.msra.mxu0 %v1405
    %1762 = vmatpush.bf16.msra.mxu0 %v1401
    %1763 = vmatpush.bf16.msra.mxu0 %v1397
    %1764 = vmatpush.bf16.msra.mxu0 %v1393
    %1765 = vmatpush.bf16.msra.mxu0 %v1389
    %1766 = vmatpush.bf16.msra.mxu0 %v1385
    %1767 = vmatpush.bf16.msra.mxu0 %v1381
    %1768 = vmatmul.bf16.gmra.mxu0 %v122
    %v1769 = vpop.f32.mrf.mxu0
    %v1770 = vadd.f32 %v1757, %v1769
    %v1771 = vpop.f32.mrf.mxu0
    %1772 = vdwg.mxu0
    %1773 = vmatpush.bf16.msra.mxu0 %v1186
    %1774 = vmatpush.bf16.msra.mxu0 %v1182
    %1775 = vmatpush.bf16.msra.mxu0 %v1178
    %1776 = vmatpush.bf16.msra.mxu0 %v1174
    %1777 = vmatpush.bf16.msra.mxu0 %v1170
    %1778 = vmatpush.bf16.msra.mxu0 %v1166
    %1779 = vmatpush.bf16.msra.mxu0 %v1162
    %1780 = vmatpush.bf16.msra.mxu0 %v1158
    %1781 = vmatmul.bf16.gmra.mxu0 %v115
    %v1782 = vpop.f32.mrf.mxu0
    %v1783 = vadd.f32 %v382, %v1782
    %v1784 = vpop.f32.mrf.mxu0
    %1785 = vdwg.mxu0
    %1786 = vmatpush.bf16.msra.mxu0 %v1218
    %1787 = vmatpush.bf16.msra.mxu0 %v1214
    %1788 = vmatpush.bf16.msra.mxu0 %v1210
    %1789 = vmatpush.bf16.msra.mxu0 %v1206
    %1790 = vmatpush.bf16.msra.mxu0 %v1202
    %1791 = vmatpush.bf16.msra.mxu0 %v1198
    %1792 = vmatpush.bf16.msra.mxu0 %v1194
    %1793 = vmatpush.bf16.msra.mxu0 %v1190
    %1794 = vmatmul.bf16.gmra.mxu0 %v116
    %v1795 = vpop.f32.mrf.mxu0
    %v1796 = vadd.f32 %v1783, %v1795
    %v1797 = vpop.f32.mrf.mxu0
    %1798 = vdwg.mxu0
    %1799 = vmatpush.bf16.msra.mxu0 %v1250
    %1800 = vmatpush.bf16.msra.mxu0 %v1246
    %1801 = vmatpush.bf16.msra.mxu0 %v1242
    %1802 = vmatpush.bf16.msra.mxu0 %v1238
    %1803 = vmatpush.bf16.msra.mxu0 %v1234
    %1804 = vmatpush.bf16.msra.mxu0 %v1230
    %1805 = vmatpush.bf16.msra.mxu0 %v1226
    %1806 = vmatpush.bf16.msra.mxu0 %v1222
    %1807 = vmatmul.bf16.gmra.mxu0 %v117
    %v1808 = vpop.f32.mrf.mxu0
    %v1809 = vadd.f32 %v1796, %v1808
    %v1810 = vpop.f32.mrf.mxu0
    %1811 = vdwg.mxu0
    %1812 = vmatpush.bf16.msra.mxu0 %v1282
    %1813 = vmatpush.bf16.msra.mxu0 %v1278
    %1814 = vmatpush.bf16.msra.mxu0 %v1274
    %1815 = vmatpush.bf16.msra.mxu0 %v1270
    %1816 = vmatpush.bf16.msra.mxu0 %v1266
    %1817 = vmatpush.bf16.msra.mxu0 %v1262
    %1818 = vmatpush.bf16.msra.mxu0 %v1258
    %1819 = vmatpush.bf16.msra.mxu0 %v1254
    %1820 = vmatmul.bf16.gmra.mxu0 %v118
    %v1821 = vpop.f32.mrf.mxu0
    %v1822 = vadd.f32 %v1809, %v1821
    %v1823 = vpop.f32.mrf.mxu0
    %1824 = vdwg.mxu0
    %1825 = vmatpush.bf16.msra.mxu0 %v1314
    %1826 = vmatpush.bf16.msra.mxu0 %v1310
    %1827 = vmatpush.bf16.msra.mxu0 %v1306
    %1828 = vmatpush.bf16.msra.mxu0 %v1302
    %1829 = vmatpush.bf16.msra.mxu0 %v1298
    %1830 = vmatpush.bf16.msra.mxu0 %v1294
    %1831 = vmatpush.bf16.msra.mxu0 %v1290
    %1832 = vmatpush.bf16.msra.mxu0 %v1286
    %1833 = vmatmul.bf16.gmra.mxu0 %v119
    %v1834 = vpop.f32.mrf.mxu0
    %v1835 = vadd.f32 %v1822, %v1834
    %v1836 = vpop.f32.mrf.mxu0
    %1837 = vdwg.mxu0
    %1838 = vmatpush.bf16.msra.mxu0 %v1346
    %1839 = vmatpush.bf16.msra.mxu0 %v1342
    %1840 = vmatpush.bf16.msra.mxu0 %v1338
    %1841 = vmatpush.bf16.msra.mxu0 %v1334
    %1842 = vmatpush.bf16.msra.mxu0 %v1330
    %1843 = vmatpush.bf16.msra.mxu0 %v1326
    %1844 = vmatpush.bf16.msra.mxu0 %v1322
    %1845 = vmatpush.bf16.msra.mxu0 %v1318
    %1846 = vmatmul.bf16.gmra.mxu0 %v120
    %v1847 = vpop.f32.mrf.mxu0
    %v1848 = vadd.f32 %v1835, %v1847
    %v1849 = vpop.f32.mrf.mxu0
    %1850 = vdwg.mxu0
    %1851 = vmatpush.bf16.msra.mxu0 %v1378
    %1852 = vmatpush.bf16.msra.mxu0 %v1374
    %1853 = vmatpush.bf16.msra.mxu0 %v1370
    %1854 = vmatpush.bf16.msra.mxu0 %v1366
    %1855 = vmatpush.bf16.msra.mxu0 %v1362
    %1856 = vmatpush.bf16.msra.mxu0 %v1358
    %1857 = vmatpush.bf16.msra.mxu0 %v1354
    %1858 = vmatpush.bf16.msra.mxu0 %v1350
    %1859 = vmatmul.bf16.gmra.mxu0 %v121
    %v1860 = vpop.f32.mrf.mxu0
    %v1861 = vadd.f32 %v1848, %v1860
    %v1862 = vpop.f32.mrf.mxu0
    %1863 = vdwg.mxu0
    %1864 = vmatpush.bf16.msra.mxu0 %v1410
    %1865 = vmatpush.bf16.msra.mxu0 %v1406
    %1866 = vmatpush.bf16.msra.mxu0 %v1402
    %1867 = vmatpush.bf16.msra.mxu0 %v1398
    %1868 = vmatpush.bf16.msra.mxu0 %v1394
    %1869 = vmatpush.bf16.msra.mxu0 %v1390
    %1870 = vmatpush.bf16.msra.mxu0 %v1386
    %1871 = vmatpush.bf16.msra.mxu0 %v1382
    %1872 = vmatmul.bf16.gmra.mxu0 %v122
    %v1873 = vpop.f32.mrf.mxu0
    %v1874 = vadd.f32 %v1861, %v1873
    %v1875 = vpop.f32.mrf.mxu0
    %1876 = vdwg.mxu0
    %1877 = vmatpush.bf16.msra.mxu0 %v1187
    %1878 = vmatpush.bf16.msra.mxu0 %v1183
    %1879 = vmatpush.bf16.msra.mxu0 %v1179
    %1880 = vmatpush.bf16.msra.mxu0 %v1175
    %1881 = vmatpush.bf16.msra.mxu0 %v1171
    %1882 = vmatpush.bf16.msra.mxu0 %v1167
    %1883 = vmatpush.bf16.msra.mxu0 %v1163
    %1884 = vmatpush.bf16.msra.mxu0 %v1159
    %1885 = vmatmul.bf16.gmra.mxu0 %v115
    %v1886 = vpop.f32.mrf.mxu0
    %v1887 = vadd.f32 %v383, %v1886
    %v1888 = vpop.f32.mrf.mxu0
    %1889 = vdwg.mxu0
    %1890 = vmatpush.bf16.msra.mxu0 %v1219
    %1891 = vmatpush.bf16.msra.mxu0 %v1215
    %1892 = vmatpush.bf16.msra.mxu0 %v1211
    %1893 = vmatpush.bf16.msra.mxu0 %v1207
    %1894 = vmatpush.bf16.msra.mxu0 %v1203
    %1895 = vmatpush.bf16.msra.mxu0 %v1199
    %1896 = vmatpush.bf16.msra.mxu0 %v1195
    %1897 = vmatpush.bf16.msra.mxu0 %v1191
    %1898 = vmatmul.bf16.gmra.mxu0 %v116
    %v1899 = vpop.f32.mrf.mxu0
    %v1900 = vadd.f32 %v1887, %v1899
    %v1901 = vpop.f32.mrf.mxu0
    %1902 = vdwg.mxu0
    %1903 = vmatpush.bf16.msra.mxu0 %v1251
    %1904 = vmatpush.bf16.msra.mxu0 %v1247
    %1905 = vmatpush.bf16.msra.mxu0 %v1243
    %1906 = vmatpush.bf16.msra.mxu0 %v1239
    %1907 = vmatpush.bf16.msra.mxu0 %v1235
    %1908 = vmatpush.bf16.msra.mxu0 %v1231
    %1909 = vmatpush.bf16.msra.mxu0 %v1227
    %1910 = vmatpush.bf16.msra.mxu0 %v1223
    %1911 = vmatmul.bf16.gmra.mxu0 %v117
    %v1912 = vpop.f32.mrf.mxu0
    %v1913 = vadd.f32 %v1900, %v1912
    %v1914 = vpop.f32.mrf.mxu0
    %1915 = vdwg.mxu0
    %1916 = vmatpush.bf16.msra.mxu0 %v1283
    %1917 = vmatpush.bf16.msra.mxu0 %v1279
    %1918 = vmatpush.bf16.msra.mxu0 %v1275
    %1919 = vmatpush.bf16.msra.mxu0 %v1271
    %1920 = vmatpush.bf16.msra.mxu0 %v1267
    %1921 = vmatpush.bf16.msra.mxu0 %v1263
    %1922 = vmatpush.bf16.msra.mxu0 %v1259
    %1923 = vmatpush.bf16.msra.mxu0 %v1255
    %1924 = vmatmul.bf16.gmra.mxu0 %v118
    %v1925 = vpop.f32.mrf.mxu0
    %v1926 = vadd.f32 %v1913, %v1925
    %v1927 = vpop.f32.mrf.mxu0
    %1928 = vdwg.mxu0
    %1929 = vmatpush.bf16.msra.mxu0 %v1315
    %1930 = vmatpush.bf16.msra.mxu0 %v1311
    %1931 = vmatpush.bf16.msra.mxu0 %v1307
    %1932 = vmatpush.bf16.msra.mxu0 %v1303
    %1933 = vmatpush.bf16.msra.mxu0 %v1299
    %1934 = vmatpush.bf16.msra.mxu0 %v1295
    %1935 = vmatpush.bf16.msra.mxu0 %v1291
    %1936 = vmatpush.bf16.msra.mxu0 %v1287
    %1937 = vmatmul.bf16.gmra.mxu0 %v119
    %v1938 = vpop.f32.mrf.mxu0
    %v1939 = vadd.f32 %v1926, %v1938
    %v1940 = vpop.f32.mrf.mxu0
    %1941 = vdwg.mxu0
    %1942 = vmatpush.bf16.msra.mxu0 %v1347
    %1943 = vmatpush.bf16.msra.mxu0 %v1343
    %1944 = vmatpush.bf16.msra.mxu0 %v1339
    %1945 = vmatpush.bf16.msra.mxu0 %v1335
    %1946 = vmatpush.bf16.msra.mxu0 %v1331
    %1947 = vmatpush.bf16.msra.mxu0 %v1327
    %1948 = vmatpush.bf16.msra.mxu0 %v1323
    %1949 = vmatpush.bf16.msra.mxu0 %v1319
    %1950 = vmatmul.bf16.gmra.mxu0 %v120
    %v1951 = vpop.f32.mrf.mxu0
    %v1952 = vadd.f32 %v1939, %v1951
    %v1953 = vpop.f32.mrf.mxu0
    %1954 = vdwg.mxu0
    %1955 = vmatpush.bf16.msra.mxu0 %v1379
    %1956 = vmatpush.bf16.msra.mxu0 %v1375
    %1957 = vmatpush.bf16.msra.mxu0 %v1371
    %1958 = vmatpush.bf16.msra.mxu0 %v1367
    %1959 = vmatpush.bf16.msra.mxu0 %v1363
    %1960 = vmatpush.bf16.msra.mxu0 %v1359
    %1961 = vmatpush.bf16.msra.mxu0 %v1355
    %1962 = vmatpush.bf16.msra.mxu0 %v1351
    %1963 = vmatmul.bf16.gmra.mxu0 %v121
    %v1964 = vpop.f32.mrf.mxu0
    %v1965 = vadd.f32 %v1952, %v1964
    %v1966 = vpop.f32.mrf.mxu0
    %1967 = vdwg.mxu0
    %1968 = vmatpush.bf16.msra.mxu0 %v1411
    %1969 = vmatpush.bf16.msra.mxu0 %v1407
    %1970 = vmatpush.bf16.msra.mxu0 %v1403
    %1971 = vmatpush.bf16.msra.mxu0 %v1399
    %1972 = vmatpush.bf16.msra.mxu0 %v1395
    %1973 = vmatpush.bf16.msra.mxu0 %v1391
    %1974 = vmatpush.bf16.msra.mxu0 %v1387
    %1975 = vmatpush.bf16.msra.mxu0 %v1383
    %1976 = vmatmul.bf16.gmra.mxu0 %v122
    %v1977 = vpop.f32.mrf.mxu0
    %v1978 = vadd.f32 %v1965, %v1977
    %v1979 = vpop.f32.mrf.mxu0
    %1980 = vdwg.mxu0
    %1981 = vmatpush.bf16.msra.mxu0 %v1188
    %1982 = vmatpush.bf16.msra.mxu0 %v1184
    %1983 = vmatpush.bf16.msra.mxu0 %v1180
    %1984 = vmatpush.bf16.msra.mxu0 %v1176
    %1985 = vmatpush.bf16.msra.mxu0 %v1172
    %1986 = vmatpush.bf16.msra.mxu0 %v1168
    %1987 = vmatpush.bf16.msra.mxu0 %v1164
    %1988 = vmatpush.bf16.msra.mxu0 %v1160
    %1989 = vmatmul.bf16.gmra.mxu0 %v115
    %v1990 = vpop.f32.mrf.mxu0
    %v1991 = vadd.f32 %v384, %v1990
    %v1992 = vpop.f32.mrf.mxu0
    %1993 = vdwg.mxu0
    %1994 = vmatpush.bf16.msra.mxu0 %v1220
    %1995 = vmatpush.bf16.msra.mxu0 %v1216
    %1996 = vmatpush.bf16.msra.mxu0 %v1212
    %1997 = vmatpush.bf16.msra.mxu0 %v1208
    %1998 = vmatpush.bf16.msra.mxu0 %v1204
    %1999 = vmatpush.bf16.msra.mxu0 %v1200
    %2000 = vmatpush.bf16.msra.mxu0 %v1196
    %2001 = vmatpush.bf16.msra.mxu0 %v1192
    %2002 = vmatmul.bf16.gmra.mxu0 %v116
    %v2003 = vpop.f32.mrf.mxu0
    %v2004 = vadd.f32 %v1991, %v2003
    %v2005 = vpop.f32.mrf.mxu0
    %2006 = vdwg.mxu0
    %2007 = vmatpush.bf16.msra.mxu0 %v1252
    %2008 = vmatpush.bf16.msra.mxu0 %v1248
    %2009 = vmatpush.bf16.msra.mxu0 %v1244
    %2010 = vmatpush.bf16.msra.mxu0 %v1240
    %2011 = vmatpush.bf16.msra.mxu0 %v1236
    %2012 = vmatpush.bf16.msra.mxu0 %v1232
    %2013 = vmatpush.bf16.msra.mxu0 %v1228
    %2014 = vmatpush.bf16.msra.mxu0 %v1224
    %2015 = vmatmul.bf16.gmra.mxu0 %v117
    %v2016 = vpop.f32.mrf.mxu0
    %v2017 = vadd.f32 %v2004, %v2016
    %v2018 = vpop.f32.mrf.mxu0
    %2019 = vdwg.mxu0
    %2020 = vmatpush.bf16.msra.mxu0 %v1284
    %2021 = vmatpush.bf16.msra.mxu0 %v1280
    %2022 = vmatpush.bf16.msra.mxu0 %v1276
    %2023 = vmatpush.bf16.msra.mxu0 %v1272
    %2024 = vmatpush.bf16.msra.mxu0 %v1268
    %2025 = vmatpush.bf16.msra.mxu0 %v1264
    %2026 = vmatpush.bf16.msra.mxu0 %v1260
    %2027 = vmatpush.bf16.msra.mxu0 %v1256
    %2028 = vmatmul.bf16.gmra.mxu0 %v118
    %v2029 = vpop.f32.mrf.mxu0
    %v2030 = vadd.f32 %v2017, %v2029
    %v2031 = vpop.f32.mrf.mxu0
    %2032 = vdwg.mxu0
    %2033 = vmatpush.bf16.msra.mxu0 %v1316
    %2034 = vmatpush.bf16.msra.mxu0 %v1312
    %2035 = vmatpush.bf16.msra.mxu0 %v1308
    %2036 = vmatpush.bf16.msra.mxu0 %v1304
    %2037 = vmatpush.bf16.msra.mxu0 %v1300
    %2038 = vmatpush.bf16.msra.mxu0 %v1296
    %2039 = vmatpush.bf16.msra.mxu0 %v1292
    %2040 = vmatpush.bf16.msra.mxu0 %v1288
    %2041 = vmatmul.bf16.gmra.mxu0 %v119
    %v2042 = vpop.f32.mrf.mxu0
    %v2043 = vadd.f32 %v2030, %v2042
    %v2044 = vpop.f32.mrf.mxu0
    %2045 = vdwg.mxu0
    %2046 = vmatpush.bf16.msra.mxu0 %v1348
    %2047 = vmatpush.bf16.msra.mxu0 %v1344
    %2048 = vmatpush.bf16.msra.mxu0 %v1340
    %2049 = vmatpush.bf16.msra.mxu0 %v1336
    %2050 = vmatpush.bf16.msra.mxu0 %v1332
    %2051 = vmatpush.bf16.msra.mxu0 %v1328
    %2052 = vmatpush.bf16.msra.mxu0 %v1324
    %2053 = vmatpush.bf16.msra.mxu0 %v1320
    %2054 = vmatmul.bf16.gmra.mxu0 %v120
    %v2055 = vpop.f32.mrf.mxu0
    %v2056 = vadd.f32 %v2043, %v2055
    %v2057 = vpop.f32.mrf.mxu0
    %2058 = vdwg.mxu0
    %2059 = vmatpush.bf16.msra.mxu0 %v1380
    %2060 = vmatpush.bf16.msra.mxu0 %v1376
    %2061 = vmatpush.bf16.msra.mxu0 %v1372
    %2062 = vmatpush.bf16.msra.mxu0 %v1368
    %2063 = vmatpush.bf16.msra.mxu0 %v1364
    %2064 = vmatpush.bf16.msra.mxu0 %v1360
    %2065 = vmatpush.bf16.msra.mxu0 %v1356
    %2066 = vmatpush.bf16.msra.mxu0 %v1352
    %2067 = vmatmul.bf16.gmra.mxu0 %v121
    %v2068 = vpop.f32.mrf.mxu0
    %v2069 = vadd.f32 %v2056, %v2068
    %v2070 = vpop.f32.mrf.mxu0
    %2071 = vdwg.mxu0
    %2072 = vmatpush.bf16.msra.mxu0 %v1412
    %2073 = vmatpush.bf16.msra.mxu0 %v1408
    %2074 = vmatpush.bf16.msra.mxu0 %v1404
    %2075 = vmatpush.bf16.msra.mxu0 %v1400
    %2076 = vmatpush.bf16.msra.mxu0 %v1396
    %2077 = vmatpush.bf16.msra.mxu0 %v1392
    %2078 = vmatpush.bf16.msra.mxu0 %v1388
    %2079 = vmatpush.bf16.msra.mxu0 %v1384
    %2080 = vmatmul.bf16.gmra.mxu0 %v122
    %v2081 = vpop.f32.mrf.mxu0
    %v2082 = vadd.f32 %v2069, %v2081
    %v2083 = vpop.f32.mrf.mxu0
    %2084 = vdwg.mxu0
    %v2085 = vmax.f32 %v1770, 0.0
    %v2086 = vmax.f32 %v1874, 0.0
    %v2087 = vmax.f32 %v1978, 0.0
    %v2088 = vmax.f32 %v2082, 0.0
    %v2089 = vpack.c.bf16 %v2085, %v2085
    %v2090 = vpack.c.bf16 %v2086, %v2086
    %v2091 = vpack.c.bf16 %v2087, %v2087
    %v2092 = vpack.c.bf16 %v2088, %v2088
    %v2093 = vld [vmem:[#allocation9] sm:$0xff]
    %v2094 = vld [vmem:[#allocation9 + $0x8] sm:$0xff]
    %v2095 = vld [vmem:[#allocation9 + $0x10] sm:$0xff]
    %v2096 = vld [vmem:[#allocation9 + $0x18] sm:$0xff]
    %v2097 = vld [vmem:[#allocation9 + $0x20] sm:$0xff]
    %v2098 = vld [vmem:[#allocation9 + $0x28] sm:$0xff]
    %v2099 = vld [vmem:[#allocation9 + $0x30] sm:$0xff]
    %v2100 = vld [vmem:[#allocation9 + $0x38] sm:$0xff]
    %v2101 = vld [vmem:[#allocation9 + $0x40] sm:$0xff]
    %v2102 = vld [vmem:[#allocation9 + $0x48] sm:$0xff]
    %v2103 = vld [vmem:[#allocation9 + $0x50] sm:$0xff]
    %v2104 = vld [vmem:[#allocation9 + $0x58] sm:$0xff]
    %v2105 = vld [vmem:[#allocation9 + $0x60] sm:$0xff]
    %v2106 = vld [vmem:[#allocation9 + $0x68] sm:$0xff]
    %v2107 = vld [vmem:[#allocation9 + $0x70] sm:$0xff]
    %v2108 = vld [vmem:[#allocation9 + $0x78] sm:$0xff]
    %v2109 = vld [vmem:[#allocation9 + $0x80] sm:$0xff]
    %v2110 = vld [vmem:[#allocation9 + $0x88] sm:$0xff]
    %v2111 = vld [vmem:[#allocation9 + $0x90] sm:$0xff]
    %v2112 = vld [vmem:[#allocation9 + $0x98] sm:$0xff]
    %v2113 = vld [vmem:[#allocation9 + $0xa0] sm:$0xff]
    %v2114 = vld [vmem:[#allocation9 + $0xa8] sm:$0xff]
    %v2115 = vld [vmem:[#allocation9 + $0xb0] sm:$0xff]
    %v2116 = vld [vmem:[#allocation9 + $0xb8] sm:$0xff]
    %v2117 = vld [vmem:[#allocation9 + $0xc0] sm:$0xff]
    %v2118 = vld [vmem:[#allocation9 + $0xc8] sm:$0xff]
    %v2119 = vld [vmem:[#allocation9 + $0xd0] sm:$0xff]
    %v2120 = vld [vmem:[#allocation9 + $0xd8] sm:$0xff]
    %v2121 = vld [vmem:[#allocation9 + $0xe0] sm:$0xff]
    %v2122 = vld [vmem:[#allocation9 + $0xe8] sm:$0xff]
    %v2123 = vld [vmem:[#allocation9 + $0xf0] sm:$0xff]
    %v2124 = vld [vmem:[#allocation9 + $0xf8] sm:$0xff]
    %v2125 = vld [vmem:[#allocation9 + $0x100] sm:$0xff]
    %v2126 = vld [vmem:[#allocation9 + $0x108] sm:$0xff]
    %v2127 = vld [vmem:[#allocation9 + $0x110] sm:$0xff]
    %v2128 = vld [vmem:[#allocation9 + $0x118] sm:$0xff]
    %v2129 = vld [vmem:[#allocation9 + $0x120] sm:$0xff]
    %v2130 = vld [vmem:[#allocation9 + $0x128] sm:$0xff]
    %v2131 = vld [vmem:[#allocation9 + $0x130] sm:$0xff]
    %v2132 = vld [vmem:[#allocation9 + $0x138] sm:$0xff]
    %v2133 = vld [vmem:[#allocation9 + $0x140] sm:$0xff]
    %v2134 = vld [vmem:[#allocation9 + $0x148] sm:$0xff]
    %v2135 = vld [vmem:[#allocation9 + $0x150] sm:$0xff]
    %v2136 = vld [vmem:[#allocation9 + $0x158] sm:$0xff]
    %v2137 = vld [vmem:[#allocation9 + $0x160] sm:$0xff]
    %v2138 = vld [vmem:[#allocation9 + $0x168] sm:$0xff]
    %v2139 = vld [vmem:[#allocation9 + $0x170] sm:$0xff]
    %v2140 = vld [vmem:[#allocation9 + $0x178] sm:$0xff]
    %v2141 = vld [vmem:[#allocation9 + $0x180] sm:$0xff]
    %v2142 = vld [vmem:[#allocation9 + $0x188] sm:$0xff]
    %v2143 = vld [vmem:[#allocation9 + $0x190] sm:$0xff]
    %v2144 = vld [vmem:[#allocation9 + $0x198] sm:$0xff]
    %v2145 = vld [vmem:[#allocation9 + $0x1a0] sm:$0xff]
    %v2146 = vld [vmem:[#allocation9 + $0x1a8] sm:$0xff]
    %v2147 = vld [vmem:[#allocation9 + $0x1b0] sm:$0xff]
    %v2148 = vld [vmem:[#allocation9 + $0x1b8] sm:$0xff]
    %v2149 = vld [vmem:[#allocation9 + $0x1c0] sm:$0xff]
    %v2150 = vld [vmem:[#allocation9 + $0x1c8] sm:$0xff]
    %v2151 = vld [vmem:[#allocation9 + $0x1d0] sm:$0xff]
    %v2152 = vld [vmem:[#allocation9 + $0x1d8] sm:$0xff]
    %v2153 = vld [vmem:[#allocation9 + $0x1e0] sm:$0xff]
    %v2154 = vld [vmem:[#allocation9 + $0x1e8] sm:$0xff]
    %v2155 = vld [vmem:[#allocation9 + $0x1f0] sm:$0xff]
    %v2156 = vld [vmem:[#allocation9 + $0x1f8] sm:$0xff]
    %v2157 = vld [vmem:[#allocation9 + $0x200] sm:$0xff]
    %v2158 = vld [vmem:[#allocation9 + $0x208] sm:$0xff]
    %v2159 = vld [vmem:[#allocation9 + $0x210] sm:$0xff]
    %v2160 = vld [vmem:[#allocation9 + $0x218] sm:$0xff]
    %v2161 = vld [vmem:[#allocation9 + $0x220] sm:$0xff]
    %v2162 = vld [vmem:[#allocation9 + $0x228] sm:$0xff]
    %v2163 = vld [vmem:[#allocation9 + $0x230] sm:$0xff]
    %v2164 = vld [vmem:[#allocation9 + $0x238] sm:$0xff]
    %v2165 = vld [vmem:[#allocation9 + $0x240] sm:$0xff]
    %v2166 = vld [vmem:[#allocation9 + $0x248] sm:$0xff]
    %v2167 = vld [vmem:[#allocation9 + $0x250] sm:$0xff]
    %v2168 = vld [vmem:[#allocation9 + $0x258] sm:$0xff]
    %v2169 = vld [vmem:[#allocation9 + $0x260] sm:$0xff]
    %v2170 = vld [vmem:[#allocation9 + $0x268] sm:$0xff]
    %v2171 = vld [vmem:[#allocation9 + $0x270] sm:$0xff]
    %v2172 = vld [vmem:[#allocation9 + $0x278] sm:$0xff]
    %v2173 = vld [vmem:[#allocation9 + $0x280] sm:$0xff]
    %v2174 = vld [vmem:[#allocation9 + $0x288] sm:$0xff]
    %v2175 = vld [vmem:[#allocation9 + $0x290] sm:$0xff]
    %v2176 = vld [vmem:[#allocation9 + $0x298] sm:$0xff]
    %v2177 = vld [vmem:[#allocation9 + $0x2a0] sm:$0xff]
    %v2178 = vld [vmem:[#allocation9 + $0x2a8] sm:$0xff]
    %v2179 = vld [vmem:[#allocation9 + $0x2b0] sm:$0xff]
    %v2180 = vld [vmem:[#allocation9 + $0x2b8] sm:$0xff]
    %v2181 = vld [vmem:[#allocation9 + $0x2c0] sm:$0xff]
    %v2182 = vld [vmem:[#allocation9 + $0x2c8] sm:$0xff]
    %v2183 = vld [vmem:[#allocation9 + $0x2d0] sm:$0xff]
    %v2184 = vld [vmem:[#allocation9 + $0x2d8] sm:$0xff]
    %v2185 = vld [vmem:[#allocation9 + $0x2e0] sm:$0xff]
    %v2186 = vld [vmem:[#allocation9 + $0x2e8] sm:$0xff]
    %v2187 = vld [vmem:[#allocation9 + $0x2f0] sm:$0xff]
    %v2188 = vld [vmem:[#allocation9 + $0x2f8] sm:$0xff]
    %v2189 = vld [vmem:[#allocation9 + $0x300] sm:$0xff]
    %v2190 = vld [vmem:[#allocation9 + $0x308] sm:$0xff]
    %v2191 = vld [vmem:[#allocation9 + $0x310] sm:$0xff]
    %v2192 = vld [vmem:[#allocation9 + $0x318] sm:$0xff]
    %v2193 = vld [vmem:[#allocation9 + $0x320] sm:$0xff]
    %v2194 = vld [vmem:[#allocation9 + $0x328] sm:$0xff]
    %v2195 = vld [vmem:[#allocation9 + $0x330] sm:$0xff]
    %v2196 = vld [vmem:[#allocation9 + $0x338] sm:$0xff]
    %v2197 = vld [vmem:[#allocation9 + $0x340] sm:$0xff]
    %v2198 = vld [vmem:[#allocation9 + $0x348] sm:$0xff]
    %v2199 = vld [vmem:[#allocation9 + $0x350] sm:$0xff]
    %v2200 = vld [vmem:[#allocation9 + $0x358] sm:$0xff]
    %v2201 = vld [vmem:[#allocation9 + $0x360] sm:$0xff]
    %v2202 = vld [vmem:[#allocation9 + $0x368] sm:$0xff]
    %v2203 = vld [vmem:[#allocation9 + $0x370] sm:$0xff]
    %v2204 = vld [vmem:[#allocation9 + $0x378] sm:$0xff]
    %v2205 = vld [vmem:[#allocation9 + $0x380] sm:$0xff]
    %v2206 = vld [vmem:[#allocation9 + $0x388] sm:$0xff]
    %v2207 = vld [vmem:[#allocation9 + $0x390] sm:$0xff]
    %v2208 = vld [vmem:[#allocation9 + $0x398] sm:$0xff]
    %v2209 = vld [vmem:[#allocation9 + $0x3a0] sm:$0xff]
    %v2210 = vld [vmem:[#allocation9 + $0x3a8] sm:$0xff]
    %v2211 = vld [vmem:[#allocation9 + $0x3b0] sm:$0xff]
    %v2212 = vld [vmem:[#allocation9 + $0x3b8] sm:$0xff]
    %v2213 = vld [vmem:[#allocation9 + $0x3c0] sm:$0xff]
    %v2214 = vld [vmem:[#allocation9 + $0x3c8] sm:$0xff]
    %v2215 = vld [vmem:[#allocation9 + $0x3d0] sm:$0xff]
    %v2216 = vld [vmem:[#allocation9 + $0x3d8] sm:$0xff]
    %v2217 = vld [vmem:[#allocation9 + $0x3e0] sm:$0xff]
    %v2218 = vld [vmem:[#allocation9 + $0x3e8] sm:$0xff]
    %v2219 = vld [vmem:[#allocation9 + $0x3f0] sm:$0xff]
    %v2220 = vld [vmem:[#allocation9 + $0x3f8] sm:$0xff]
    %v2221 = vld [vmem:[%s4] sm:$0xf]
    %v2223 = vperm.slane %v2221, 0
    %v2224 = vperm.slane %v2221, 1
    %v2225 = vperm.slane %v2221, 2
    %v2226 = vperm.slane %v2221, 3
    %v2359 = vunpack.c.l.b16 %v2093
    %v2360 = vunpack.c.h.b16 %v2093
    %v2361 = vunpack.c.l.b16 %v2094
    %v2362 = vunpack.c.h.b16 %v2094
    %v2363 = vunpack.c.l.b16 %v2095
    %v2364 = vunpack.c.h.b16 %v2095
    %v2365 = vunpack.c.l.b16 %v2096
    %v2366 = vunpack.c.h.b16 %v2096
    %v2367 = vunpack.c.l.b16 %v2097
    %v2368 = vunpack.c.h.b16 %v2097
    %v2369 = vunpack.c.l.b16 %v2098
    %v2370 = vunpack.c.h.b16 %v2098
    %v2371 = vunpack.c.l.b16 %v2099
    %v2372 = vunpack.c.h.b16 %v2099
    %v2373 = vunpack.c.l.b16 %v2100
    %v2374 = vunpack.c.h.b16 %v2100
    %v2375 = vunpack.c.l.b16 %v2101
    %v2376 = vunpack.c.h.b16 %v2101
    %v2377 = vunpack.c.l.b16 %v2102
    %v2378 = vunpack.c.h.b16 %v2102
    %v2379 = vunpack.c.l.b16 %v2103
    %v2380 = vunpack.c.h.b16 %v2103
    %v2381 = vunpack.c.l.b16 %v2104
    %v2382 = vunpack.c.h.b16 %v2104
    %v2383 = vunpack.c.l.b16 %v2105
    %v2384 = vunpack.c.h.b16 %v2105
    %v2385 = vunpack.c.l.b16 %v2106
    %v2386 = vunpack.c.h.b16 %v2106
    %v2387 = vunpack.c.l.b16 %v2107
    %v2388 = vunpack.c.h.b16 %v2107
    %v2389 = vunpack.c.l.b16 %v2108
    %v2390 = vunpack.c.h.b16 %v2108
    %v2391 = vunpack.c.l.b16 %v2109
    %v2392 = vunpack.c.h.b16 %v2109
    %v2393 = vunpack.c.l.b16 %v2110
    %v2394 = vunpack.c.h.b16 %v2110
    %v2395 = vunpack.c.l.b16 %v2111
    %v2396 = vunpack.c.h.b16 %v2111
    %v2397 = vunpack.c.l.b16 %v2112
    %v2398 = vunpack.c.h.b16 %v2112
    %v2399 = vunpack.c.l.b16 %v2113
    %v2400 = vunpack.c.h.b16 %v2113
    %v2401 = vunpack.c.l.b16 %v2114
    %v2402 = vunpack.c.h.b16 %v2114
    %v2403 = vunpack.c.l.b16 %v2115
    %v2404 = vunpack.c.h.b16 %v2115
    %v2405 = vunpack.c.l.b16 %v2116
    %v2406 = vunpack.c.h.b16 %v2116
    %v2407 = vunpack.c.l.b16 %v2117
    %v2408 = vunpack.c.h.b16 %v2117
    %v2409 = vunpack.c.l.b16 %v2118
    %v2410 = vunpack.c.h.b16 %v2118
    %v2411 = vunpack.c.l.b16 %v2119
    %v2412 = vunpack.c.h.b16 %v2119
    %v2413 = vunpack.c.l.b16 %v2120
    %v2414 = vunpack.c.h.b16 %v2120
    %v2415 = vunpack.c.l.b16 %v2121
    %v2416 = vunpack.c.h.b16 %v2121
    %v2417 = vunpack.c.l.b16 %v2122
    %v2418 = vunpack.c.h.b16 %v2122
    %v2419 = vunpack.c.l.b16 %v2123
    %v2420 = vunpack.c.h.b16 %v2123
    %v2421 = vunpack.c.l.b16 %v2124
    %v2422 = vunpack.c.h.b16 %v2124
    %v2423 = vunpack.c.l.b16 %v2125
    %v2424 = vunpack.c.h.b16 %v2125
    %v2425 = vunpack.c.l.b16 %v2126
    %v2426 = vunpack.c.h.b16 %v2126
    %v2427 = vunpack.c.l.b16 %v2127
    %v2428 = vunpack.c.h.b16 %v2127
    %v2429 = vunpack.c.l.b16 %v2128
    %v2430 = vunpack.c.h.b16 %v2128
    %v2431 = vunpack.c.l.b16 %v2129
    %v2432 = vunpack.c.h.b16 %v2129
    %v2433 = vunpack.c.l.b16 %v2130
    %v2434 = vunpack.c.h.b16 %v2130
    %v2435 = vunpack.c.l.b16 %v2131
    %v2436 = vunpack.c.h.b16 %v2131
    %v2437 = vunpack.c.l.b16 %v2132
    %v2438 = vunpack.c.h.b16 %v2132
    %v2439 = vunpack.c.l.b16 %v2133
    %v2440 = vunpack.c.h.b16 %v2133
    %v2441 = vunpack.c.l.b16 %v2134
    %v2442 = vunpack.c.h.b16 %v2134
    %v2443 = vunpack.c.l.b16 %v2135
    %v2444 = vunpack.c.h.b16 %v2135
    %v2445 = vunpack.c.l.b16 %v2136
    %v2446 = vunpack.c.h.b16 %v2136
    %v2447 = vunpack.c.l.b16 %v2137
    %v2448 = vunpack.c.h.b16 %v2137
    %v2449 = vunpack.c.l.b16 %v2138
    %v2450 = vunpack.c.h.b16 %v2138
    %v2451 = vunpack.c.l.b16 %v2139
    %v2452 = vunpack.c.h.b16 %v2139
    %v2453 = vunpack.c.l.b16 %v2140
    %v2454 = vunpack.c.h.b16 %v2140
    %v2455 = vunpack.c.l.b16 %v2141
    %v2456 = vunpack.c.h.b16 %v2141
    %v2457 = vunpack.c.l.b16 %v2142
    %v2458 = vunpack.c.h.b16 %v2142
    %v2459 = vunpack.c.l.b16 %v2143
    %v2460 = vunpack.c.h.b16 %v2143
    %v2461 = vunpack.c.l.b16 %v2144
    %v2462 = vunpack.c.h.b16 %v2144
    %v2463 = vunpack.c.l.b16 %v2145
    %v2464 = vunpack.c.h.b16 %v2145
    %v2465 = vunpack.c.l.b16 %v2146
    %v2466 = vunpack.c.h.b16 %v2146
    %v2467 = vunpack.c.l.b16 %v2147
    %v2468 = vunpack.c.h.b16 %v2147
    %v2469 = vunpack.c.l.b16 %v2148
    %v2470 = vunpack.c.h.b16 %v2148
    %v2471 = vunpack.c.l.b16 %v2149
    %v2472 = vunpack.c.h.b16 %v2149
    %v2473 = vunpack.c.l.b16 %v2150
    %v2474 = vunpack.c.h.b16 %v2150
    %v2475 = vunpack.c.l.b16 %v2151
    %v2476 = vunpack.c.h.b16 %v2151
    %v2477 = vunpack.c.l.b16 %v2152
    %v2478 = vunpack.c.h.b16 %v2152
    %v2479 = vunpack.c.l.b16 %v2153
    %v2480 = vunpack.c.h.b16 %v2153
    %v2481 = vunpack.c.l.b16 %v2154
    %v2482 = vunpack.c.h.b16 %v2154
    %v2483 = vunpack.c.l.b16 %v2155
    %v2484 = vunpack.c.h.b16 %v2155
    %v2485 = vunpack.c.l.b16 %v2156
    %v2486 = vunpack.c.h.b16 %v2156
    %v2487 = vunpack.c.l.b16 %v2157
    %v2488 = vunpack.c.h.b16 %v2157
    %v2489 = vunpack.c.l.b16 %v2158
    %v2490 = vunpack.c.h.b16 %v2158
    %v2491 = vunpack.c.l.b16 %v2159
    %v2492 = vunpack.c.h.b16 %v2159
    %v2493 = vunpack.c.l.b16 %v2160
    %v2494 = vunpack.c.h.b16 %v2160
    %v2495 = vunpack.c.l.b16 %v2161
    %v2496 = vunpack.c.h.b16 %v2161
    %v2497 = vunpack.c.l.b16 %v2162
    %v2498 = vunpack.c.h.b16 %v2162
    %v2499 = vunpack.c.l.b16 %v2163
    %v2500 = vunpack.c.h.b16 %v2163
    %v2501 = vunpack.c.l.b16 %v2164
    %v2502 = vunpack.c.h.b16 %v2164
    %v2503 = vunpack.c.l.b16 %v2165
    %v2504 = vunpack.c.h.b16 %v2165
    %v2505 = vunpack.c.l.b16 %v2166
    %v2506 = vunpack.c.h.b16 %v2166
    %v2507 = vunpack.c.l.b16 %v2167
    %v2508 = vunpack.c.h.b16 %v2167
    %v2509 = vunpack.c.l.b16 %v2168
    %v2510 = vunpack.c.h.b16 %v2168
    %v2511 = vunpack.c.l.b16 %v2169
    %v2512 = vunpack.c.h.b16 %v2169
    %v2513 = vunpack.c.l.b16 %v2170
    %v2514 = vunpack.c.h.b16 %v2170
    %v2515 = vunpack.c.l.b16 %v2171
    %v2516 = vunpack.c.h.b16 %v2171
    %v2517 = vunpack.c.l.b16 %v2172
    %v2518 = vunpack.c.h.b16 %v2172
    %v2519 = vunpack.c.l.b16 %v2173
    %v2520 = vunpack.c.h.b16 %v2173
    %v2521 = vunpack.c.l.b16 %v2174
    %v2522 = vunpack.c.h.b16 %v2174
    %v2523 = vunpack.c.l.b16 %v2175
    %v2524 = vunpack.c.h.b16 %v2175
    %v2525 = vunpack.c.l.b16 %v2176
    %v2526 = vunpack.c.h.b16 %v2176
    %v2527 = vunpack.c.l.b16 %v2177
    %v2528 = vunpack.c.h.b16 %v2177
    %v2529 = vunpack.c.l.b16 %v2178
    %v2530 = vunpack.c.h.b16 %v2178
    %v2531 = vunpack.c.l.b16 %v2179
    %v2532 = vunpack.c.h.b16 %v2179
    %v2533 = vunpack.c.l.b16 %v2180
    %v2534 = vunpack.c.h.b16 %v2180
    %v2535 = vunpack.c.l.b16 %v2181
    %v2536 = vunpack.c.h.b16 %v2181
    %v2537 = vunpack.c.l.b16 %v2182
    %v2538 = vunpack.c.h.b16 %v2182
    %v2539 = vunpack.c.l.b16 %v2183
    %v2540 = vunpack.c.h.b16 %v2183
    %v2541 = vunpack.c.l.b16 %v2184
    %v2542 = vunpack.c.h.b16 %v2184
    %v2543 = vunpack.c.l.b16 %v2185
    %v2544 = vunpack.c.h.b16 %v2185
    %v2545 = vunpack.c.l.b16 %v2186
    %v2546 = vunpack.c.h.b16 %v2186
    %v2547 = vunpack.c.l.b16 %v2187
    %v2548 = vunpack.c.h.b16 %v2187
    %v2549 = vunpack.c.l.b16 %v2188
    %v2550 = vunpack.c.h.b16 %v2188
    %v2551 = vunpack.c.l.b16 %v2189
    %v2552 = vunpack.c.h.b16 %v2189
    %v2553 = vunpack.c.l.b16 %v2190
    %v2554 = vunpack.c.h.b16 %v2190
    %v2555 = vunpack.c.l.b16 %v2191
    %v2556 = vunpack.c.h.b16 %v2191
    %v2557 = vunpack.c.l.b16 %v2192
    %v2558 = vunpack.c.h.b16 %v2192
    %v2559 = vunpack.c.l.b16 %v2193
    %v2560 = vunpack.c.h.b16 %v2193
    %v2561 = vunpack.c.l.b16 %v2194
    %v2562 = vunpack.c.h.b16 %v2194
    %v2563 = vunpack.c.l.b16 %v2195
    %v2564 = vunpack.c.h.b16 %v2195
    %v2565 = vunpack.c.l.b16 %v2196
    %v2566 = vunpack.c.h.b16 %v2196
    %v2567 = vunpack.c.l.b16 %v2197
    %v2568 = vunpack.c.h.b16 %v2197
    %v2569 = vunpack.c.l.b16 %v2198
    %v2570 = vunpack.c.h.b16 %v2198
    %v2571 = vunpack.c.l.b16 %v2199
    %v2572 = vunpack.c.h.b16 %v2199
    %v2573 = vunpack.c.l.b16 %v2200
    %v2574 = vunpack.c.h.b16 %v2200
    %v2575 = vunpack.c.l.b16 %v2201
    %v2576 = vunpack.c.h.b16 %v2201
    %v2577 = vunpack.c.l.b16 %v2202
    %v2578 = vunpack.c.h.b16 %v2202
    %v2579 = vunpack.c.l.b16 %v2203
    %v2580 = vunpack.c.h.b16 %v2203
    %v2581 = vunpack.c.l.b16 %v2204
    %v2582 = vunpack.c.h.b16 %v2204
    %v2583 = vunpack.c.l.b16 %v2205
    %v2584 = vunpack.c.h.b16 %v2205
    %v2585 = vunpack.c.l.b16 %v2206
    %v2586 = vunpack.c.h.b16 %v2206
    %v2587 = vunpack.c.l.b16 %v2207
    %v2588 = vunpack.c.h.b16 %v2207
    %v2589 = vunpack.c.l.b16 %v2208
    %v2590 = vunpack.c.h.b16 %v2208
    %v2591 = vunpack.c.l.b16 %v2209
    %v2592 = vunpack.c.h.b16 %v2209
    %v2593 = vunpack.c.l.b16 %v2210
    %v2594 = vunpack.c.h.b16 %v2210
    %v2595 = vunpack.c.l.b16 %v2211
    %v2596 = vunpack.c.h.b16 %v2211
    %v2597 = vunpack.c.l.b16 %v2212
    %v2598 = vunpack.c.h.b16 %v2212
    %v2599 = vunpack.c.l.b16 %v2213
    %v2600 = vunpack.c.h.b16 %v2213
    %v2601 = vunpack.c.l.b16 %v2214
    %v2602 = vunpack.c.h.b16 %v2214
    %v2603 = vunpack.c.l.b16 %v2215
    %v2604 = vunpack.c.h.b16 %v2215
    %v2605 = vunpack.c.l.b16 %v2216
    %v2606 = vunpack.c.h.b16 %v2216
    %v2607 = vunpack.c.l.b16 %v2217
    %v2608 = vunpack.c.h.b16 %v2217
    %v2609 = vunpack.c.l.b16 %v2218
    %v2610 = vunpack.c.h.b16 %v2218
    %v2611 = vunpack.c.l.b16 %v2219
    %v2612 = vunpack.c.h.b16 %v2219
    %v2613 = vunpack.c.l.b16 %v2220
    %v2614 = vunpack.c.h.b16 %v2220
    %v2615 = vpack.c.b16 %v2363, %v2359
    %v2616 = vpack.c.b16 %v2364, %v2360
    %v2617 = vpack.c.b16 %v2365, %v2361
    %v2618 = vpack.c.b16 %v2366, %v2362
    %v2619 = vpack.c.b16 %v2371, %v2367
    %v2620 = vpack.c.b16 %v2372, %v2368
    %v2621 = vpack.c.b16 %v2373, %v2369
    %v2622 = vpack.c.b16 %v2374, %v2370
    %v2623 = vpack.c.b16 %v2379, %v2375
    %v2624 = vpack.c.b16 %v2380, %v2376
    %v2625 = vpack.c.b16 %v2381, %v2377
    %v2626 = vpack.c.b16 %v2382, %v2378
    %v2627 = vpack.c.b16 %v2387, %v2383
    %v2628 = vpack.c.b16 %v2388, %v2384
    %v2629 = vpack.c.b16 %v2389, %v2385
    %v2630 = vpack.c.b16 %v2390, %v2386
    %v2631 = vpack.c.b16 %v2395, %v2391
    %v2632 = vpack.c.b16 %v2396, %v2392
    %v2633 = vpack.c.b16 %v2397, %v2393
    %v2634 = vpack.c.b16 %v2398, %v2394
    %v2635 = vpack.c.b16 %v2403, %v2399
    %v2636 = vpack.c.b16 %v2404, %v2400
    %v2637 = vpack.c.b16 %v2405, %v2401
    %v2638 = vpack.c.b16 %v2406, %v2402
    %v2639 = vpack.c.b16 %v2411, %v2407
    %v2640 = vpack.c.b16 %v2412, %v2408
    %v2641 = vpack.c.b16 %v2413, %v2409
    %v2642 = vpack.c.b16 %v2414, %v2410
    %v2643 = vpack.c.b16 %v2419, %v2415
    %v2644 = vpack.c.b16 %v2420, %v2416
    %v2645 = vpack.c.b16 %v2421, %v2417
    %v2646 = vpack.c.b16 %v2422, %v2418
    %v2647 = vpack.c.b16 %v2427, %v2423
    %v2648 = vpack.c.b16 %v2428, %v2424
    %v2649 = vpack.c.b16 %v2429, %v2425
    %v2650 = vpack.c.b16 %v2430, %v2426
    %v2651 = vpack.c.b16 %v2435, %v2431
    %v2652 = vpack.c.b16 %v2436, %v2432
    %v2653 = vpack.c.b16 %v2437, %v2433
    %v2654 = vpack.c.b16 %v2438, %v2434
    %v2655 = vpack.c.b16 %v2443, %v2439
    %v2656 = vpack.c.b16 %v2444, %v2440
    %v2657 = vpack.c.b16 %v2445, %v2441
    %v2658 = vpack.c.b16 %v2446, %v2442
    %v2659 = vpack.c.b16 %v2451, %v2447
    %v2660 = vpack.c.b16 %v2452, %v2448
    %v2661 = vpack.c.b16 %v2453, %v2449
    %v2662 = vpack.c.b16 %v2454, %v2450
    %v2663 = vpack.c.b16 %v2459, %v2455
    %v2664 = vpack.c.b16 %v2460, %v2456
    %v2665 = vpack.c.b16 %v2461, %v2457
    %v2666 = vpack.c.b16 %v2462, %v2458
    %v2667 = vpack.c.b16 %v2467, %v2463
    %v2668 = vpack.c.b16 %v2468, %v2464
    %v2669 = vpack.c.b16 %v2469, %v2465
    %v2670 = vpack.c.b16 %v2470, %v2466
    %v2671 = vpack.c.b16 %v2475, %v2471
    %v2672 = vpack.c.b16 %v2476, %v2472
    %v2673 = vpack.c.b16 %v2477, %v2473
    %v2674 = vpack.c.b16 %v2478, %v2474
    %v2675 = vpack.c.b16 %v2483, %v2479
    %v2676 = vpack.c.b16 %v2484, %v2480
    %v2677 = vpack.c.b16 %v2485, %v2481
    %v2678 = vpack.c.b16 %v2486, %v2482
    %v2679 = vpack.c.b16 %v2491, %v2487
    %v2680 = vpack.c.b16 %v2492, %v2488
    %v2681 = vpack.c.b16 %v2493, %v2489
    %v2682 = vpack.c.b16 %v2494, %v2490
    %v2683 = vpack.c.b16 %v2499, %v2495
    %v2684 = vpack.c.b16 %v2500, %v2496
    %v2685 = vpack.c.b16 %v2501, %v2497
    %v2686 = vpack.c.b16 %v2502, %v2498
    %v2687 = vpack.c.b16 %v2507, %v2503
    %v2688 = vpack.c.b16 %v2508, %v2504
    %v2689 = vpack.c.b16 %v2509, %v2505
    %v2690 = vpack.c.b16 %v2510, %v2506
    %v2691 = vpack.c.b16 %v2515, %v2511
    %v2692 = vpack.c.b16 %v2516, %v2512
    %v2693 = vpack.c.b16 %v2517, %v2513
    %v2694 = vpack.c.b16 %v2518, %v2514
    %v2695 = vpack.c.b16 %v2523, %v2519
    %v2696 = vpack.c.b16 %v2524, %v2520
    %v2697 = vpack.c.b16 %v2525, %v2521
    %v2698 = vpack.c.b16 %v2526, %v2522
    %v2699 = vpack.c.b16 %v2531, %v2527
    %v2700 = vpack.c.b16 %v2532, %v2528
    %v2701 = vpack.c.b16 %v2533, %v2529
    %v2702 = vpack.c.b16 %v2534, %v2530
    %v2703 = vpack.c.b16 %v2539, %v2535
    %v2704 = vpack.c.b16 %v2540, %v2536
    %v2705 = vpack.c.b16 %v2541, %v2537
    %v2706 = vpack.c.b16 %v2542, %v2538
    %v2707 = vpack.c.b16 %v2547, %v2543
    %v2708 = vpack.c.b16 %v2548, %v2544
    %v2709 = vpack.c.b16 %v2549, %v2545
    %v2710 = vpack.c.b16 %v2550, %v2546
    %v2711 = vpack.c.b16 %v2555, %v2551
    %v2712 = vpack.c.b16 %v2556, %v2552
    %v2713 = vpack.c.b16 %v2557, %v2553
    %v2714 = vpack.c.b16 %v2558, %v2554
    %v2715 = vpack.c.b16 %v2563, %v2559
    %v2716 = vpack.c.b16 %v2564, %v2560
    %v2717 = vpack.c.b16 %v2565, %v2561
    %v2718 = vpack.c.b16 %v2566, %v2562
    %v2719 = vpack.c.b16 %v2571, %v2567
    %v2720 = vpack.c.b16 %v2572, %v2568
    %v2721 = vpack.c.b16 %v2573, %v2569
    %v2722 = vpack.c.b16 %v2574, %v2570
    %v2723 = vpack.c.b16 %v2579, %v2575
    %v2724 = vpack.c.b16 %v2580, %v2576
    %v2725 = vpack.c.b16 %v2581, %v2577
    %v2726 = vpack.c.b16 %v2582, %v2578
    %v2727 = vpack.c.b16 %v2587, %v2583
    %v2728 = vpack.c.b16 %v2588, %v2584
    %v2729 = vpack.c.b16 %v2589, %v2585
    %v2730 = vpack.c.b16 %v2590, %v2586
    %v2731 = vpack.c.b16 %v2595, %v2591
    %v2732 = vpack.c.b16 %v2596, %v2592
    %v2733 = vpack.c.b16 %v2597, %v2593
    %v2734 = vpack.c.b16 %v2598, %v2594
    %v2735 = vpack.c.b16 %v2603, %v2599
    %v2736 = vpack.c.b16 %v2604, %v2600
    %v2737 = vpack.c.b16 %v2605, %v2601
    %v2738 = vpack.c.b16 %v2606, %v2602
    %v2739 = vpack.c.b16 %v2611, %v2607
    %v2740 = vpack.c.b16 %v2612, %v2608
    %v2741 = vpack.c.b16 %v2613, %v2609
    %v2742 = vpack.c.b16 %v2614, %v2610
    %2871 = vmatpush.bf16.msra.mxu0 %v2643
    %2872 = vmatpush.bf16.msra.mxu0 %v2639
    %2873 = vmatpush.bf16.msra.mxu0 %v2635
    %2874 = vmatpush.bf16.msra.mxu0 %v2631
    %2875 = vmatpush.bf16.msra.mxu0 %v2627
    %2876 = vmatpush.bf16.msra.mxu0 %v2623
    %2877 = vmatpush.bf16.msra.mxu0 %v2619
    %2878 = vmatpush.bf16.msra.mxu0 %v2615
    %2879 = vmatmul.bf16.gmra.mxu0 %v2089
    %v2880 = vpop.f32.mrf.mxu0
    %v2881 = vadd.f32 %v2223, %v2880
    %v2882 = vpop.f32.mrf.mxu0
    %2883 = vdwg.mxu0
    %2884 = vmatpush.bf16.msra.mxu0 %v2675
    %2885 = vmatpush.bf16.msra.mxu0 %v2671
    %2886 = vmatpush.bf16.msra.mxu0 %v2667
    %2887 = vmatpush.bf16.msra.mxu0 %v2663
    %2888 = vmatpush.bf16.msra.mxu0 %v2659
    %2889 = vmatpush.bf16.msra.mxu0 %v2655
    %2890 = vmatpush.bf16.msra.mxu0 %v2651
    %2891 = vmatpush.bf16.msra.mxu0 %v2647
    %2892 = vmatmul.bf16.gmra.mxu0 %v2090
    %v2893 = vpop.f32.mrf.mxu0
    %v2894 = vadd.f32 %v2881, %v2893
    %v2895 = vpop.f32.mrf.mxu0
    %2896 = vdwg.mxu0
    %2897 = vmatpush.bf16.msra.mxu0 %v2707
    %2898 = vmatpush.bf16.msra.mxu0 %v2703
    %2899 = vmatpush.bf16.msra.mxu0 %v2699
    %2900 = vmatpush.bf16.msra.mxu0 %v2695
    %2901 = vmatpush.bf16.msra.mxu0 %v2691
    %2902 = vmatpush.bf16.msra.mxu0 %v2687
    %2903 = vmatpush.bf16.msra.mxu0 %v2683
    %2904 = vmatpush.bf16.msra.mxu0 %v2679
    %2905 = vmatmul.bf16.gmra.mxu0 %v2091
    %v2906 = vpop.f32.mrf.mxu0
    %v2907 = vadd.f32 %v2894, %v2906
    %v2908 = vpop.f32.mrf.mxu0
    %2909 = vdwg.mxu0
    %2910 = vmatpush.bf16.msra.mxu0 %v2739
    %2911 = vmatpush.bf16.msra.mxu0 %v2735
    %2912 = vmatpush.bf16.msra.mxu0 %v2731
    %2913 = vmatpush.bf16.msra.mxu0 %v2727
    %2914 = vmatpush.bf16.msra.mxu0 %v2723
    %2915 = vmatpush.bf16.msra.mxu0 %v2719
    %2916 = vmatpush.bf16.msra.mxu0 %v2715
    %2917 = vmatpush.bf16.msra.mxu0 %v2711
    %2918 = vmatmul.bf16.gmra.mxu0 %v2092
    %v2919 = vpop.f32.mrf.mxu0
    %v2920 = vadd.f32 %v2907, %v2919
    %v2921 = vpop.f32.mrf.mxu0
    %2922 = vdwg.mxu0
    %2923 = vmatpush.bf16.msra.mxu0 %v2644
    %2924 = vmatpush.bf16.msra.mxu0 %v2640
    %2925 = vmatpush.bf16.msra.mxu0 %v2636
    %2926 = vmatpush.bf16.msra.mxu0 %v2632
    %2927 = vmatpush.bf16.msra.mxu0 %v2628
    %2928 = vmatpush.bf16.msra.mxu0 %v2624
    %2929 = vmatpush.bf16.msra.mxu0 %v2620
    %2930 = vmatpush.bf16.msra.mxu0 %v2616
    %2931 = vmatmul.bf16.gmra.mxu0 %v2089
    %v2932 = vpop.f32.mrf.mxu0
    %v2933 = vadd.f32 %v2224, %v2932
    %v2934 = vpop.f32.mrf.mxu0
    %2935 = vdwg.mxu0
    %2936 = vmatpush.bf16.msra.mxu0 %v2676
    %2937 = vmatpush.bf16.msra.mxu0 %v2672
    %2938 = vmatpush.bf16.msra.mxu0 %v2668
    %2939 = vmatpush.bf16.msra.mxu0 %v2664
    %2940 = vmatpush.bf16.msra.mxu0 %v2660
    %2941 = vmatpush.bf16.msra.mxu0 %v2656
    %2942 = vmatpush.bf16.msra.mxu0 %v2652
    %2943 = vmatpush.bf16.msra.mxu0 %v2648
    %2944 = vmatmul.bf16.gmra.mxu0 %v2090
    %v2945 = vpop.f32.mrf.mxu0
    %v2946 = vadd.f32 %v2933, %v2945
    %v2947 = vpop.f32.mrf.mxu0
    %2948 = vdwg.mxu0
    %2949 = vmatpush.bf16.msra.mxu0 %v2708
    %2950 = vmatpush.bf16.msra.mxu0 %v2704
    %2951 = vmatpush.bf16.msra.mxu0 %v2700
    %2952 = vmatpush.bf16.msra.mxu0 %v2696
    %2953 = vmatpush.bf16.msra.mxu0 %v2692
    %2954 = vmatpush.bf16.msra.mxu0 %v2688
    %2955 = vmatpush.bf16.msra.mxu0 %v2684
    %2956 = vmatpush.bf16.msra.mxu0 %v2680
    %2957 = vmatmul.bf16.gmra.mxu0 %v2091
    %v2958 = vpop.f32.mrf.mxu0
    %v2959 = vadd.f32 %v2946, %v2958
    %v2960 = vpop.f32.mrf.mxu0
    %2961 = vdwg.mxu0
    %2962 = vmatpush.bf16.msra.mxu0 %v2740
    %2963 = vmatpush.bf16.msra.mxu0 %v2736
    %2964 = vmatpush.bf16.msra.mxu0 %v2732
    %2965 = vmatpush.bf16.msra.mxu0 %v2728
    %2966 = vmatpush.bf16.msra.mxu0 %v2724
    %2967 = vmatpush.bf16.msra.mxu0 %v2720
    %2968 = vmatpush.bf16.msra.mxu0 %v2716
    %2969 = vmatpush.bf16.msra.mxu0 %v2712
    %2970 = vmatmul.bf16.gmra.mxu0 %v2092
    %v2971 = vpop.f32.mrf.mxu0
    %v2972 = vadd.f32 %v2959, %v2971
    %v2973 = vpop.f32.mrf.mxu0
    %2974 = vdwg.mxu0
    %2975 = vmatpush.bf16.msra.mxu0 %v2645
    %2976 = vmatpush.bf16.msra.mxu0 %v2641
    %2977 = vmatpush.bf16.msra.mxu0 %v2637
    %2978 = vmatpush.bf16.msra.mxu0 %v2633
    %2979 = vmatpush.bf16.msra.mxu0 %v2629
    %2980 = vmatpush.bf16.msra.mxu0 %v2625
    %2981 = vmatpush.bf16.msra.mxu0 %v2621
    %2982 = vmatpush.bf16.msra.mxu0 %v2617
    %2983 = vmatmul.bf16.gmra.mxu0 %v2089
    %v2984 = vpop.f32.mrf.mxu0
    %v2985 = vadd.f32 %v2225, %v2984
    %v2986 = vpop.f32.mrf.mxu0
    %2987 = vdwg.mxu0
    %2988 = vmatpush.bf16.msra.mxu0 %v2677
    %2989 = vmatpush.bf16.msra.mxu0 %v2673
    %2990 = vmatpush.bf16.msra.mxu0 %v2669
    %2991 = vmatpush.bf16.msra.mxu0 %v2665
    %2992 = vmatpush.bf16.msra.mxu0 %v2661
    %2993 = vmatpush.bf16.msra.mxu0 %v2657
    %2994 = vmatpush.bf16.msra.mxu0 %v2653
    %2995 = vmatpush.bf16.msra.mxu0 %v2649
    %2996 = vmatmul.bf16.gmra.mxu0 %v2090
    %v2997 = vpop.f32.mrf.mxu0
    %v2998 = vadd.f32 %v2985, %v2997
    %v2999 = vpop.f32.mrf.mxu0
    %3000 = vdwg.mxu0
    %3001 = vmatpush.bf16.msra.mxu0 %v2709
    %3002 = vmatpush.bf16.msra.mxu0 %v2705
    %3003 = vmatpush.bf16.msra.mxu0 %v2701
    %3004 = vmatpush.bf16.msra.mxu0 %v2697
    %3005 = vmatpush.bf16.msra.mxu0 %v2693
    %3006 = vmatpush.bf16.msra.mxu0 %v2689
    %3007 = vmatpush.bf16.msra.mxu0 %v2685
    %3008 = vmatpush.bf16.msra.mxu0 %v2681
    %3009 = vmatmul.bf16.gmra.mxu0 %v2091
    %v3010 = vpop.f32.mrf.mxu0
    %v3011 = vadd.f32 %v2998, %v3010
    %v3012 = vpop.f32.mrf.mxu0
    %3013 = vdwg.mxu0
    %3014 = vmatpush.bf16.msra.mxu0 %v2741
    %3015 = vmatpush.bf16.msra.mxu0 %v2737
    %3016 = vmatpush.bf16.msra.mxu0 %v2733
    %3017 = vmatpush.bf16.msra.mxu0 %v2729
    %3018 = vmatpush.bf16.msra.mxu0 %v2725
    %3019 = vmatpush.bf16.msra.mxu0 %v2721
    %3020 = vmatpush.bf16.msra.mxu0 %v2717
    %3021 = vmatpush.bf16.msra.mxu0 %v2713
    %3022 = vmatmul.bf16.gmra.mxu0 %v2092
    %v3023 = vpop.f32.mrf.mxu0
    %v3024 = vadd.f32 %v3011, %v3023
    %v3025 = vpop.f32.mrf.mxu0
    %3026 = vdwg.mxu0
    %3027 = vmatpush.bf16.msra.mxu0 %v2646
    %3028 = vmatpush.bf16.msra.mxu0 %v2642
    %3029 = vmatpush.bf16.msra.mxu0 %v2638
    %3030 = vmatpush.bf16.msra.mxu0 %v2634
    %3031 = vmatpush.bf16.msra.mxu0 %v2630
    %3032 = vmatpush.bf16.msra.mxu0 %v2626
    %3033 = vmatpush.bf16.msra.mxu0 %v2622
    %3034 = vmatpush.bf16.msra.mxu0 %v2618
    %3035 = vmatmul.bf16.gmra.mxu0 %v2089
    %v3036 = vpop.f32.mrf.mxu0
    %v3037 = vadd.f32 %v2226, %v3036
    %v3038 = vpop.f32.mrf.mxu0
    %3039 = vdwg.mxu0
    %3040 = vmatpush.bf16.msra.mxu0 %v2678
    %3041 = vmatpush.bf16.msra.mxu0 %v2674
    %3042 = vmatpush.bf16.msra.mxu0 %v2670
    %3043 = vmatpush.bf16.msra.mxu0 %v2666
    %3044 = vmatpush.bf16.msra.mxu0 %v2662
    %3045 = vmatpush.bf16.msra.mxu0 %v2658
    %3046 = vmatpush.bf16.msra.mxu0 %v2654
    %3047 = vmatpush.bf16.msra.mxu0 %v2650
    %3048 = vmatmul.bf16.gmra.mxu0 %v2090
    %v3049 = vpop.f32.mrf.mxu0
    %v3050 = vadd.f32 %v3037, %v3049
    %v3051 = vpop.f32.mrf.mxu0
    %3052 = vdwg.mxu0
    %3053 = vmatpush.bf16.msra.mxu0 %v2710
    %3054 = vmatpush.bf16.msra.mxu0 %v2706
    %3055 = vmatpush.bf16.msra.mxu0 %v2702
    %3056 = vmatpush.bf16.msra.mxu0 %v2698
    %3057 = vmatpush.bf16.msra.mxu0 %v2694
    %3058 = vmatpush.bf16.msra.mxu0 %v2690
    %3059 = vmatpush.bf16.msra.mxu0 %v2686
    %3060 = vmatpush.bf16.msra.mxu0 %v2682
    %3061 = vmatmul.bf16.gmra.mxu0 %v2091
    %v3062 = vpop.f32.mrf.mxu0
    %v3063 = vadd.f32 %v3050, %v3062
    %v3064 = vpop.f32.mrf.mxu0
    %3065 = vdwg.mxu0
    %3066 = vmatpush.bf16.msra.mxu0 %v2742
    %3067 = vmatpush.bf16.msra.mxu0 %v2738
    %3068 = vmatpush.bf16.msra.mxu0 %v2734
    %3069 = vmatpush.bf16.msra.mxu0 %v2730
    %3070 = vmatpush.bf16.msra.mxu0 %v2726
    %3071 = vmatpush.bf16.msra.mxu0 %v2722
    %3072 = vmatpush.bf16.msra.mxu0 %v2718
    %3073 = vmatpush.bf16.msra.mxu0 %v2714
    %3074 = vmatmul.bf16.gmra.mxu0 %v2092
    %v3075 = vpop.f32.mrf.mxu0
    %v3076 = vadd.f32 %v3063, %v3075
    %v3077 = vpop.f32.mrf.mxu0
    %3078 = vdwg.mxu0
    %v3079 = vtanh.pop %v2920
    %v3080 = vtanh.pop %v2972
    %v3081 = vxor.u32 %v3024, 2147483648
    %v3082 = vxor.u32 %v3076, 2147483648
    %v3083 = vmul.f32 %v3081, 1.442695
    %v3084 = vpow.pop %v3083
    %v3085 = vmul.f32 %v3082, 1.442695
    %v3086 = vpow.pop %v3085
    %v3087 = vadd.f32 %v3084, 1.0
    %v3088 = vadd.f32 %v3086, 1.0
    %v3089 = vrcp.pop %v3087
    %v3090 = vmul.f32 %v3087, %v3089
    %v3091 = vsub.f32 1.0, %v3090
    %v3092 = vmul.f32 %v3089, %v3091
    %v3093 = vadd.f32 %v3089, %v3092
    %vm3094 = vweird.f32 %v3087
    %vm3095 = vweird.f32 %v3089
    %vm3096 = vmor %vm3094, %vm3095
    %v3097 = vsel %vm3096, %v3089, %v3093
    %v3098 = vand.u32 2147483647, %v3087
    %vm3099 = vcmp.eq.f32.partialorder %v3098, 8.507059e+37
    %v3100 = vand.u32 %v3087, 2147483648
    %v3101 = vor.u32 1.1754944e-38, %v3100
    %v3102 = vsel %vm3099, %v3101, %v3097
    %v3103 = vmul.f32 1.0, %v3102
    %v3104 = vrcp.pop %v3088
    %v3105 = vmul.f32 %v3088, %v3104
    %v3106 = vsub.f32 1.0, %v3105
    %v3107 = vmul.f32 %v3104, %v3106
    %v3108 = vadd.f32 %v3104, %v3107
    %vm3109 = vweird.f32 %v3088
    %vm3110 = vweird.f32 %v3104
    %vm3111 = vmor %vm3109, %vm3110
    %v3112 = vsel %vm3111, %v3104, %v3108
    %v3113 = vand.u32 2147483647, %v3088
    %vm3114 = vcmp.eq.f32.partialorder %v3113, 8.507059e+37
    %v3115 = vand.u32 %v3088, 2147483648
    %v3116 = vor.u32 1.1754944e-38, %v3115
    %v3117 = vsel %vm3114, %v3116, %v3112
    %v3118 = vmul.f32 1.0, %v3117
    %v3119 = vmul.f32 %v3079, %v3103
    %v3120 = vmul.f32 %v3080, %v3118
    %v3121 = vpack.c.bf16 %v3119, %v3119
    %v3122 = vpack.c.bf16 %v3120, %v3120
    %v3123 = vld [vmem:[%s5] sm:$0x3]
    %v3124 = vld [vmem:[#allocation5] sm:$0x1]
    %3126 = vset.pattern.permute.xlu0 0
    %3127 = vperm.xlu0 %3126, %v3124
    %v3128 = vpop.permute.xlu0 %3127
    %v3130 = vperm.slane %v3128, 0
    %3132 = vst [vmem:[#allocation1] ss:$9 sm:$0xff] %v3123
    %v3133 = vld [vmem:[#allocation1] sm:$0xff]
    %v3134 = vld [vmem:[#allocation1 + $0x9] sm:$0xff]
    %3137 = vmatpush.bf16.xpose.msra.mxu0 0
    %3138 = vmatpush.bf16.xpose.msra.mxu0 0
    %3139 = vmatpush.bf16.xpose.msra.mxu0 0
    %3140 = vmatpush.bf16.xpose.msra.mxu0 0
    %3141 = vmatpush.bf16.xpose.msra.mxu0 0
    %3142 = vmatpush.bf16.xpose.msra.mxu0 0
    %3143 = vmatpush.bf16.xpose.msra.mxu0 0
    %3144 = vmatpush.bf16.xpose.msra.mxu0 %v3121
    %3145 = vmatmul.bf16.gmra.mxu0 %v3133
    %v3146 = vpop.f32.mrf.mxu0
    %v3147 = vadd.f32 %v3130, %v3146
    %v3148 = vpop.f32.mrf.mxu0
    %3149 = vdwg.mxu0
    %3150 = vmatpush.bf16.xpose.msra.mxu0 0
    %3151 = vmatpush.bf16.xpose.msra.mxu0 0
    %3152 = vmatpush.bf16.xpose.msra.mxu0 0
    %3153 = vmatpush.bf16.xpose.msra.mxu0 0
    %3154 = vmatpush.bf16.xpose.msra.mxu0 0
    %3155 = vmatpush.bf16.xpose.msra.mxu0 0
    %3156 = vmatpush.bf16.xpose.msra.mxu0 0
    %3157 = vmatpush.bf16.xpose.msra.mxu0 %v3122
    %3158 = vmatmul.bf16.gmra.mxu0 %v3134
    %v3159 = vpop.f32.mrf.mxu0
    %v3160 = vadd.f32 %v3147, %v3159
    %v3161 = vpop.f32.mrf.mxu0
    %3162 = vdwg.mxu0
    %vm3163 = vcmask 57344
    %3164 = vst.msk [vmem:[#allocation12] sm:$0x1] %vm3163, %v3160
    %v3165 = vlaneseq
    %v3166 = vand.u32 %v3165, 127
    %s3167 = smul.u32 0, 8
    %v3168 = vstv %s3167
    %v3169 = vadd.s32 %v3168, %v3166
    %vm3170 = vcmp.lt.s32.totalorder %v3169, 8
    %v3171 = vsel %vm3170, %v3160, -inf
    %v3172 = vld [vmem:[#allocation2] sm:$0x1]
    %v3173 = vsel %vm3163, %v3171, -inf
    %3174 = vmax.xlane.f32.xlu0 %v3173
    %v3175 = vpop.xlane.xlu0 %3174
    %v3176 = vmax.f32 %v3172, %v3175
    %v3177 = vsub.f32 %v3172, %v3176
    %v3178 = vmul.f32 %v3177, 1.442695
    %v3179 = vpow.pop %v3178
    %3181 = vset.pattern.permute.xlu0 0
    %3182 = vperm.xlu0 %3181, %v3176
    %v3183 = vpop.permute.xlu0 %3182
    %v3185 = vperm.slane %v3183, 0
    %v3186 = vsub.f32 %v3171, %v3185
    %v3187 = vmul.f32 %v3186, 1.442695
    %v3188 = vpow.pop %v3187
    %v3189 = vld [vmem:[#allocation3] sm:$0x1]
    %v3190 = vmul.f32 %v3179, %v3189
    %v3191 = vsel %vm3163, %v3188, 0.0
    %3192 = vadd.xlane.f32.xlu0 %v3191
    %v3193 = vpop.xlane.xlu0 %3192
    %v3194 = vadd.f32 %v3190, %v3193
    %vm3195 = vcmask 0
    %3196 = vst.msk [vmem:[#allocation3] sm:$0x1] %vm3195, %v3194
    %v3197 = vld [vmem:[#allocation4] sm:$0xf]
    %3199 = vset.pattern.permute.xlu0 0
    %3200 = vperm.xlu0 %3199, %v3179
    %v3201 = vpop.permute.xlu0 %3200
    %v3203 = vperm.slane %v3201, 0
    %v3204 = vmul.f32 %v3203, %v3197
    %v3205 = vpack.c.bf16 %v3188, %v3188
    %vm3206 = vcmask 64512
    %v3208 = vsel %vm3206, %v3205, 0
    %vm3210 = vcmask 1043456
    %v3212 = vsel %vm3210, %v2089, 0
    %v3215 = vsel %vm3210, %v2090, 0
    %v3218 = vsel %vm3210, %v2091, 0
    %v3221 = vsel %vm3210, %v2092, 0
    %3223 = vmatpush.bf16.msra.mxu0 0
    %3224 = vmatpush.bf16.msra.mxu0 0
    %3225 = vmatpush.bf16.msra.mxu0 0
    %3226 = vmatpush.bf16.msra.mxu0 0
    %3227 = vmatpush.bf16.msra.mxu0 0
    %3228 = vmatpush.bf16.msra.mxu0 0
    %3229 = vmatpush.bf16.msra.mxu0 0
    %3230 = vmatpush.bf16.msra.mxu0 %v3212
    %3231 = vmatmul.bf16.gmra.mxu0 %v3208
    %v3232 = vpop.f32.mrf.mxu0
    %v3233 = vadd.f32 0.0, %v3232
    %v3234 = vpop.f32.mrf.mxu0
    %3235 = vdwg.mxu0
    %3236 = vmatpush.bf16.msra.mxu0 0
    %3237 = vmatpush.bf16.msra.mxu0 0
    %3238 = vmatpush.bf16.msra.mxu0 0
    %3239 = vmatpush.bf16.msra.mxu0 0
    %3240 = vmatpush.bf16.msra.mxu0 0
    %3241 = vmatpush.bf16.msra.mxu0 0
    %3242 = vmatpush.bf16.msra.mxu0 0
    %3243 = vmatpush.bf16.msra.mxu0 %v3215
    %3244 = vmatmul.bf16.gmra.mxu0 %v3208
    %v3245 = vpop.f32.mrf.mxu0
    %v3246 = vadd.f32 0.0, %v3245
    %v3247 = vpop.f32.mrf.mxu0
    %3248 = vdwg.mxu0
    %3249 = vmatpush.bf16.msra.mxu0 0
    %3250 = vmatpush.bf16.msra.mxu0 0
    %3251 = vmatpush.bf16.msra.mxu0 0
    %3252 = vmatpush.bf16.msra.mxu0 0
    %3253 = vmatpush.bf16.msra.mxu0 0
    %3254 = vmatpush.bf16.msra.mxu0 0
    %3255 = vmatpush.bf16.msra.mxu0 0
    %3256 = vmatpush.bf16.msra.mxu0 %v3218
    %3257 = vmatmul.bf16.gmra.mxu0 %v3208
    %v3258 = vpop.f32.mrf.mxu0
    %v3259 = vadd.f32 0.0, %v3258
    %v3260 = vpop.f32.mrf.mxu0
    %3261 = vdwg.mxu0
    %3262 = vmatpush.bf16.msra.mxu0 0
    %3263 = vmatpush.bf16.msra.mxu0 0
    %3264 = vmatpush.bf16.msra.mxu0 0
    %3265 = vmatpush.bf16.msra.mxu0 0
    %3266 = vmatpush.bf16.msra.mxu0 0
    %3267 = vmatpush.bf16.msra.mxu0 0
    %3268 = vmatpush.bf16.msra.mxu0 0
    %3269 = vmatpush.bf16.msra.mxu0 %v3221
    %3270 = vmatmul.bf16.gmra.mxu0 %v3208
    %v3271 = vpop.f32.mrf.mxu0
    %v3272 = vadd.f32 0.0, %v3271
    %v3273 = vpop.f32.mrf.mxu0
    %3274 = vdwg.mxu0
    %v3279 = vrot.slane %v3246, 7
    %v3280 = vrot.slane %v3259, 6
    %v3281 = vrot.slane %v3272, 5
    %vm3282 = vcmask 1040384
    %v3283 = vsel %vm3282, %v3233, %v3279
    %vm3284 = vcmask 1042434
    %v3285 = vsel %vm3284, %v3280, %v3281
    %vm3286 = vcmask 1041408
    %v3287 = vsel %vm3286, %v3283, %v3285
    %v3289 = vadd.f32 %v3204, %v3287
    %v3290 = vlaneseq
    %vm3291 = vcmp.ge.s32.totalorder %v3290, 0
    %vm3292 = vcmp.lt.s32.totalorder %v3290, 512
    %vm3293 = vmand %vm3291, %vm3292
    %3294 = vst.msk [vmem:[#allocation4] sm:$0xf] %vm3293, %v3289
    %3295 = vst.msk [vmem:[#allocation2] sm:$0x1] %vm3195, %v3176
    // Predicated region
    $region62: #{tpu_custom_call.1} parent=1 // pred_check
      %p3296 = pneg %p95
    $region63: #{tpu_custom_call.1} parent=1 // pred_check_branch
      %3298 = sbr.rel (%p3296) target = $region65
    $region64: #{tpu_custom_call.1} parent=1 // pred_region
      %v3299 = vld [vmem:[#allocation4] sm:$0xf]
      %v3300 = vld [vmem:[#allocation3] sm:$0x1]
      %3302 = vset.pattern.permute.xlu0 0
      %3303 = vperm.xlu0 %3302, %v3300
      %v3304 = vpop.permute.xlu0 %3303
      %v3306 = vperm.slane %v3304, 0
      %v3307 = vrcp.pop %v3306
      %v3308 = vmul.f32 %v3306, %v3307
      %v3309 = vsub.f32 1.0, %v3308
      %v3310 = vmul.f32 %v3307, %v3309
      %v3311 = vadd.f32 %v3307, %v3310
      %vm3312 = vweird.f32 %v3306
      %vm3313 = vweird.f32 %v3307
      %vm3314 = vmor %vm3312, %vm3313
      %v3315 = vsel %vm3314, %v3307, %v3311
      %v3316 = vand.u32 2147483647, %v3306
      %vm3317 = vcmp.eq.f32.partialorder %v3316, 8.507059e+37
      %v3318 = vand.u32 %v3306, 2147483648
      %v3319 = vor.u32 1.1754944e-38, %v3318
      %v3320 = vsel %vm3317, %v3319, %v3315
      %v3321 = vmul.f32 %v3299, %v3320
      %v3322 = vld [vmem:[#allocation11] sm:$0xff]
      %v3323 = vld [vmem:[#allocation11 + $0x8] sm:$0xff]
      %v3324 = vld [vmem:[#allocation11 + $0x10] sm:$0xff]
      %v3325 = vld [vmem:[#allocation11 + $0x18] sm:$0xff]
      %v3326 = vld [vmem:[#allocation11 + $0x20] sm:$0xff]
      %v3327 = vld [vmem:[#allocation11 + $0x28] sm:$0xff]
      %v3328 = vld [vmem:[#allocation11 + $0x30] sm:$0xff]
      %v3329 = vld [vmem:[#allocation11 + $0x38] sm:$0xff]
      %v3330 = vld [vmem:[#allocation11 + $0x40] sm:$0xff]
      %v3331 = vld [vmem:[#allocation11 + $0x48] sm:$0xff]
      %v3332 = vld [vmem:[#allocation11 + $0x50] sm:$0xff]
      %v3333 = vld [vmem:[#allocation11 + $0x58] sm:$0xff]
      %v3334 = vld [vmem:[#allocation11 + $0x60] sm:$0xff]
      %v3335 = vld [vmem:[#allocation11 + $0x68] sm:$0xff]
      %v3336 = vld [vmem:[#allocation11 + $0x70] sm:$0xff]
      %v3337 = vld [vmem:[#allocation11 + $0x78] sm:$0xff]
      %v3338 = vld [vmem:[#allocation11 + $0x80] sm:$0xff]
      %v3339 = vld [vmem:[#allocation11 + $0x88] sm:$0xff]
      %v3340 = vld [vmem:[#allocation11 + $0x90] sm:$0xff]
      %v3341 = vld [vmem:[#allocation11 + $0x98] sm:$0xff]
      %v3342 = vld [vmem:[#allocation11 + $0xa0] sm:$0xff]
      %v3343 = vld [vmem:[#allocation11 + $0xa8] sm:$0xff]
      %v3344 = vld [vmem:[#allocation11 + $0xb0] sm:$0xff]
      %v3345 = vld [vmem:[#allocation11 + $0xb8] sm:$0xff]
      %v3346 = vld [vmem:[#allocation11 + $0xc0] sm:$0xff]
      %v3347 = vld [vmem:[#allocation11 + $0xc8] sm:$0xff]
      %v3348 = vld [vmem:[#allocation11 + $0xd0] sm:$0xff]
      %v3349 = vld [vmem:[#allocation11 + $0xd8] sm:$0xff]
      %v3350 = vld [vmem:[#allocation11 + $0xe0] sm:$0xff]
      %v3351 = vld [vmem:[#allocation11 + $0xe8] sm:$0xff]
      %v3352 = vld [vmem:[#allocation11 + $0xf0] sm:$0xff]
      %v3353 = vld [vmem:[#allocation11 + $0xf8] sm:$0xff]
      %v3354 = vld [vmem:[#allocation11 + $0x100] sm:$0xff]
      %v3355 = vld [vmem:[#allocation11 + $0x108] sm:$0xff]
      %v3356 = vld [vmem:[#allocation11 + $0x110] sm:$0xff]
      %v3357 = vld [vmem:[#allocation11 + $0x118] sm:$0xff]
      %v3358 = vld [vmem:[#allocation11 + $0x120] sm:$0xff]
      %v3359 = vld [vmem:[#allocation11 + $0x128] sm:$0xff]
      %v3360 = vld [vmem:[#allocation11 + $0x130] sm:$0xff]
      %v3361 = vld [vmem:[#allocation11 + $0x138] sm:$0xff]
      %v3362 = vld [vmem:[#allocation11 + $0x140] sm:$0xff]
      %v3363 = vld [vmem:[#allocation11 + $0x148] sm:$0xff]
      %v3364 = vld [vmem:[#allocation11 + $0x150] sm:$0xff]
      %v3365 = vld [vmem:[#allocation11 + $0x158] sm:$0xff]
      %v3366 = vld [vmem:[#allocation11 + $0x160] sm:$0xff]
      %v3367 = vld [vmem:[#allocation11 + $0x168] sm:$0xff]
      %v3368 = vld [vmem:[#allocation11 + $0x170] sm:$0xff]
      %v3369 = vld [vmem:[#allocation11 + $0x178] sm:$0xff]
      %v3370 = vld [vmem:[#allocation11 + $0x180] sm:$0xff]
      %v3371 = vld [vmem:[#allocation11 + $0x188] sm:$0xff]
      %v3372 = vld [vmem:[#allocation11 + $0x190] sm:$0xff]
      %v3373 = vld [vmem:[#allocation11 + $0x198] sm:$0xff]
      %v3374 = vld [vmem:[#allocation11 + $0x1a0] sm:$0xff]
      %v3375 = vld [vmem:[#allocation11 + $0x1a8] sm:$0xff]
      %v3376 = vld [vmem:[#allocation11 + $0x1b0] sm:$0xff]
      %v3377 = vld [vmem:[#allocation11 + $0x1b8] sm:$0xff]
      %v3378 = vld [vmem:[#allocation11 + $0x1c0] sm:$0xff]
      %v3379 = vld [vmem:[#allocation11 + $0x1c8] sm:$0xff]
      %v3380 = vld [vmem:[#allocation11 + $0x1d0] sm:$0xff]
      %v3381 = vld [vmem:[#allocation11 + $0x1d8] sm:$0xff]
      %v3382 = vld [vmem:[#allocation11 + $0x1e0] sm:$0xff]
      %v3383 = vld [vmem:[#allocation11 + $0x1e8] sm:$0xff]
      %v3384 = vld [vmem:[#allocation11 + $0x1f0] sm:$0xff]
      %v3385 = vld [vmem:[#allocation11 + $0x1f8] sm:$0xff]
      %v3386 = vld [vmem:[#allocation11 + $0x200] sm:$0xff]
      %v3387 = vld [vmem:[#allocation11 + $0x208] sm:$0xff]
      %v3388 = vld [vmem:[#allocation11 + $0x210] sm:$0xff]
      %v3389 = vld [vmem:[#allocation11 + $0x218] sm:$0xff]
      %v3390 = vld [vmem:[#allocation11 + $0x220] sm:$0xff]
      %v3391 = vld [vmem:[#allocation11 + $0x228] sm:$0xff]
      %v3392 = vld [vmem:[#allocation11 + $0x230] sm:$0xff]
      %v3393 = vld [vmem:[#allocation11 + $0x238] sm:$0xff]
      %v3394 = vld [vmem:[#allocation11 + $0x240] sm:$0xff]
      %v3395 = vld [vmem:[#allocation11 + $0x248] sm:$0xff]
      %v3396 = vld [vmem:[#allocation11 + $0x250] sm:$0xff]
      %v3397 = vld [vmem:[#allocation11 + $0x258] sm:$0xff]
      %v3398 = vld [vmem:[#allocation11 + $0x260] sm:$0xff]
      %v3399 = vld [vmem:[#allocation11 + $0x268] sm:$0xff]
      %v3400 = vld [vmem:[#allocation11 + $0x270] sm:$0xff]
      %v3401 = vld [vmem:[#allocation11 + $0x278] sm:$0xff]
      %v3402 = vld [vmem:[#allocation11 + $0x280] sm:$0xff]
      %v3403 = vld [vmem:[#allocation11 + $0x288] sm:$0xff]
      %v3404 = vld [vmem:[#allocation11 + $0x290] sm:$0xff]
      %v3405 = vld [vmem:[#allocation11 + $0x298] sm:$0xff]
      %v3406 = vld [vmem:[#allocation11 + $0x2a0] sm:$0xff]
      %v3407 = vld [vmem:[#allocation11 + $0x2a8] sm:$0xff]
      %v3408 = vld [vmem:[#allocation11 + $0x2b0] sm:$0xff]
      %v3409 = vld [vmem:[#allocation11 + $0x2b8] sm:$0xff]
      %v3410 = vld [vmem:[#allocation11 + $0x2c0] sm:$0xff]
      %v3411 = vld [vmem:[#allocation11 + $0x2c8] sm:$0xff]
      %v3412 = vld [vmem:[#allocation11 + $0x2d0] sm:$0xff]
      %v3413 = vld [vmem:[#allocation11 + $0x2d8] sm:$0xff]
      %v3414 = vld [vmem:[#allocation11 + $0x2e0] sm:$0xff]
      %v3415 = vld [vmem:[#allocation11 + $0x2e8] sm:$0xff]
      %v3416 = vld [vmem:[#allocation11 + $0x2f0] sm:$0xff]
      %v3417 = vld [vmem:[#allocation11 + $0x2f8] sm:$0xff]
      %v3418 = vld [vmem:[#allocation11 + $0x300] sm:$0xff]
      %v3419 = vld [vmem:[#allocation11 + $0x308] sm:$0xff]
      %v3420 = vld [vmem:[#allocation11 + $0x310] sm:$0xff]
      %v3421 = vld [vmem:[#allocation11 + $0x318] sm:$0xff]
      %v3422 = vld [vmem:[#allocation11 + $0x320] sm:$0xff]
      %v3423 = vld [vmem:[#allocation11 + $0x328] sm:$0xff]
      %v3424 = vld [vmem:[#allocation11 + $0x330] sm:$0xff]
      %v3425 = vld [vmem:[#allocation11 + $0x338] sm:$0xff]
      %v3426 = vld [vmem:[#allocation11 + $0x340] sm:$0xff]
      %v3427 = vld [vmem:[#allocation11 + $0x348] sm:$0xff]
      %v3428 = vld [vmem:[#allocation11 + $0x350] sm:$0xff]
      %v3429 = vld [vmem:[#allocation11 + $0x358] sm:$0xff]
      %v3430 = vld [vmem:[#allocation11 + $0x360] sm:$0xff]
      %v3431 = vld [vmem:[#allocation11 + $0x368] sm:$0xff]
      %v3432 = vld [vmem:[#allocation11 + $0x370] sm:$0xff]
      %v3433 = vld [vmem:[#allocation11 + $0x378] sm:$0xff]
      %v3434 = vld [vmem:[#allocation11 + $0x380] sm:$0xff]
      %v3435 = vld [vmem:[#allocation11 + $0x388] sm:$0xff]
      %v3436 = vld [vmem:[#allocation11 + $0x390] sm:$0xff]
      %v3437 = vld [vmem:[#allocation11 + $0x398] sm:$0xff]
      %v3438 = vld [vmem:[#allocation11 + $0x3a0] sm:$0xff]
      %v3439 = vld [vmem:[#allocation11 + $0x3a8] sm:$0xff]
      %v3440 = vld [vmem:[#allocation11 + $0x3b0] sm:$0xff]
      %v3441 = vld [vmem:[#allocation11 + $0x3b8] sm:$0xff]
      %v3442 = vld [vmem:[#allocation11 + $0x3c0] sm:$0xff]
      %v3443 = vld [vmem:[#allocation11 + $0x3c8] sm:$0xff]
      %v3444 = vld [vmem:[#allocation11 + $0x3d0] sm:$0xff]
      %v3445 = vld [vmem:[#allocation11 + $0x3d8] sm:$0xff]
      %v3446 = vld [vmem:[#allocation11 + $0x3e0] sm:$0xff]
      %v3447 = vld [vmem:[#allocation11 + $0x3e8] sm:$0xff]
      %v3448 = vld [vmem:[#allocation11 + $0x3f0] sm:$0xff]
      %v3449 = vld [vmem:[#allocation11 + $0x3f8] sm:$0xff]
      %v3450 = vld [vmem:[%s8] sm:$0x3]
      %v3452 = vperm.slane %v3321, 0
      %v3453 = vperm.slane %v3321, 1
      %v3454 = vperm.slane %v3321, 2
      %v3455 = vperm.slane %v3321, 3
      %v3461 = vperm.slane %v3450, 0
      %v3462 = vperm.slane %v3450, 1
      %3465 = vmatpush.msra.mxu0 %v3352
      %3466 = vmatpush.msra.mxu0 %v3350
      %3467 = vmatpush.msra.mxu0 %v3348
      %3468 = vmatpush.msra.mxu0 %v3346
      %3469 = vmatpush.msra.mxu0 %v3344
      %3470 = vmatpush.msra.mxu0 %v3342
      %3471 = vmatpush.msra.mxu0 %v3340
      %3472 = vmatpush.msra.mxu0 %v3338
      %3473 = vmatpush.msra.mxu0 %v3336
      %3474 = vmatpush.msra.mxu0 %v3334
      %3475 = vmatpush.msra.mxu0 %v3332
      %3476 = vmatpush.msra.mxu0 %v3330
      %3477 = vmatpush.msra.mxu0 %v3328
      %3478 = vmatpush.msra.mxu0 %v3326
      %3479 = vmatpush.msra.mxu0 %v3324
      %3480 = vmatpush.msra.mxu0 %v3322
      %3481 = vmatmul.f32.gmra.mxu0 %v3452
      %v3482 = vpop.f32.mrf.mxu0
      %v3483 = vadd.f32 %v3461, %v3482
      %3484 = vdwg.mxu0
      %3485 = vmatpush.msra.mxu0 %v3384
      %3486 = vmatpush.msra.mxu0 %v3382
      %3487 = vmatpush.msra.mxu0 %v3380
      %3488 = vmatpush.msra.mxu0 %v3378
      %3489 = vmatpush.msra.mxu0 %v3376
      %3490 = vmatpush.msra.mxu0 %v3374
      %3491 = vmatpush.msra.mxu0 %v3372
      %3492 = vmatpush.msra.mxu0 %v3370
      %3493 = vmatpush.msra.mxu0 %v3368
      %3494 = vmatpush.msra.mxu0 %v3366
      %3495 = vmatpush.msra.mxu0 %v3364
      %3496 = vmatpush.msra.mxu0 %v3362
      %3497 = vmatpush.msra.mxu0 %v3360
      %3498 = vmatpush.msra.mxu0 %v3358
      %3499 = vmatpush.msra.mxu0 %v3356
      %3500 = vmatpush.msra.mxu0 %v3354
      %3501 = vmatmul.f32.gmra.mxu0 %v3453
      %v3502 = vpop.f32.mrf.mxu0
      %v3503 = vadd.f32 %v3483, %v3502
      %3504 = vdwg.mxu0
      %3505 = vmatpush.msra.mxu0 %v3416
      %3506 = vmatpush.msra.mxu0 %v3414
      %3507 = vmatpush.msra.mxu0 %v3412
      %3508 = vmatpush.msra.mxu0 %v3410
      %3509 = vmatpush.msra.mxu0 %v3408
      %3510 = vmatpush.msra.mxu0 %v3406
      %3511 = vmatpush.msra.mxu0 %v3404
      %3512 = vmatpush.msra.mxu0 %v3402
      %3513 = vmatpush.msra.mxu0 %v3400
      %3514 = vmatpush.msra.mxu0 %v3398
      %3515 = vmatpush.msra.mxu0 %v3396
      %3516 = vmatpush.msra.mxu0 %v3394
      %3517 = vmatpush.msra.mxu0 %v3392
      %3518 = vmatpush.msra.mxu0 %v3390
      %3519 = vmatpush.msra.mxu0 %v3388
      %3520 = vmatpush.msra.mxu0 %v3386
      %3521 = vmatmul.f32.gmra.mxu0 %v3454
      %v3522 = vpop.f32.mrf.mxu0
      %v3523 = vadd.f32 %v3503, %v3522
      %3524 = vdwg.mxu0
      %3525 = vmatpush.msra.mxu0 %v3448
      %3526 = vmatpush.msra.mxu0 %v3446
      %3527 = vmatpush.msra.mxu0 %v3444
      %3528 = vmatpush.msra.mxu0 %v3442
      %3529 = vmatpush.msra.mxu0 %v3440
      %3530 = vmatpush.msra.mxu0 %v3438
      %3531 = vmatpush.msra.mxu0 %v3436
      %3532 = vmatpush.msra.mxu0 %v3434
      %3533 = vmatpush.msra.mxu0 %v3432
      %3534 = vmatpush.msra.mxu0 %v3430
      %3535 = vmatpush.msra.mxu0 %v3428
      %3536 = vmatpush.msra.mxu0 %v3426
      %3537 = vmatpush.msra.mxu0 %v3424
      %3538 = vmatpush.msra.mxu0 %v3422
      %3539 = vmatpush.msra.mxu0 %v3420
      %3540 = vmatpush.msra.mxu0 %v3418
      %3541 = vmatmul.f32.gmra.mxu0 %v3455
      %v3542 = vpop.f32.mrf.mxu0
      %v3543 = vadd.f32 %v3523, %v3542
      %3544 = vdwg.mxu0
      %3545 = vmatpush.msra.mxu0 %v3353
      %3546 = vmatpush.msra.mxu0 %v3351
      %3547 = vmatpush.msra.mxu0 %v3349
      %3548 = vmatpush.msra.mxu0 %v3347
      %3549 = vmatpush.msra.mxu0 %v3345
      %3550 = vmatpush.msra.mxu0 %v3343
      %3551 = vmatpush.msra.mxu0 %v3341
      %3552 = vmatpush.msra.mxu0 %v3339
      %3553 = vmatpush.msra.mxu0 %v3337
      %3554 = vmatpush.msra.mxu0 %v3335
      %3555 = vmatpush.msra.mxu0 %v3333
      %3556 = vmatpush.msra.mxu0 %v3331
      %3557 = vmatpush.msra.mxu0 %v3329
      %3558 = vmatpush.msra.mxu0 %v3327
      %3559 = vmatpush.msra.mxu0 %v3325
      %3560 = vmatpush.msra.mxu0 %v3323
      %3561 = vmatmul.f32.gmra.mxu0 %v3452
      %v3562 = vpop.f32.mrf.mxu0
      %v3563 = vadd.f32 %v3462, %v3562
      %3564 = vdwg.mxu0
      %3565 = vmatpush.msra.mxu0 %v3385
      %3566 = vmatpush.msra.mxu0 %v3383
      %3567 = vmatpush.msra.mxu0 %v3381
      %3568 = vmatpush.msra.mxu0 %v3379
      %3569 = vmatpush.msra.mxu0 %v3377
      %3570 = vmatpush.msra.mxu0 %v3375
      %3571 = vmatpush.msra.mxu0 %v3373
      %3572 = vmatpush.msra.mxu0 %v3371
      %3573 = vmatpush.msra.mxu0 %v3369
      %3574 = vmatpush.msra.mxu0 %v3367
      %3575 = vmatpush.msra.mxu0 %v3365
      %3576 = vmatpush.msra.mxu0 %v3363
      %3577 = vmatpush.msra.mxu0 %v3361
      %3578 = vmatpush.msra.mxu0 %v3359
      %3579 = vmatpush.msra.mxu0 %v3357
      %3580 = vmatpush.msra.mxu0 %v3355
      %3581 = vmatmul.f32.gmra.mxu0 %v3453
      %v3582 = vpop.f32.mrf.mxu0
      %v3583 = vadd.f32 %v3563, %v3582
      %3584 = vdwg.mxu0
      %3585 = vmatpush.msra.mxu0 %v3417
      %3586 = vmatpush.msra.mxu0 %v3415
      %3587 = vmatpush.msra.mxu0 %v3413
      %3588 = vmatpush.msra.mxu0 %v3411
      %3589 = vmatpush.msra.mxu0 %v3409
      %3590 = vmatpush.msra.mxu0 %v3407
      %3591 = vmatpush.msra.mxu0 %v3405
      %3592 = vmatpush.msra.mxu0 %v3403
      %3593 = vmatpush.msra.mxu0 %v3401
      %3594 = vmatpush.msra.mxu0 %v3399
      %3595 = vmatpush.msra.mxu0 %v3397
      %3596 = vmatpush.msra.mxu0 %v3395
      %3597 = vmatpush.msra.mxu0 %v3393
      %3598 = vmatpush.msra.mxu0 %v3391
      %3599 = vmatpush.msra.mxu0 %v3389
      %3600 = vmatpush.msra.mxu0 %v3387
      %3601 = vmatmul.f32.gmra.mxu0 %v3454
      %v3602 = vpop.f32.mrf.mxu0
      %v3603 = vadd.f32 %v3583, %v3602
      %3604 = vdwg.mxu0
      %3605 = vmatpush.msra.mxu0 %v3449
      %3606 = vmatpush.msra.mxu0 %v3447
      %3607 = vmatpush.msra.mxu0 %v3445
      %3608 = vmatpush.msra.mxu0 %v3443
      %3609 = vmatpush.msra.mxu0 %v3441
      %3610 = vmatpush.msra.mxu0 %v3439
      %3611 = vmatpush.msra.mxu0 %v3437
      %3612 = vmatpush.msra.mxu0 %v3435
      %3613 = vmatpush.msra.mxu0 %v3433
      %3614 = vmatpush.msra.mxu0 %v3431
      %3615 = vmatpush.msra.mxu0 %v3429
      %3616 = vmatpush.msra.mxu0 %v3427
      %3617 = vmatpush.msra.mxu0 %v3425
      %3618 = vmatpush.msra.mxu0 %v3423
      %3619 = vmatpush.msra.mxu0 %v3421
      %3620 = vmatpush.msra.mxu0 %v3419
      %3621 = vmatmul.f32.gmra.mxu0 %v3455
      %v3622 = vpop.f32.mrf.mxu0
      %v3623 = vadd.f32 %v3603, %v3622
      %3624 = vdwg.mxu0
      %v3625 = vmax.f32 %v3543, 0.0
      %v3626 = vmax.f32 %v3623, 0.0
      %v3629 = vrot.slane %v3626, 7
      %v3630 = vsel %vm3282, %v3625, %v3629
      %vm3632 = vcmp.lt.s32.totalorder %v3290, 256
      %vm3633 = vmand %vm3291, %vm3632
      %3634 = vst.msk [vmem:[#allocation16] sm:$0x3] %vm3633, %v3630
      %v3635 = vld [vmem:[%s9] sm:$0xff]
      %v3636 = vld [vmem:[%s9 + $0x8] sm:$0xff]
      %v3637 = vld [vmem:[%s9 + $0x10] sm:$0xff]
      %v3638 = vld [vmem:[%s9 + $0x18] sm:$0xff]
      %v3639 = vld [vmem:[%s9 + $0x20] sm:$0xff]
      %v3640 = vld [vmem:[%s9 + $0x28] sm:$0xff]
      %v3641 = vld [vmem:[%s9 + $0x30] sm:$0xff]
      %v3642 = vld [vmem:[%s9 + $0x38] sm:$0xff]
      %v3643 = vld [vmem:[%s9 + $0x40] sm:$0xff]
      %v3644 = vld [vmem:[%s9 + $0x48] sm:$0xff]
      %v3645 = vld [vmem:[%s9 + $0x50] sm:$0xff]
      %v3646 = vld [vmem:[%s9 + $0x58] sm:$0xff]
      %v3647 = vld [vmem:[%s9 + $0x60] sm:$0xff]
      %v3648 = vld [vmem:[%s9 + $0x68] sm:$0xff]
      %v3649 = vld [vmem:[%s9 + $0x70] sm:$0xff]
      %v3650 = vld [vmem:[%s9 + $0x78] sm:$0xff]
      %v3651 = vld [vmem:[%s9 + $0x80] sm:$0xff]
      %v3652 = vld [vmem:[%s9 + $0x88] sm:$0xff]
      %v3653 = vld [vmem:[%s9 + $0x90] sm:$0xff]
      %v3654 = vld [vmem:[%s9 + $0x98] sm:$0xff]
      %v3655 = vld [vmem:[%s9 + $0xa0] sm:$0xff]
      %v3656 = vld [vmem:[%s9 + $0xa8] sm:$0xff]
      %v3657 = vld [vmem:[%s9 + $0xb0] sm:$0xff]
      %v3658 = vld [vmem:[%s9 + $0xb8] sm:$0xff]
      %v3659 = vld [vmem:[%s9 + $0xc0] sm:$0xff]
      %v3660 = vld [vmem:[%s9 + $0xc8] sm:$0xff]
      %v3661 = vld [vmem:[%s9 + $0xd0] sm:$0xff]
      %v3662 = vld [vmem:[%s9 + $0xd8] sm:$0xff]
      %v3663 = vld [vmem:[%s9 + $0xe0] sm:$0xff]
      %v3664 = vld [vmem:[%s9 + $0xe8] sm:$0xff]
      %v3665 = vld [vmem:[%s9 + $0xf0] sm:$0xff]
      %v3666 = vld [vmem:[%s9 + $0xf8] sm:$0xff]
      %v3667 = vld [vmem:[%s10] sm:$0x1]
      %3668 = vmatpush.msra.mxu0 %v3650
      %3669 = vmatpush.msra.mxu0 %v3649
      %3670 = vmatpush.msra.mxu0 %v3648
      %3671 = vmatpush.msra.mxu0 %v3647
      %3672 = vmatpush.msra.mxu0 %v3646
      %3673 = vmatpush.msra.mxu0 %v3645
      %3674 = vmatpush.msra.mxu0 %v3644
      %3675 = vmatpush.msra.mxu0 %v3643
      %3676 = vmatpush.msra.mxu0 %v3642
      %3677 = vmatpush.msra.mxu0 %v3641
      %3678 = vmatpush.msra.mxu0 %v3640
      %3679 = vmatpush.msra.mxu0 %v3639
      %3680 = vmatpush.msra.mxu0 %v3638
      %3681 = vmatpush.msra.mxu0 %v3637
      %3682 = vmatpush.msra.mxu0 %v3636
      %3683 = vmatpush.msra.mxu0 %v3635
      %3684 = vmatmul.f32.gmra.mxu0 %v3625
      %v3685 = vpop.f32.mrf.mxu0
      %v3686 = vadd.f32 %v3667, %v3685
      %3687 = vdwg.mxu0
      %3688 = vmatpush.msra.mxu0 %v3666
      %3689 = vmatpush.msra.mxu0 %v3665
      %3690 = vmatpush.msra.mxu0 %v3664
      %3691 = vmatpush.msra.mxu0 %v3663
      %3692 = vmatpush.msra.mxu0 %v3662
      %3693 = vmatpush.msra.mxu0 %v3661
      %3694 = vmatpush.msra.mxu0 %v3660
      %3695 = vmatpush.msra.mxu0 %v3659
      %3696 = vmatpush.msra.mxu0 %v3658
      %3697 = vmatpush.msra.mxu0 %v3657
      %3698 = vmatpush.msra.mxu0 %v3656
      %3699 = vmatpush.msra.mxu0 %v3655
      %3700 = vmatpush.msra.mxu0 %v3654
      %3701 = vmatpush.msra.mxu0 %v3653
      %3702 = vmatpush.msra.mxu0 %v3652
      %3703 = vmatpush.msra.mxu0 %v3651
      %3704 = vmatmul.f32.gmra.mxu0 %v3626
      %v3705 = vpop.f32.mrf.mxu0
      %v3706 = vadd.f32 %v3686, %v3705
      %3707 = vdwg.mxu0
      %vm3708 = vcmask 8192
      %3709 = vst.msk [vmem:[#allocation13] sm:$0x1] %vm3708, %v3706
      %v3710 = vsel %vm3708, %v3706, -inf
      %3711 = vmax.xlane.f32.xlu0 %v3710
      %v3712 = vpop.xlane.xlu0 %3711
      %v3713 = vsub.f32 %v3706, %v3712
      %v3714 = vmul.f32 %v3713, 1.442695
      %v3715 = vpow.pop %v3714
      %v3716 = vsel %vm3708, %v3715, 0.0
      %3717 = vadd.xlane.f32.xlu0 %v3716
      %v3718 = vpop.xlane.xlu0 %3717
      %v3719 = vrcp.pop %v3718
      %v3720 = vmul.f32 %v3718, %v3719
      %v3721 = vsub.f32 1.0, %v3720
      %v3722 = vmul.f32 %v3719, %v3721
      %v3723 = vadd.f32 %v3719, %v3722
      %vm3724 = vweird.f32 %v3718
      %vm3725 = vweird.f32 %v3719
      %vm3726 = vmor %vm3724, %vm3725
      %v3727 = vsel %vm3726, %v3719, %v3723
      %v3728 = vand.u32 2147483647, %v3718
      %vm3729 = vcmp.eq.f32.partialorder %v3728, 8.507059e+37
      %v3730 = vand.u32 %v3718, 2147483648
      %v3731 = vor.u32 1.1754944e-38, %v3730
      %v3732 = vsel %vm3729, %v3731, %v3727
      %v3733 = vmul.f32 %v3715, %v3732
      %3734 = vst.msk [vmem:[#allocation15] sm:$0x1] %vm3708, %v3733
    $region65: #{tpu_custom_call.1} parent=1 // pred_fallthru
      _
    // Predicated region
    $region66: #{tpu_custom_call.1} parent=1 // pred_check
      _
    $region67: #{tpu_custom_call.1} parent=1 // pred_check_branch
      %3736 = sbr.rel (0) target = $region69
    $region68: #{tpu_custom_call.1} parent=1 // pred_region
      %3738 = vsyncadd [#allocation8], 0
      %s3740 = sshll.u32 [#allocation12], 4
      %s3741 = int_to_ptr.vmem [resolvable:$true] %s3740
      %s3742 = sshll.u32 %s11, 4
      %s3743 = int_to_ptr.hbm [resolvable:$true] %s3742
      %3745 = dma.vmem_to_hbm [thread:$0]  %s3741, 16, %s3743, [#allocation8]
    $region69: #{tpu_custom_call.1} parent=1 // pred_fallthru
      _
    // Predicated region
    $region70: #{tpu_custom_call.1} parent=1 // pred_check
      _
    $region71: #{tpu_custom_call.1} parent=1 // pred_check_branch
      %3747 = sbr.rel (0) target = $region73
    $region72: #{tpu_custom_call.1} parent=1 // pred_region
      %3749 = vsyncadd [#allocation14], 0
      %s3751 = sshll.u32 [#allocation13], 4
      %s3752 = int_to_ptr.vmem [resolvable:$true] %s3751
      %s3753 = sshll.u32 %s12, 4
      %s3754 = int_to_ptr.hbm [resolvable:$true] %s3753
      %3756 = dma.vmem_to_hbm [thread:$0]  %s3752, 16, %s3754, [#allocation14]
    $region73: #{tpu_custom_call.1} parent=1 // pred_fallthru
      _
    // Predicated region
    $region74: #{tpu_custom_call.1} parent=1 // pred_check
      _
    $region75: #{tpu_custom_call.1} parent=1 // pred_check_branch
      %3758 = sbr.rel (0) target = $region77
    $region76: #{tpu_custom_call.1} parent=1 // pred_region
      %3760 = vsyncadd [#allocation14], 0
      %s3762 = sshll.u32 [#allocation15], 4
      %s3763 = int_to_ptr.vmem [resolvable:$true] %s3762
      %s3764 = sshll.u32 %s13, 4
      %s3765 = int_to_ptr.hbm [resolvable:$true] %s3764
      %3767 = dma.vmem_to_hbm [thread:$0]  %s3763, 16, %s3765, [#allocation14]
    $region77: #{tpu_custom_call.1} parent=1 // pred_fallthru
      _
    // Predicated region
    $region78: #{tpu_custom_call.1} parent=1 // pred_check
      _
    $region79: #{tpu_custom_call.1} parent=1 // pred_check_branch
      %3769 = sbr.rel (0) target = $region81
    $region80: #{tpu_custom_call.1} parent=1 // pred_region
      %3771 = vsyncadd [#allocation17], 0
      %s3773 = sshll.u32 [#allocation16], 4
      %s3774 = int_to_ptr.vmem [resolvable:$true] %s3773
      %s3775 = sshll.u32 %s14, 4
      %s3776 = int_to_ptr.hbm [resolvable:$true] %s3775
      %3778 = dma.vmem_to_hbm [thread:$0]  %s3774, 32, %s3776, [#allocation17]
    $region81: #{tpu_custom_call.1} parent=1 // pred_fallthru
      _
    // Predicated region
    $region82: #{tpu_custom_call.1} parent=1 // pred_check
      _
    $region83: #{tpu_custom_call.1} parent=1 // pred_check_branch
      %3780 = sbr.rel (0) target = $region85
    $region84: #{tpu_custom_call.1} parent=1 // pred_region
      %3782 = dma.done [#allocation8], 16
    $region85: #{tpu_custom_call.1} parent=1 // pred_fallthru
      _
    // Predicated region
    $region86: #{tpu_custom_call.1} parent=1 // pred_check
      _
    $region87: #{tpu_custom_call.1} parent=1 // pred_check_branch
      %3784 = sbr.rel (0) target = $region89
    $region88: #{tpu_custom_call.1} parent=1 // pred_region
      %3786 = dma.done [#allocation14], 16
    $region89: #{tpu_custom_call.1} parent=1 // pred_fallthru
      _
    // Predicated region
    $region90: #{tpu_custom_call.1} parent=1 // pred_check
      _
    $region91: #{tpu_custom_call.1} parent=1 // pred_check_branch
      %3788 = sbr.rel (0) target = $region93
    $region92: #{tpu_custom_call.1} parent=1 // pred_region
      %3790 = dma.done [#allocation14], 16
    $region93: #{tpu_custom_call.1} parent=1 // pred_fallthru
      _
    // Predicated region
    $region94: #{tpu_custom_call.1} parent=1 // pred_check
      _
    $region95: #{tpu_custom_call.1} parent=1 // pred_check_branch
      %3792 = sbr.rel (0) target = $region97
    $region96: #{tpu_custom_call.1} parent=1 // pred_region
      %3794 = dma.done [#allocation17], 32
    $region97: #{tpu_custom_call.1} parent=1 // pred_fallthru
      _
    %3795 = vsyncpa [#allocation7], 1
    %3796 = vsyncpa [#allocation10], 1
    %3797 = vsyncpa [#allocation8], 1
    %3798 = vsyncpa [#allocation14], 1
    %3799 = vsyncpa [#allocation17], 1

</llo_original>
